<compile_context>
chip_gen: v5e
topology: v5e:2x2
jax: 0.10.0
libtpu: 0.0.40
codegen_flags: <defaults>
</compile_context>

<pallas_src>
import jax
import jax.numpy as jnp
from jax import lax
from jax.experimental import pallas as pl
from jax.experimental.pallas import tpu as pltpu
import numpy as np


def row_lstm_kernel(x_ref, wx_ref, wh_ref, b_ref, out_ref,
                    gx_scr, c_scr, h_scr):
    """One batch element, one chunk of T image rows.

    x_ref   : (C, T*W)    input rows of the chunk, channel-major, rows
                          flattened into the lane axis (p = t*W + w)
    wx_ref  : (4H, 2C)    fused input-conv weight  [w_is tap0 | w_is tap1]
    wh_ref  : (4H, 3H)    fused state-conv weight  [w_ss tap0 | tap1 | tap2]
    b_ref   : (4H, 1)     b_ss + b_is
    out_ref : (T, H, W)   per-row hidden states
    gx_scr  : (4H, T*W)   precomputed input-conv gate contribution (+ bias)
    c_scr   : (H, W)      cell state   (persists across row chunks)
    h_scr   : (H, W)      hidden state (persists across row chunks)
    """
    T, H, W = out_ref.shape
    C = x_ref.shape[0]
    TW = T * W

    # New batch element -> reset the recurrent state.  Relies on the row-chunk
    # axis (last grid axis) running sequentially ("arbitrary") and innermost.
    @pl.when(pl.program_id(1) == 0)
    def _():
        c_scr[...] = jnp.zeros_like(c_scr)
        h_scr[...] = jnp.zeros_like(h_scr)

    # ---- Input-conv contribution for ALL T rows: one MXU matmul, K=2C, N=T*W.
    # Tap k=0 multiplies x[w-1] (zero at w==0), tap k=1 multiplies x[w];
    # tap k=2 is zeroed by the 'B' mask and skipped entirely.
    x_flat = x_ref[...]                                            # (C, T*W)
    lanes = lax.broadcasted_iota(jnp.int32, (C, TW), 1)
    # shift right by one lane; zero the first column of every image row.
    x_prev = jnp.where(lanes % W == 0, 0.0,
                       pltpu.roll(x_flat, shift=1, axis=1))
    xz = jnp.concatenate([x_prev, x_flat], axis=0)                 # (2C, T*W)
    gx_scr[...] = (jnp.dot(wx_ref[...], xz,
                           preferred_element_type=jnp.float32)
                   + b_ref[...])                                   # (4H, T*W)

    # ---- Per-row recurrence: one fused h matmul per row on the serial path.
    wh = wh_ref[...]                                               # (4H, 3H)
    lane_h = lax.broadcasted_iota(jnp.int32, (H, W), 1)
    first_mask = lane_h == 0
    last_mask = lane_h == W - 1

    c = c_scr[...]
    h = h_scr[...]
    # Static (fully unrolled) loop: T, H are small; c/h stay in vregs and the
    # VMEM state scratch is only touched at the chunk boundaries.
    for t in range(T):
        h_prev = jnp.where(first_mask, 0.0,
                           pltpu.roll(h, shift=1, axis=1))          # h[w-1]
        h_next = jnp.where(last_mask, 0.0,
                           pltpu.roll(h, shift=W - 1, axis=1))       # h[w+1]
        zh = jnp.concatenate([h_prev, h, h_next], axis=0)            # (3H, W)
        gh = jnp.dot(wh, zh, preferred_element_type=jnp.float32)     # (4H, W)

        # All four gates through sigmoid (faithful to the PyTorch source).
        gates = jax.nn.sigmoid(gh + gx_scr[:, t * W:(t + 1) * W])    # (4H, W)
        gates = gates.reshape(4, H, W)                # leading-axis gate split
        i_g, g_g, f_g, o_g = gates[0], gates[1], gates[2], gates[3]

        c = f_g * c + i_g * g_g
        h = o_g * jnp.tanh(c)
        out_ref[t] = h.astype(out_ref.dtype)

    c_scr[...] = c
    h_scr[...] = h


def row_lstm_forward(x, w_ss, b_ss, w_is, b_is, hidden_dims,
                     rows_per_chunk=None):
    """x: (B, C, S, W) NCHW; returns (B, H, S, W) like the PyTorch module."""
    B, C, S, W = x.shape
    H = hidden_dims
    assert C == H, "RowLSTM forward requires channel_in == hidden_dims"
    assert H % 8 == 0, "hidden_dims must be a multiple of 8 (sublane tiling)"

    T = S if rows_per_chunk is None else min(rows_per_chunk, S)
    assert S % T == 0, "row chunk must divide the number of image rows"
    assert T == S or (T * W) % 128 == 0, "row chunk must keep lanes aligned"

    f32 = jnp.float32
    # Rows flattened into the lane axis: (B, C, S, W) -> (B, C, S*W).
    # Row-major contiguity makes this reshape free (no transpose).
    x_flat = x.astype(f32).reshape(B, C, S * W)

    # Fused weights; column order matches the operand stacking in the kernel.
    # Mask 'B' (kernel=3) zeroes tap 2 of the input conv -> only taps 0,1 used.
    w_x = jnp.concatenate([w_is[:, :, 0], w_is[:, :, 1]], axis=1).astype(f32)
    w_h = jnp.concatenate([w_ss[:, :, 0], w_ss[:, :, 1], w_ss[:, :, 2]],
                          axis=1).astype(f32)
    bias = (b_ss + b_is).reshape(4 * H, 1).astype(f32)

    out_steps = pl.pallas_call(
        row_lstm_kernel,
        out_shape=jax.ShapeDtypeStruct((B, S, H, W), f32),
        grid_spec=pltpu.PrefetchScalarGridSpec(
            num_scalar_prefetch=0,
            grid=(B, S // T),              # (parallel batch, sequential chunks)
            in_specs=[
                pl.BlockSpec((None, C, T * W), lambda b, s: (b, 0, s)),
                pl.BlockSpec((4 * H, 2 * C), lambda b, s: (0, 0)),   # input conv
                pl.BlockSpec((4 * H, 3 * H), lambda b, s: (0, 0)),   # state conv
                pl.BlockSpec((4 * H, 1), lambda b, s: (0, 0)),       # bias
            ],
            out_specs=pl.BlockSpec((None, T, H, W), lambda b, s: (b, s, 0, 0)),
            scratch_shapes=[
                pltpu.VMEM((4 * H, T * W), f32),   # gx: input-conv + bias
                pltpu.VMEM((H, W), f32),           # c state (persists)
                pltpu.VMEM((H, W), f32),           # h state (persists)
            ],
        ),
        compiler_params=pltpu.CompilerParams(
            # Batch rows are independent recurrences -> may split across cores;
            # the row-chunk axis MUST stay sequential.
            dimension_semantics=("parallel", "arbitrary"),
            vmem_limit_bytes=32 * 1024 * 1024),
    )(x_flat, w_x, w_h, bias)

    # Reproduce the module's output scramble:
    #   cat steps -> (B, S, H*W) -> view(B, S, W, H) -> permute(0, 3, 1, 2)
    out = out_steps.reshape(B, S, H * W).reshape(B, S, W, H)
    return jnp.transpose(out, (0, 3, 1, 2))              # (B, H, S, W)


def row_lstm_reference(x, w_ss, b_ss, w_is_masked, b_is, hidden_dims):
    """Pure-JAX (lax.conv) reference for correctness checking."""
    B, C, S, W = x.shape
    H = hidden_dims
    dn = ('NCH', 'OIH', 'NCH')
    c = jnp.zeros((B, H, W), jnp.float32)
    h = jnp.zeros((B, H, W), jnp.float32)
    outs = []
    for s in range(S):
        xs = x[:, :, s, :].astype(jnp.float32)
        s_s = lax.conv_general_dilated(h, w_ss, (1,), [(1, 1)],
                                       dimension_numbers=dn) + b_ss[None, :, None]
        i_s = lax.conv_general_dilated(xs, w_is_masked, (1,), [(1, 1)],
                                       dimension_numbers=dn) + b_is[None, :, None]
        gates = jax.nn.sigmoid(s_s + i_s)
        i_g, g_g, f_g, o_g = jnp.split(gates, 4, axis=1)
        c = f_g * c + i_g * g_g
        h = o_g * jnp.tanh(c)
        outs.append(h)
    out = jnp.stack(outs, axis=1).reshape(B, S, H * W)
    out = out.reshape(B, S, W, H).transpose(0, 3, 1, 2)
    return out


if __name__ == "__main__":
    # Small shapes consistent with the module (channel_in must equal
    # hidden_dims for the original forward to be runnable).  W=128 keeps the
    # lane dimension dense; H=8 keeps the gate tiles sublane-aligned; B=2 keeps
    # an even >=2 parallel extent for v7x's two TensorCores.
    batch, channel_in, n_seq, width = 2, 8, 16, 128
    hidden_dims = 8
    H = hidden_dims

    key = jax.random.PRNGKey(0)
    k_x, k_wss, k_bss, k_wis, k_bis = jax.random.split(key, 5)

    x = jax.random.normal(k_x, (batch, channel_in, n_seq, width), jnp.float32)

    # Conv1d-style uniform init, bound = 1/sqrt(in_channels * kernel_size)
    bound_ss = 1.0 / np.sqrt(channel_in * 3)
    bound_is = 1.0 / np.sqrt(hidden_dims * 3)
    w_ss = jax.random.uniform(k_wss, (4 * H, channel_in, 3), jnp.float32,
                              -bound_ss, bound_ss)
    b_ss = jax.random.uniform(k_bss, (4 * H,), jnp.float32, -bound_ss, bound_ss)
    w_is = jax.random.uniform(k_wis, (4 * H, hidden_dims, 3), jnp.float32,
                              -bound_is, bound_is)
    b_is = jax.random.uniform(k_bis, (4 * H,), jnp.float32, -bound_is, bound_is)
    # MaskedConv1d mask 'B', kernel=3: zero taps at positions >= 2
    w_is_masked = w_is.at[:, :, 2:].set(0.0)

    out = row_lstm_forward(x, w_ss, b_ss, w_is_masked, b_is, hidden_dims)
    out = jax.block_until_ready(out)
    assert out.shape == (batch, hidden_dims, n_seq, width), out.shape

    ref = jax.block_until_ready(
        row_lstm_reference(x, w_ss, b_ss, w_is_masked, b_is, hidden_dims))
    # Tolerance leaves headroom for MXU pass-precision differences between the
    # in-kernel matmuls and the lax.conv reference; real bugs are O(0.1).
    np.testing.assert_allclose(np.asarray(out), np.asarray(ref),
                               rtol=5e-3, atol=5e-3)

    print("KERNEL_OK")
</pallas_src>

<mosaic_0001>
module attributes {stable_mosaic.version = 11 : i64} {
  func.func @row_lstm_kernel(%arg0: i32, %arg1: i32, %arg2: memref<1x8x2048xf32, #tpu.memory_space<vmem>>, %arg3: memref<32x16xf32, #tpu.memory_space<vmem>>, %arg4: memref<32x24xf32, #tpu.memory_space<vmem>>, %arg5: memref<32x1xf32, #tpu.memory_space<vmem>>, %arg6: memref<1x16x8x128xf32, #tpu.memory_space<vmem>>, %arg7: memref<32x2048xf32, #tpu.memory_space<vmem>>, %arg8: memref<8x128xf32, #tpu.memory_space<vmem>>, %arg9: memref<8x128xf32, #tpu.memory_space<vmem>>) attributes {dimension_semantics = [#tpu.dimension_semantics<parallel>, #tpu.dimension_semantics<arbitrary>], iteration_bounds = array<i64: 2, 1>, scalar_prefetch = 0 : i64, scratch_operands = 3 : i64, tpu.core_type = #tpu.core_type<tc>, window_params = [{transform_indices = @transform_0, window_bounds = array<i64: 1, 8, 2048>}, {pipeline_mode = #tpu.pipeline_mode<synchronous>, transform_indices = @transform_1, window_bounds = array<i64: 32, 16>}, {pipeline_mode = #tpu.pipeline_mode<synchronous>, transform_indices = @transform_2, window_bounds = array<i64: 32, 24>}, {pipeline_mode = #tpu.pipeline_mode<synchronous>, transform_indices = @transform_3, window_bounds = array<i64: 32, 1>}, {transform_indices = @transform_4, window_bounds = array<i64: 1, 16, 8, 128>}]} {
    %c0_i32 = arith.constant 0 : i32
    %0 = arith.cmpi eq, %arg1, %c0_i32 : i32
    %1 = arith.extui %0 : i1 to i32
    %c0_i32_0 = arith.constant 0 : i32
    %2 = arith.cmpi ne, %1, %c0_i32_0 : i32
    scf.if %2 {
      %cst_189 = arith.constant 0.000000e+00 : f32
      %556 = vector.broadcast %cst_189 : f32 to vector<8x128xf32>
      %c0_190 = arith.constant 0 : index
      %c0_191 = arith.constant 0 : index
      %557 = vector.load %arg8[%c0_190, %c0_191] : memref<8x128xf32, #tpu.memory_space<vmem>>, vector<8x128xf32>
      tpu.vector_store %arg8[%c0_190, %c0_191], %556 {strides = array<i32>} : memref<8x128xf32, #tpu.memory_space<vmem>>, vector<8x128xf32>,
      %cst_192 = arith.constant 0.000000e+00 : f32
      %558 = vector.broadcast %cst_192 : f32 to vector<8x128xf32>
      %c0_193 = arith.constant 0 : index
      %c0_194 = arith.constant 0 : index
      %559 = vector.load %arg9[%c0_193, %c0_194] : memref<8x128xf32, #tpu.memory_space<vmem>>, vector<8x128xf32>
      tpu.vector_store %arg9[%c0_193, %c0_194], %558 {strides = array<i32>} : memref<8x128xf32, #tpu.memory_space<vmem>>, vector<8x128xf32>,
    } else {
    }
    %c0 = arith.constant 0 : index
    %c0_1 = arith.constant 0 : index
    %c0_2 = arith.constant 0 : index
    %3 = vector.load %arg2[%c0, %c0_1, %c0_2] : memref<1x8x2048xf32, #tpu.memory_space<vmem>>, vector<1x8x2048xf32>
    %4 = vector.shape_cast %3 : vector<1x8x2048xf32> to vector<8x2048xf32>
    %5 = tpu.iota {dimensions = array<i32: 1>} : vector<8x2048xi32>
    %c128_i32 = arith.constant 128 : i32
    %c0_i32_3 = arith.constant 0 : i32
    %6 = arith.cmpi eq, %c128_i32, %c0_i32_3 : i32
    %c1_i32 = arith.constant 1 : i32
    %7 = arith.select %6, %c1_i32, %c128_i32 : i32
    %8 = vector.broadcast %7 : i32 to vector<8x2048xi32>
    %9 = arith.remsi %5, %8 : vector<8x2048xi32>
    %c0_i32_4 = arith.constant 0 : i32
    %10 = vector.broadcast %c0_i32_4 : i32 to vector<8x2048xi32>
    %11 = arith.cmpi ne, %9, %10 : vector<8x2048xi32>
    %c0_i32_5 = arith.constant 0 : i32
    %12 = vector.broadcast %c0_i32_5 : i32 to vector<8x2048xi32>
    %13 = arith.cmpi slt, %9, %12 : vector<8x2048xi32>
    %c0_i32_6 = arith.constant 0 : i32
    %14 = arith.cmpi slt, %7, %c0_i32_6 : i32
    %15 = vector.broadcast %14 : i1 to vector<8x2048xi1>
    %16 = vector.broadcast %15 : vector<8x2048xi1> to vector<8x2048xi1>
    %17 = arith.xori %13, %16 : vector<8x2048xi1>
    %18 = arith.andi %17, %11 : vector<8x2048xi1>
    %19 = vector.broadcast %7 : i32 to vector<8x2048xi32>
    %20 = arith.addi %9, %19 : vector<8x2048xi32>
    %21 = arith.select %18, %20, %9 : vector<8x2048xi1>, vector<8x2048xi32>
    %c0_i32_7 = arith.constant 0 : i32
    %22 = vector.broadcast %c0_i32_7 : i32 to vector<8x2048xi32>
    %23 = arith.cmpi eq, %21, %22 : vector<8x2048xi32>
    %c1_i32_8 = arith.constant 1 : i32
    %24 = tpu.dynamic_rotate %4 by %c1_i32_8 dim 1 : vector<8x2048xf32>, i32 -> vector<8x2048xf32>
    %cst = arith.constant 0.000000e+00 : f32
    %25 = vector.broadcast %cst : f32 to vector<8x2048xf32>
    %26 = arith.select %23, %25, %24 : vector<8x2048xi1>, vector<8x2048xf32>
    %27 = tpu.concatenate %26, %4 in 0 : vector<8x2048xf32>, vector<8x2048xf32> -> vector<16x2048xf32>
    %c0_9 = arith.constant 0 : index
    %c0_10 = arith.constant 0 : index
    %28 = vector.load %arg3[%c0_9, %c0_10] : memref<32x16xf32, #tpu.memory_space<vmem>>, vector<32x16xf32>
    %cst_11 = arith.constant dense<0.000000e+00> : vector<32x2048xf32>
    %29 = tpu.matmul %28, %27, %cst_11 {dimension_numbers = #tpu.dot_dimension_numbers<[1], [0], [0], [1], [0, 0, 1, 1], [], []>} : vector<32x16xf32>, vector<16x2048xf32>, vector<32x2048xf32> -> vector<32x2048xf32>
    %c0_12 = arith.constant 0 : index
    %c0_13 = arith.constant 0 : index
    %30 = vector.load %arg5[%c0_12, %c0_13] : memref<32x1xf32, #tpu.memory_space<vmem>>, vector<32x1xf32>
    %31 = vector.broadcast %30 : vector<32x1xf32> to vector<32x2048xf32>
    %32 = arith.addf %29, %31 : vector<32x2048xf32>
    %c0_14 = arith.constant 0 : index
    %c0_15 = arith.constant 0 : index
    %33 = vector.load %arg7[%c0_14, %c0_15] : memref<32x2048xf32, #tpu.memory_space<vmem>>, vector<32x2048xf32>
    tpu.vector_store %arg7[%c0_14, %c0_15], %32 {strides = array<i32>} : memref<32x2048xf32, #tpu.memory_space<vmem>>, vector<32x2048xf32>,
    %c0_16 = arith.constant 0 : index
    %c0_17 = arith.constant 0 : index
    %34 = vector.load %arg4[%c0_16, %c0_17] : memref<32x24xf32, #tpu.memory_space<vmem>>, vector<32x24xf32>
    %35 = tpu.iota {dimensions = array<i32: 1>} : vector<8x128xi32>
    %c0_i32_18 = arith.constant 0 : i32
    %36 = vector.broadcast %c0_i32_18 : i32 to vector<8x128xi32>
    %37 = arith.cmpi eq, %35, %36 : vector<8x128xi32>
    %c127_i32 = arith.constant 127 : i32
    %38 = vector.broadcast %c127_i32 : i32 to vector<8x128xi32>
    %39 = arith.cmpi eq, %35, %38 : vector<8x128xi32>
    %c0_19 = arith.constant 0 : index
    %c0_20 = arith.constant 0 : index
    %40 = vector.load %arg8[%c0_19, %c0_20] : memref<8x128xf32, #tpu.memory_space<vmem>>, vector<8x128xf32>
    %c0_21 = arith.constant 0 : index
    %c0_22 = arith.constant 0 : index
    %41 = vector.load %arg9[%c0_21, %c0_22] : memref<8x128xf32, #tpu.memory_space<vmem>>, vector<8x128xf32>
    %c1_i32_23 = arith.constant 1 : i32
    %42 = tpu.dynamic_rotate %41 by %c1_i32_23 dim 1 : vector<8x128xf32>, i32 -> vector<8x128xf32>
    %cst_24 = arith.constant 0.000000e+00 : f32
    %43 = vector.broadcast %cst_24 : f32 to vector<8x128xf32>
    %44 = arith.select %37, %43, %42 : vector<8x128xi1>, vector<8x128xf32>
    %c127_i32_25 = arith.constant 127 : i32
    %45 = tpu.dynamic_rotate %41 by %c127_i32_25 dim 1 : vector<8x128xf32>, i32 -> vector<8x128xf32>
    %cst_26 = arith.constant 0.000000e+00 : f32
    %46 = vector.broadcast %cst_26 : f32 to vector<8x128xf32>
    %47 = arith.select %39, %46, %45 : vector<8x128xi1>, vector<8x128xf32>
    %48 = tpu.concatenate %44, %41, %47 in 0 : vector<8x128xf32>, vector<8x128xf32>, vector<8x128xf32> -> vector<24x128xf32>
    %cst_27 = arith.constant dense<0.000000e+00> : vector<32x128xf32>
    %49 = tpu.matmul %34, %48, %cst_27 {dimension_numbers = #tpu.dot_dimension_numbers<[1], [0], [0], [1], [0, 0, 1, 1], [], []>} : vector<32x24xf32>, vector<24x128xf32>, vector<32x128xf32> -> vector<32x128xf32>
    %c0_28 = arith.constant 0 : index
    %c0_29 = arith.constant 0 : index
    %50 = vector.load %arg7[%c0_28, %c0_29] : memref<32x2048xf32, #tpu.memory_space<vmem>>, vector<32x128xf32>
    %51 = arith.addf %49, %50 : vector<32x128xf32>
    %52 = arith.negf %51 : vector<32x128xf32>
    %53 = math.exp %52 : vector<32x128xf32>
    %cst_30 = arith.constant 1.000000e+00 : f32
    %54 = vector.broadcast %cst_30 : f32 to vector<32x128xf32>
    %55 = arith.addf %54, %53 : vector<32x128xf32>
    %56 = arith.divf %54, %55 : vector<32x128xf32>
    %57 = vector.shape_cast %56 : vector<32x128xf32> to vector<4x8x128xf32>
    %58 = vector.extract_strided_slice %57 {offsets = [0, 0, 0], sizes = [1, 8, 128], strides = [1, 1, 1]} : vector<4x8x128xf32> to vector<1x8x128xf32>
    %59 = vector.shape_cast %58 : vector<1x8x128xf32> to vector<8x128xf32>
    %60 = vector.extract_strided_slice %57 {offsets = [1, 0, 0], sizes = [1, 8, 128], strides = [1, 1, 1]} : vector<4x8x128xf32> to vector<1x8x128xf32>
    %61 = vector.shape_cast %60 : vector<1x8x128xf32> to vector<8x128xf32>
    %62 = vector.extract_strided_slice %57 {offsets = [2, 0, 0], sizes = [1, 8, 128], strides = [1, 1, 1]} : vector<4x8x128xf32> to vector<1x8x128xf32>
    %63 = vector.shape_cast %62 : vector<1x8x128xf32> to vector<8x128xf32>
    %64 = vector.extract_strided_slice %57 {offsets = [3, 0, 0], sizes = [1, 8, 128], strides = [1, 1, 1]} : vector<4x8x128xf32> to vector<1x8x128xf32>
    %65 = vector.shape_cast %64 : vector<1x8x128xf32> to vector<8x128xf32>
    %66 = arith.mulf %63, %40 : vector<8x128xf32>
    %67 = arith.mulf %59, %61 : vector<8x128xf32>
    %68 = arith.addf %66, %67 : vector<8x128xf32>
    %69 = math.tanh %68 : vector<8x128xf32>
    %70 = arith.mulf %65, %69 : vector<8x128xf32>
    %c0_31 = arith.constant 0 : index
    %c0_32 = arith.constant 0 : index
    %c0_33 = arith.constant 0 : index
    %c0_34 = arith.constant 0 : index
    %71 = vector.load %arg6[%c0_31, %c0_32, %c0_33, %c0_34] : memref<1x16x8x128xf32, #tpu.memory_space<vmem>>, vector<1x1x8x128xf32>
    %72 = vector.shape_cast %71 : vector<1x1x8x128xf32> to vector<8x128xf32>
    %73 = vector.shape_cast %70 : vector<8x128xf32> to vector<1x1x8x128xf32>
    tpu.vector_store %arg6[%c0_31, %c0_32, %c0_33, %c0_34], %73 {strides = array<i32>} : memref<1x16x8x128xf32, #tpu.memory_space<vmem>>, vector<1x1x8x128xf32>,
    %c1_i32_35 = arith.constant 1 : i32
    %74 = tpu.dynamic_rotate %70 by %c1_i32_35 dim 1 : vector<8x128xf32>, i32 -> vector<8x128xf32>
    %cst_36 = arith.constant 0.000000e+00 : f32
    %75 = vector.broadcast %cst_36 : f32 to vector<8x128xf32>
    %76 = arith.select %37, %75, %74 : vector<8x128xi1>, vector<8x128xf32>
    %c127_i32_37 = arith.constant 127 : i32
    %77 = tpu.dynamic_rotate %70 by %c127_i32_37 dim 1 : vector<8x128xf32>, i32 -> vector<8x128xf32>
    %cst_38 = arith.constant 0.000000e+00 : f32
    %78 = vector.broadcast %cst_38 : f32 to vector<8x128xf32>
    %79 = arith.select %39, %78, %77 : vector<8x128xi1>, vector<8x128xf32>
    %80 = tpu.concatenate %76, %70, %79 in 0 : vector<8x128xf32>, vector<8x128xf32>, vector<8x128xf32> -> vector<24x128xf32>
    %cst_39 = arith.constant dense<0.000000e+00> : vector<32x128xf32>
    %81 = tpu.matmul %34, %80, %cst_39 {dimension_numbers = #tpu.dot_dimension_numbers<[1], [0], [0], [1], [0, 0, 1, 1], [], []>} : vector<32x24xf32>, vector<24x128xf32>, vector<32x128xf32> -> vector<32x128xf32>
    %c0_40 = arith.constant 0 : index
    %c128 = arith.constant 128 : index
    %82 = vector.load %arg7[%c0_40, %c128] : memref<32x2048xf32, #tpu.memory_space<vmem>>, vector<32x128xf32>
    %83 = arith.addf %81, %82 : vector<32x128xf32>
    %84 = arith.negf %83 : vector<32x128xf32>
    %85 = math.exp %84 : vector<32x128xf32>
    %cst_41 = arith.constant 1.000000e+00 : f32
    %86 = vector.broadcast %cst_41 : f32 to vector<32x128xf32>
    %87 = arith.addf %86, %85 : vector<32x128xf32>
    %88 = arith.divf %86, %87 : vector<32x128xf32>
    %89 = vector.shape_cast %88 : vector<32x128xf32> to vector<4x8x128xf32>
    %90 = vector.extract_strided_slice %89 {offsets = [0, 0, 0], sizes = [1, 8, 128], strides = [1, 1, 1]} : vector<4x8x128xf32> to vector<1x8x128xf32>
    %91 = vector.shape_cast %90 : vector<1x8x128xf32> to vector<8x128xf32>
    %92 = vector.extract_strided_slice %89 {offsets = [1, 0, 0], sizes = [1, 8, 128], strides = [1, 1, 1]} : vector<4x8x128xf32> to vector<1x8x128xf32>
    %93 = vector.shape_cast %92 : vector<1x8x128xf32> to vector<8x128xf32>
    %94 = vector.extract_strided_slice %89 {offsets = [2, 0, 0], sizes = [1, 8, 128], strides = [1, 1, 1]} : vector<4x8x128xf32> to vector<1x8x128xf32>
    %95 = vector.shape_cast %94 : vector<1x8x128xf32> to vector<8x128xf32>
    %96 = vector.extract_strided_slice %89 {offsets = [3, 0, 0], sizes = [1, 8, 128], strides = [1, 1, 1]} : vector<4x8x128xf32> to vector<1x8x128xf32>
    %97 = vector.shape_cast %96 : vector<1x8x128xf32> to vector<8x128xf32>
    %98 = arith.mulf %95, %68 : vector<8x128xf32>
    %99 = arith.mulf %91, %93 : vector<8x128xf32>
    %100 = arith.addf %98, %99 : vector<8x128xf32>
    %101 = math.tanh %100 : vector<8x128xf32>
    %102 = arith.mulf %97, %101 : vector<8x128xf32>
    %c0_42 = arith.constant 0 : index
    %c1 = arith.constant 1 : index
    %c0_43 = arith.constant 0 : index
    %c0_44 = arith.constant 0 : index
    %103 = vector.load %arg6[%c0_42, %c1, %c0_43, %c0_44] : memref<1x16x8x128xf32, #tpu.memory_space<vmem>>, vector<1x1x8x128xf32>
    %104 = vector.shape_cast %103 : vector<1x1x8x128xf32> to vector<8x128xf32>
    %105 = vector.shape_cast %102 : vector<8x128xf32> to vector<1x1x8x128xf32>
    tpu.vector_store %arg6[%c0_42, %c1, %c0_43, %c0_44], %105 {strides = array<i32>} : memref<1x16x8x128xf32, #tpu.memory_space<vmem>>, vector<1x1x8x128xf32>,
    %c1_i32_45 = arith.constant 1 : i32
    %106 = tpu.dynamic_rotate %102 by %c1_i32_45 dim 1 : vector<8x128xf32>, i32 -> vector<8x128xf32>
    %cst_46 = arith.constant 0.000000e+00 : f32
    %107 = vector.broadcast %cst_46 : f32 to vector<8x128xf32>
    %108 = arith.select %37, %107, %106 : vector<8x128xi1>, vector<8x128xf32>
    %c127_i32_47 = arith.constant 127 : i32
    %109 = tpu.dynamic_rotate %102 by %c127_i32_47 dim 1 : vector<8x128xf32>, i32 -> vector<8x128xf32>
    %cst_48 = arith.constant 0.000000e+00 : f32
    %110 = vector.broadcast %cst_48 : f32 to vector<8x128xf32>
    %111 = arith.select %39, %110, %109 : vector<8x128xi1>, vector<8x128xf32>
    %112 = tpu.concatenate %108, %102, %111 in 0 : vector<8x128xf32>, vector<8x128xf32>, vector<8x128xf32> -> vector<24x128xf32>
    %cst_49 = arith.constant dense<0.000000e+00> : vector<32x128xf32>
    %113 = tpu.matmul %34, %112, %cst_49 {dimension_numbers = #tpu.dot_dimension_numbers<[1], [0], [0], [1], [0, 0, 1, 1], [], []>} : vector<32x24xf32>, vector<24x128xf32>, vector<32x128xf32> -> vector<32x128xf32>
    %c0_50 = arith.constant 0 : index
    %c256 = arith.constant 256 : index
    %114 = vector.load %arg7[%c0_50, %c256] : memref<32x2048xf32, #tpu.memory_space<vmem>>, vector<32x128xf32>
    %115 = arith.addf %113, %114 : vector<32x128xf32>
    %116 = arith.negf %115 : vector<32x128xf32>
    %117 = math.exp %116 : vector<32x128xf32>
    %cst_51 = arith.constant 1.000000e+00 : f32
    %118 = vector.broadcast %cst_51 : f32 to vector<32x128xf32>
    %119 = arith.addf %118, %117 : vector<32x128xf32>
    %120 = arith.divf %118, %119 : vector<32x128xf32>
    %121 = vector.shape_cast %120 : vector<32x128xf32> to vector<4x8x128xf32>
    %122 = vector.extract_strided_slice %121 {offsets = [0, 0, 0], sizes = [1, 8, 128], strides = [1, 1, 1]} : vector<4x8x128xf32> to vector<1x8x128xf32>
    %123 = vector.shape_cast %122 : vector<1x8x128xf32> to vector<8x128xf32>
    %124 = vector.extract_strided_slice %121 {offsets = [1, 0, 0], sizes = [1, 8, 128], strides = [1, 1, 1]} : vector<4x8x128xf32> to vector<1x8x128xf32>
    %125 = vector.shape_cast %124 : vector<1x8x128xf32> to vector<8x128xf32>
    %126 = vector.extract_strided_slice %121 {offsets = [2, 0, 0], sizes = [1, 8, 128], strides = [1, 1, 1]} : vector<4x8x128xf32> to vector<1x8x128xf32>
    %127 = vector.shape_cast %126 : vector<1x8x128xf32> to vector<8x128xf32>
    %128 = vector.extract_strided_slice %121 {offsets = [3, 0, 0], sizes = [1, 8, 128], strides = [1, 1, 1]} : vector<4x8x128xf32> to vector<1x8x128xf32>
    %129 = vector.shape_cast %128 : vector<1x8x128xf32> to vector<8x128xf32>
    %130 = arith.mulf %127, %100 : vector<8x128xf32>
    %131 = arith.mulf %123, %125 : vector<8x128xf32>
    %132 = arith.addf %130, %131 : vector<8x128xf32>
    %133 = math.tanh %132 : vector<8x128xf32>
    %134 = arith.mulf %129, %133 : vector<8x128xf32>
    %c0_52 = arith.constant 0 : index
    %c2 = arith.constant 2 : index
    %c0_53 = arith.constant 0 : index
    %c0_54 = arith.constant 0 : index
    %135 = vector.load %arg6[%c0_52, %c2, %c0_53, %c0_54] : memref<1x16x8x128xf32, #tpu.memory_space<vmem>>, vector<1x1x8x128xf32>
    %136 = vector.shape_cast %135 : vector<1x1x8x128xf32> to vector<8x128xf32>
    %137 = vector.shape_cast %134 : vector<8x128xf32> to vector<1x1x8x128xf32>
    tpu.vector_store %arg6[%c0_52, %c2, %c0_53, %c0_54], %137 {strides = array<i32>} : memref<1x16x8x128xf32, #tpu.memory_space<vmem>>, vector<1x1x8x128xf32>,
    %c1_i32_55 = arith.constant 1 : i32
    %138 = tpu.dynamic_rotate %134 by %c1_i32_55 dim 1 : vector<8x128xf32>, i32 -> vector<8x128xf32>
    %cst_56 = arith.constant 0.000000e+00 : f32
    %139 = vector.broadcast %cst_56 : f32 to vector<8x128xf32>
    %140 = arith.select %37, %139, %138 : vector<8x128xi1>, vector<8x128xf32>
    %c127_i32_57 = arith.constant 127 : i32
    %141 = tpu.dynamic_rotate %134 by %c127_i32_57 dim 1 : vector<8x128xf32>, i32 -> vector<8x128xf32>
    %cst_58 = arith.constant 0.000000e+00 : f32
    %142 = vector.broadcast %cst_58 : f32 to vector<8x128xf32>
    %143 = arith.select %39, %142, %141 : vector<8x128xi1>, vector<8x128xf32>
    %144 = tpu.concatenate %140, %134, %143 in 0 : vector<8x128xf32>, vector<8x128xf32>, vector<8x128xf32> -> vector<24x128xf32>
    %cst_59 = arith.constant dense<0.000000e+00> : vector<32x128xf32>
    %145 = tpu.matmul %34, %144, %cst_59 {dimension_numbers = #tpu.dot_dimension_numbers<[1], [0], [0], [1], [0, 0, 1, 1], [], []>} : vector<32x24xf32>, vector<24x128xf32>, vector<32x128xf32> -> vector<32x128xf32>
    %c0_60 = arith.constant 0 : index
    %c384 = arith.constant 384 : index
    %146 = vector.load %arg7[%c0_60, %c384] : memref<32x2048xf32, #tpu.memory_space<vmem>>, vector<32x128xf32>
    %147 = arith.addf %145, %146 : vector<32x128xf32>
    %148 = arith.negf %147 : vector<32x128xf32>
    %149 = math.exp %148 : vector<32x128xf32>
    %cst_61 = arith.constant 1.000000e+00 : f32
    %150 = vector.broadcast %cst_61 : f32 to vector<32x128xf32>
    %151 = arith.addf %150, %149 : vector<32x128xf32>
    %152 = arith.divf %150, %151 : vector<32x128xf32>
    %153 = vector.shape_cast %152 : vector<32x128xf32> to vector<4x8x128xf32>
    %154 = vector.extract_strided_slice %153 {offsets = [0, 0, 0], sizes = [1, 8, 128], strides = [1, 1, 1]} : vector<4x8x128xf32> to vector<1x8x128xf32>
    %155 = vector.shape_cast %154 : vector<1x8x128xf32> to vector<8x128xf32>
    %156 = vector.extract_strided_slice %153 {offsets = [1, 0, 0], sizes = [1, 8, 128], strides = [1, 1, 1]} : vector<4x8x128xf32> to vector<1x8x128xf32>
    %157 = vector.shape_cast %156 : vector<1x8x128xf32> to vector<8x128xf32>
    %158 = vector.extract_strided_slice %153 {offsets = [2, 0, 0], sizes = [1, 8, 128], strides = [1, 1, 1]} : vector<4x8x128xf32> to vector<1x8x128xf32>
    %159 = vector.shape_cast %158 : vector<1x8x128xf32> to vector<8x128xf32>
    %160 = vector.extract_strided_slice %153 {offsets = [3, 0, 0], sizes = [1, 8, 128], strides = [1, 1, 1]} : vector<4x8x128xf32> to vector<1x8x128xf32>
    %161 = vector.shape_cast %160 : vector<1x8x128xf32> to vector<8x128xf32>
    %162 = arith.mulf %159, %132 : vector<8x128xf32>
    %163 = arith.mulf %155, %157 : vector<8x128xf32>
    %164 = arith.addf %162, %163 : vector<8x128xf32>
    %165 = math.tanh %164 : vector<8x128xf32>
    %166 = arith.mulf %161, %165 : vector<8x128xf32>
    %c0_62 = arith.constant 0 : index
    %c3 = arith.constant 3 : index
    %c0_63 = arith.constant 0 : index
    %c0_64 = arith.constant 0 : index
    %167 = vector.load %arg6[%c0_62, %c3, %c0_63, %c0_64] : memref<1x16x8x128xf32, #tpu.memory_space<vmem>>, vector<1x1x8x128xf32>
    %168 = vector.shape_cast %167 : vector<1x1x8x128xf32> to vector<8x128xf32>
    %169 = vector.shape_cast %166 : vector<8x128xf32> to vector<1x1x8x128xf32>
    tpu.vector_store %arg6[%c0_62, %c3, %c0_63, %c0_64], %169 {strides = array<i32>} : memref<1x16x8x128xf32, #tpu.memory_space<vmem>>, vector<1x1x8x128xf32>,
    %c1_i32_65 = arith.constant 1 : i32
    %170 = tpu.dynamic_rotate %166 by %c1_i32_65 dim 1 : vector<8x128xf32>, i32 -> vector<8x128xf32>
    %cst_66 = arith.constant 0.000000e+00 : f32
    %171 = vector.broadcast %cst_66 : f32 to vector<8x128xf32>
    %172 = arith.select %37, %171, %170 : vector<8x128xi1>, vector<8x128xf32>
    %c127_i32_67 = arith.constant 127 : i32
    %173 = tpu.dynamic_rotate %166 by %c127_i32_67 dim 1 : vector<8x128xf32>, i32 -> vector<8x128xf32>
    %cst_68 = arith.constant 0.000000e+00 : f32
    %174 = vector.broadcast %cst_68 : f32 to vector<8x128xf32>
    %175 = arith.select %39, %174, %173 : vector<8x128xi1>, vector<8x128xf32>
    %176 = tpu.concatenate %172, %166, %175 in 0 : vector<8x128xf32>, vector<8x128xf32>, vector<8x128xf32> -> vector<24x128xf32>
    %cst_69 = arith.constant dense<0.000000e+00> : vector<32x128xf32>
    %177 = tpu.matmul %34, %176, %cst_69 {dimension_numbers = #tpu.dot_dimension_numbers<[1], [0], [0], [1], [0, 0, 1, 1], [], []>} : vector<32x24xf32>, vector<24x128xf32>, vector<32x128xf32> -> vector<32x128xf32>
    %c0_70 = arith.constant 0 : index
    %c512 = arith.constant 512 : index
    %178 = vector.load %arg7[%c0_70, %c512] : memref<32x2048xf32, #tpu.memory_space<vmem>>, vector<32x128xf32>
    %179 = arith.addf %177, %178 : vector<32x128xf32>
    %180 = arith.negf %179 : vector<32x128xf32>
    %181 = math.exp %180 : vector<32x128xf32>
    %cst_71 = arith.constant 1.000000e+00 : f32
    %182 = vector.broadcast %cst_71 : f32 to vector<32x128xf32>
    %183 = arith.addf %182, %181 : vector<32x128xf32>
    %184 = arith.divf %182, %183 : vector<32x128xf32>
    %185 = vector.shape_cast %184 : vector<32x128xf32> to vector<4x8x128xf32>
    %186 = vector.extract_strided_slice %185 {offsets = [0, 0, 0], sizes = [1, 8, 128], strides = [1, 1, 1]} : vector<4x8x128xf32> to vector<1x8x128xf32>
    %187 = vector.shape_cast %186 : vector<1x8x128xf32> to vector<8x128xf32>
    %188 = vector.extract_strided_slice %185 {offsets = [1, 0, 0], sizes = [1, 8, 128], strides = [1, 1, 1]} : vector<4x8x128xf32> to vector<1x8x128xf32>
    %189 = vector.shape_cast %188 : vector<1x8x128xf32> to vector<8x128xf32>
    %190 = vector.extract_strided_slice %185 {offsets = [2, 0, 0], sizes = [1, 8, 128], strides = [1, 1, 1]} : vector<4x8x128xf32> to vector<1x8x128xf32>
    %191 = vector.shape_cast %190 : vector<1x8x128xf32> to vector<8x128xf32>
    %192 = vector.extract_strided_slice %185 {offsets = [3, 0, 0], sizes = [1, 8, 128], strides = [1, 1, 1]} : vector<4x8x128xf32> to vector<1x8x128xf32>
    %193 = vector.shape_cast %192 : vector<1x8x128xf32> to vector<8x128xf32>
    %194 = arith.mulf %191, %164 : vector<8x128xf32>
    %195 = arith.mulf %187, %189 : vector<8x128xf32>
    %196 = arith.addf %194, %195 : vector<8x128xf32>
    %197 = math.tanh %196 : vector<8x128xf32>
    %198 = arith.mulf %193, %197 : vector<8x128xf32>
    %c0_72 = arith.constant 0 : index
    %c4 = arith.constant 4 : index
    %c0_73 = arith.constant 0 : index
    %c0_74 = arith.constant 0 : index
    %199 = vector.load %arg6[%c0_72, %c4, %c0_73, %c0_74] : memref<1x16x8x128xf32, #tpu.memory_space<vmem>>, vector<1x1x8x128xf32>
    %200 = vector.shape_cast %199 : vector<1x1x8x128xf32> to vector<8x128xf32>
    %201 = vector.shape_cast %198 : vector<8x128xf32> to vector<1x1x8x128xf32>
    tpu.vector_store %arg6[%c0_72, %c4, %c0_73, %c0_74], %201 {strides = array<i32>} : memref<1x16x8x128xf32, #tpu.memory_space<vmem>>, vector<1x1x8x128xf32>,
    %c1_i32_75 = arith.constant 1 : i32
    %202 = tpu.dynamic_rotate %198 by %c1_i32_75 dim 1 : vector<8x128xf32>, i32 -> vector<8x128xf32>
    %cst_76 = arith.constant 0.000000e+00 : f32
    %203 = vector.broadcast %cst_76 : f32 to vector<8x128xf32>
    %204 = arith.select %37, %203, %202 : vector<8x128xi1>, vector<8x128xf32>
    %c127_i32_77 = arith.constant 127 : i32
    %205 = tpu.dynamic_rotate %198 by %c127_i32_77 dim 1 : vector<8x128xf32>, i32 -> vector<8x128xf32>
    %cst_78 = arith.constant 0.000000e+00 : f32
    %206 = vector.broadcast %cst_78 : f32 to vector<8x128xf32>
    %207 = arith.select %39, %206, %205 : vector<8x128xi1>, vector<8x128xf32>
    %208 = tpu.concatenate %204, %198, %207 in 0 : vector<8x128xf32>, vector<8x128xf32>, vector<8x128xf32> -> vector<24x128xf32>
    %cst_79 = arith.constant dense<0.000000e+00> : vector<32x128xf32>
    %209 = tpu.matmul %34, %208, %cst_79 {dimension_numbers = #tpu.dot_dimension_numbers<[1], [0], [0], [1], [0, 0, 1, 1], [], []>} : vector<32x24xf32>, vector<24x128xf32>, vector<32x128xf32> -> vector<32x128xf32>
    %c0_80 = arith.constant 0 : index
    %c640 = arith.constant 640 : index
    %210 = vector.load %arg7[%c0_80, %c640] : memref<32x2048xf32, #tpu.memory_space<vmem>>, vector<32x128xf32>
    %211 = arith.addf %209, %210 : vector<32x128xf32>
    %212 = arith.negf %211 : vector<32x128xf32>
    %213 = math.exp %212 : vector<32x128xf32>
    %cst_81 = arith.constant 1.000000e+00 : f32
    %214 = vector.broadcast %cst_81 : f32 to vector<32x128xf32>
    %215 = arith.addf %214, %213 : vector<32x128xf32>
    %216 = arith.divf %214, %215 : vector<32x128xf32>
    %217 = vector.shape_cast %216 : vector<32x128xf32> to vector<4x8x128xf32>
    %218 = vector.extract_strided_slice %217 {offsets = [0, 0, 0], sizes = [1, 8, 128], strides = [1, 1, 1]} : vector<4x8x128xf32> to vector<1x8x128xf32>
    %219 = vector.shape_cast %218 : vector<1x8x128xf32> to vector<8x128xf32>
    %220 = vector.extract_strided_slice %217 {offsets = [1, 0, 0], sizes = [1, 8, 128], strides = [1, 1, 1]} : vector<4x8x128xf32> to vector<1x8x128xf32>
    %221 = vector.shape_cast %220 : vector<1x8x128xf32> to vector<8x128xf32>
    %222 = vector.extract_strided_slice %217 {offsets = [2, 0, 0], sizes = [1, 8, 128], strides = [1, 1, 1]} : vector<4x8x128xf32> to vector<1x8x128xf32>
    %223 = vector.shape_cast %222 : vector<1x8x128xf32> to vector<8x128xf32>
    %224 = vector.extract_strided_slice %217 {offsets = [3, 0, 0], sizes = [1, 8, 128], strides = [1, 1, 1]} : vector<4x8x128xf32> to vector<1x8x128xf32>
    %225 = vector.shape_cast %224 : vector<1x8x128xf32> to vector<8x128xf32>
    %226 = arith.mulf %223, %196 : vector<8x128xf32>
    %227 = arith.mulf %219, %221 : vector<8x128xf32>
    %228 = arith.addf %226, %227 : vector<8x128xf32>
    %229 = math.tanh %228 : vector<8x128xf32>
    %230 = arith.mulf %225, %229 : vector<8x128xf32>
    %c0_82 = arith.constant 0 : index
    %c5 = arith.constant 5 : index
    %c0_83 = arith.constant 0 : index
    %c0_84 = arith.constant 0 : index
    %231 = vector.load %arg6[%c0_82, %c5, %c0_83, %c0_84] : memref<1x16x8x128xf32, #tpu.memory_space<vmem>>, vector<1x1x8x128xf32>
    %232 = vector.shape_cast %231 : vector<1x1x8x128xf32> to vector<8x128xf32>
    %233 = vector.shape_cast %230 : vector<8x128xf32> to vector<1x1x8x128xf32>
    tpu.vector_store %arg6[%c0_82, %c5, %c0_83, %c0_84], %233 {strides = array<i32>} : memref<1x16x8x128xf32, #tpu.memory_space<vmem>>, vector<1x1x8x128xf32>,
    %c1_i32_85 = arith.constant 1 : i32
    %234 = tpu.dynamic_rotate %230 by %c1_i32_85 dim 1 : vector<8x128xf32>, i32 -> vector<8x128xf32>
    %cst_86 = arith.constant 0.000000e+00 : f32
    %235 = vector.broadcast %cst_86 : f32 to vector<8x128xf32>
    %236 = arith.select %37, %235, %234 : vector<8x128xi1>, vector<8x128xf32>
    %c127_i32_87 = arith.constant 127 : i32
    %237 = tpu.dynamic_rotate %230 by %c127_i32_87 dim 1 : vector<8x128xf32>, i32 -> vector<8x128xf32>
    %cst_88 = arith.constant 0.000000e+00 : f32
    %238 = vector.broadcast %cst_88 : f32 to vector<8x128xf32>
    %239 = arith.select %39, %238, %237 : vector<8x128xi1>, vector<8x128xf32>
    %240 = tpu.concatenate %236, %230, %239 in 0 : vector<8x128xf32>, vector<8x128xf32>, vector<8x128xf32> -> vector<24x128xf32>
    %cst_89 = arith.constant dense<0.000000e+00> : vector<32x128xf32>
    %241 = tpu.matmul %34, %240, %cst_89 {dimension_numbers = #tpu.dot_dimension_numbers<[1], [0], [0], [1], [0, 0, 1, 1], [], []>} : vector<32x24xf32>, vector<24x128xf32>, vector<32x128xf32> -> vector<32x128xf32>
    %c0_90 = arith.constant 0 : index
    %c768 = arith.constant 768 : index
    %242 = vector.load %arg7[%c0_90, %c768] : memref<32x2048xf32, #tpu.memory_space<vmem>>, vector<32x128xf32>
    %243 = arith.addf %241, %242 : vector<32x128xf32>
    %244 = arith.negf %243 : vector<32x128xf32>
    %245 = math.exp %244 : vector<32x128xf32>
    %cst_91 = arith.constant 1.000000e+00 : f32
    %246 = vector.broadcast %cst_91 : f32 to vector<32x128xf32>
    %247 = arith.addf %246, %245 : vector<32x128xf32>
    %248 = arith.divf %246, %247 : vector<32x128xf32>
    %249 = vector.shape_cast %248 : vector<32x128xf32> to vector<4x8x128xf32>
    %250 = vector.extract_strided_slice %249 {offsets = [0, 0, 0], sizes = [1, 8, 128], strides = [1, 1, 1]} : vector<4x8x128xf32> to vector<1x8x128xf32>
    %251 = vector.shape_cast %250 : vector<1x8x128xf32> to vector<8x128xf32>
    %252 = vector.extract_strided_slice %249 {offsets = [1, 0, 0], sizes = [1, 8, 128], strides = [1, 1, 1]} : vector<4x8x128xf32> to vector<1x8x128xf32>
    %253 = vector.shape_cast %252 : vector<1x8x128xf32> to vector<8x128xf32>
    %254 = vector.extract_strided_slice %249 {offsets = [2, 0, 0], sizes = [1, 8, 128], strides = [1, 1, 1]} : vector<4x8x128xf32> to vector<1x8x128xf32>
    %255 = vector.shape_cast %254 : vector<1x8x128xf32> to vector<8x128xf32>
    %256 = vector.extract_strided_slice %249 {offsets = [3, 0, 0], sizes = [1, 8, 128], strides = [1, 1, 1]} : vector<4x8x128xf32> to vector<1x8x128xf32>
    %257 = vector.shape_cast %256 : vector<1x8x128xf32> to vector<8x128xf32>
    %258 = arith.mulf %255, %228 : vector<8x128xf32>
    %259 = arith.mulf %251, %253 : vector<8x128xf32>
    %260 = arith.addf %258, %259 : vector<8x128xf32>
    %261 = math.tanh %260 : vector<8x128xf32>
    %262 = arith.mulf %257, %261 : vector<8x128xf32>
    %c0_92 = arith.constant 0 : index
    %c6 = arith.constant 6 : index
    %c0_93 = arith.constant 0 : index
    %c0_94 = arith.constant 0 : index
    %263 = vector.load %arg6[%c0_92, %c6, %c0_93, %c0_94] : memref<1x16x8x128xf32, #tpu.memory_space<vmem>>, vector<1x1x8x128xf32>
    %264 = vector.shape_cast %263 : vector<1x1x8x128xf32> to vector<8x128xf32>
    %265 = vector.shape_cast %262 : vector<8x128xf32> to vector<1x1x8x128xf32>
    tpu.vector_store %arg6[%c0_92, %c6, %c0_93, %c0_94], %265 {strides = array<i32>} : memref<1x16x8x128xf32, #tpu.memory_space<vmem>>, vector<1x1x8x128xf32>,
    %c1_i32_95 = arith.constant 1 : i32
    %266 = tpu.dynamic_rotate %262 by %c1_i32_95 dim 1 : vector<8x128xf32>, i32 -> vector<8x128xf32>
    %cst_96 = arith.constant 0.000000e+00 : f32
    %267 = vector.broadcast %cst_96 : f32 to vector<8x128xf32>
    %268 = arith.select %37, %267, %266 : vector<8x128xi1>, vector<8x128xf32>
    %c127_i32_97 = arith.constant 127 : i32
    %269 = tpu.dynamic_rotate %262 by %c127_i32_97 dim 1 : vector<8x128xf32>, i32 -> vector<8x128xf32>
    %cst_98 = arith.constant 0.000000e+00 : f32
    %270 = vector.broadcast %cst_98 : f32 to vector<8x128xf32>
    %271 = arith.select %39, %270, %269 : vector<8x128xi1>, vector<8x128xf32>
    %272 = tpu.concatenate %268, %262, %271 in 0 : vector<8x128xf32>, vector<8x128xf32>, vector<8x128xf32> -> vector<24x128xf32>
    %cst_99 = arith.constant dense<0.000000e+00> : vector<32x128xf32>
    %273 = tpu.matmul %34, %272, %cst_99 {dimension_numbers = #tpu.dot_dimension_numbers<[1], [0], [0], [1], [0, 0, 1, 1], [], []>} : vector<32x24xf32>, vector<24x128xf32>, vector<32x128xf32> -> vector<32x128xf32>
    %c0_100 = arith.constant 0 : index
    %c896 = arith.constant 896 : index
    %274 = vector.load %arg7[%c0_100, %c896] : memref<32x2048xf32, #tpu.memory_space<vmem>>, vector<32x128xf32>
    %275 = arith.addf %273, %274 : vector<32x128xf32>
    %276 = arith.negf %275 : vector<32x128xf32>
    %277 = math.exp %276 : vector<32x128xf32>
    %cst_101 = arith.constant 1.000000e+00 : f32
    %278 = vector.broadcast %cst_101 : f32 to vector<32x128xf32>
    %279 = arith.addf %278, %277 : vector<32x128xf32>
    %280 = arith.divf %278, %279 : vector<32x128xf32>
    %281 = vector.shape_cast %280 : vector<32x128xf32> to vector<4x8x128xf32>
    %282 = vector.extract_strided_slice %281 {offsets = [0, 0, 0], sizes = [1, 8, 128], strides = [1, 1, 1]} : vector<4x8x128xf32> to vector<1x8x128xf32>
    %283 = vector.shape_cast %282 : vector<1x8x128xf32> to vector<8x128xf32>
    %284 = vector.extract_strided_slice %281 {offsets = [1, 0, 0], sizes = [1, 8, 128], strides = [1, 1, 1]} : vector<4x8x128xf32> to vector<1x8x128xf32>
    %285 = vector.shape_cast %284 : vector<1x8x128xf32> to vector<8x128xf32>
    %286 = vector.extract_strided_slice %281 {offsets = [2, 0, 0], sizes = [1, 8, 128], strides = [1, 1, 1]} : vector<4x8x128xf32> to vector<1x8x128xf32>
    %287 = vector.shape_cast %286 : vector<1x8x128xf32> to vector<8x128xf32>
    %288 = vector.extract_strided_slice %281 {offsets = [3, 0, 0], sizes = [1, 8, 128], strides = [1, 1, 1]} : vector<4x8x128xf32> to vector<1x8x128xf32>
    %289 = vector.shape_cast %288 : vector<1x8x128xf32> to vector<8x128xf32>
    %290 = arith.mulf %287, %260 : vector<8x128xf32>
    %291 = arith.mulf %283, %285 : vector<8x128xf32>
    %292 = arith.addf %290, %291 : vector<8x128xf32>
    %293 = math.tanh %292 : vector<8x128xf32>
    %294 = arith.mulf %289, %293 : vector<8x128xf32>
    %c0_102 = arith.constant 0 : index
    %c7 = arith.constant 7 : index
    %c0_103 = arith.constant 0 : index
    %c0_104 = arith.constant 0 : index
    %295 = vector.load %arg6[%c0_102, %c7, %c0_103, %c0_104] : memref<1x16x8x128xf32, #tpu.memory_space<vmem>>, vector<1x1x8x128xf32>
    %296 = vector.shape_cast %295 : vector<1x1x8x128xf32> to vector<8x128xf32>
    %297 = vector.shape_cast %294 : vector<8x128xf32> to vector<1x1x8x128xf32>
    tpu.vector_store %arg6[%c0_102, %c7, %c0_103, %c0_104], %297 {strides = array<i32>} : memref<1x16x8x128xf32, #tpu.memory_space<vmem>>, vector<1x1x8x128xf32>,
    %c1_i32_105 = arith.constant 1 : i32
    %298 = tpu.dynamic_rotate %294 by %c1_i32_105 dim 1 : vector<8x128xf32>, i32 -> vector<8x128xf32>
    %cst_106 = arith.constant 0.000000e+00 : f32
    %299 = vector.broadcast %cst_106 : f32 to vector<8x128xf32>
    %300 = arith.select %37, %299, %298 : vector<8x128xi1>, vector<8x128xf32>
    %c127_i32_107 = arith.constant 127 : i32
    %301 = tpu.dynamic_rotate %294 by %c127_i32_107 dim 1 : vector<8x128xf32>, i32 -> vector<8x128xf32>
    %cst_108 = arith.constant 0.000000e+00 : f32
    %302 = vector.broadcast %cst_108 : f32 to vector<8x128xf32>
    %303 = arith.select %39, %302, %301 : vector<8x128xi1>, vector<8x128xf32>
    %304 = tpu.concatenate %300, %294, %303 in 0 : vector<8x128xf32>, vector<8x128xf32>, vector<8x128xf32> -> vector<24x128xf32>
    %cst_109 = arith.constant dense<0.000000e+00> : vector<32x128xf32>
    %305 = tpu.matmul %34, %304, %cst_109 {dimension_numbers = #tpu.dot_dimension_numbers<[1], [0], [0], [1], [0, 0, 1, 1], [], []>} : vector<32x24xf32>, vector<24x128xf32>, vector<32x128xf32> -> vector<32x128xf32>
    %c0_110 = arith.constant 0 : index
    %c1024 = arith.constant 1024 : index
    %306 = vector.load %arg7[%c0_110, %c1024] : memref<32x2048xf32, #tpu.memory_space<vmem>>, vector<32x128xf32>
    %307 = arith.addf %305, %306 : vector<32x128xf32>
    %308 = arith.negf %307 : vector<32x128xf32>
    %309 = math.exp %308 : vector<32x128xf32>
    %cst_111 = arith.constant 1.000000e+00 : f32
    %310 = vector.broadcast %cst_111 : f32 to vector<32x128xf32>
    %311 = arith.addf %310, %309 : vector<32x128xf32>
    %312 = arith.divf %310, %311 : vector<32x128xf32>
    %313 = vector.shape_cast %312 : vector<32x128xf32> to vector<4x8x128xf32>
    %314 = vector.extract_strided_slice %313 {offsets = [0, 0, 0], sizes = [1, 8, 128], strides = [1, 1, 1]} : vector<4x8x128xf32> to vector<1x8x128xf32>
    %315 = vector.shape_cast %314 : vector<1x8x128xf32> to vector<8x128xf32>
    %316 = vector.extract_strided_slice %313 {offsets = [1, 0, 0], sizes = [1, 8, 128], strides = [1, 1, 1]} : vector<4x8x128xf32> to vector<1x8x128xf32>
    %317 = vector.shape_cast %316 : vector<1x8x128xf32> to vector<8x128xf32>
    %318 = vector.extract_strided_slice %313 {offsets = [2, 0, 0], sizes = [1, 8, 128], strides = [1, 1, 1]} : vector<4x8x128xf32> to vector<1x8x128xf32>
    %319 = vector.shape_cast %318 : vector<1x8x128xf32> to vector<8x128xf32>
    %320 = vector.extract_strided_slice %313 {offsets = [3, 0, 0], sizes = [1, 8, 128], strides = [1, 1, 1]} : vector<4x8x128xf32> to vector<1x8x128xf32>
    %321 = vector.shape_cast %320 : vector<1x8x128xf32> to vector<8x128xf32>
    %322 = arith.mulf %319, %292 : vector<8x128xf32>
    %323 = arith.mulf %315, %317 : vector<8x128xf32>
    %324 = arith.addf %322, %323 : vector<8x128xf32>
    %325 = math.tanh %324 : vector<8x128xf32>
    %326 = arith.mulf %321, %325 : vector<8x128xf32>
    %c0_112 = arith.constant 0 : index
    %c8 = arith.constant 8 : index
    %c0_113 = arith.constant 0 : index
    %c0_114 = arith.constant 0 : index
    %327 = vector.load %arg6[%c0_112, %c8, %c0_113, %c0_114] : memref<1x16x8x128xf32, #tpu.memory_space<vmem>>, vector<1x1x8x128xf32>
    %328 = vector.shape_cast %327 : vector<1x1x8x128xf32> to vector<8x128xf32>
    %329 = vector.shape_cast %326 : vector<8x128xf32> to vector<1x1x8x128xf32>
    tpu.vector_store %arg6[%c0_112, %c8, %c0_113, %c0_114], %329 {strides = array<i32>} : memref<1x16x8x128xf32, #tpu.memory_space<vmem>>, vector<1x1x8x128xf32>,
    %c1_i32_115 = arith.constant 1 : i32
    %330 = tpu.dynamic_rotate %326 by %c1_i32_115 dim 1 : vector<8x128xf32>, i32 -> vector<8x128xf32>
    %cst_116 = arith.constant 0.000000e+00 : f32
    %331 = vector.broadcast %cst_116 : f32 to vector<8x128xf32>
    %332 = arith.select %37, %331, %330 : vector<8x128xi1>, vector<8x128xf32>
    %c127_i32_117 = arith.constant 127 : i32
    %333 = tpu.dynamic_rotate %326 by %c127_i32_117 dim 1 : vector<8x128xf32>, i32 -> vector<8x128xf32>
    %cst_118 = arith.constant 0.000000e+00 : f32
    %334 = vector.broadcast %cst_118 : f32 to vector<8x128xf32>
    %335 = arith.select %39, %334, %333 : vector<8x128xi1>, vector<8x128xf32>
    %336 = tpu.concatenate %332, %326, %335 in 0 : vector<8x128xf32>, vector<8x128xf32>, vector<8x128xf32> -> vector<24x128xf32>
    %cst_119 = arith.constant dense<0.000000e+00> : vector<32x128xf32>
    %337 = tpu.matmul %34, %336, %cst_119 {dimension_numbers = #tpu.dot_dimension_numbers<[1], [0], [0], [1], [0, 0, 1, 1], [], []>} : vector<32x24xf32>, vector<24x128xf32>, vector<32x128xf32> -> vector<32x128xf32>
    %c0_120 = arith.constant 0 : index
    %c1152 = arith.constant 1152 : index
    %338 = vector.load %arg7[%c0_120, %c1152] : memref<32x2048xf32, #tpu.memory_space<vmem>>, vector<32x128xf32>
    %339 = arith.addf %337, %338 : vector<32x128xf32>
    %340 = arith.negf %339 : vector<32x128xf32>
    %341 = math.exp %340 : vector<32x128xf32>
    %cst_121 = arith.constant 1.000000e+00 : f32
    %342 = vector.broadcast %cst_121 : f32 to vector<32x128xf32>
    %343 = arith.addf %342, %341 : vector<32x128xf32>
    %344 = arith.divf %342, %343 : vector<32x128xf32>
    %345 = vector.shape_cast %344 : vector<32x128xf32> to vector<4x8x128xf32>
    %346 = vector.extract_strided_slice %345 {offsets = [0, 0, 0], sizes = [1, 8, 128], strides = [1, 1, 1]} : vector<4x8x128xf32> to vector<1x8x128xf32>
    %347 = vector.shape_cast %346 : vector<1x8x128xf32> to vector<8x128xf32>
    %348 = vector.extract_strided_slice %345 {offsets = [1, 0, 0], sizes = [1, 8, 128], strides = [1, 1, 1]} : vector<4x8x128xf32> to vector<1x8x128xf32>
    %349 = vector.shape_cast %348 : vector<1x8x128xf32> to vector<8x128xf32>
    %350 = vector.extract_strided_slice %345 {offsets = [2, 0, 0], sizes = [1, 8, 128], strides = [1, 1, 1]} : vector<4x8x128xf32> to vector<1x8x128xf32>
    %351 = vector.shape_cast %350 : vector<1x8x128xf32> to vector<8x128xf32>
    %352 = vector.extract_strided_slice %345 {offsets = [3, 0, 0], sizes = [1, 8, 128], strides = [1, 1, 1]} : vector<4x8x128xf32> to vector<1x8x128xf32>
    %353 = vector.shape_cast %352 : vector<1x8x128xf32> to vector<8x128xf32>
    %354 = arith.mulf %351, %324 : vector<8x128xf32>
    %355 = arith.mulf %347, %349 : vector<8x128xf32>
    %356 = arith.addf %354, %355 : vector<8x128xf32>
    %357 = math.tanh %356 : vector<8x128xf32>
    %358 = arith.mulf %353, %357 : vector<8x128xf32>
    %c0_122 = arith.constant 0 : index
    %c9 = arith.constant 9 : index
    %c0_123 = arith.constant 0 : index
    %c0_124 = arith.constant 0 : index
    %359 = vector.load %arg6[%c0_122, %c9, %c0_123, %c0_124] : memref<1x16x8x128xf32, #tpu.memory_space<vmem>>, vector<1x1x8x128xf32>
    %360 = vector.shape_cast %359 : vector<1x1x8x128xf32> to vector<8x128xf32>
    %361 = vector.shape_cast %358 : vector<8x128xf32> to vector<1x1x8x128xf32>
    tpu.vector_store %arg6[%c0_122, %c9, %c0_123, %c0_124], %361 {strides = array<i32>} : memref<1x16x8x128xf32, #tpu.memory_space<vmem>>, vector<1x1x8x128xf32>,
    %c1_i32_125 = arith.constant 1 : i32
    %362 = tpu.dynamic_rotate %358 by %c1_i32_125 dim 1 : vector<8x128xf32>, i32 -> vector<8x128xf32>
    %cst_126 = arith.constant 0.000000e+00 : f32
    %363 = vector.broadcast %cst_126 : f32 to vector<8x128xf32>
    %364 = arith.select %37, %363, %362 : vector<8x128xi1>, vector<8x128xf32>
    %c127_i32_127 = arith.constant 127 : i32
    %365 = tpu.dynamic_rotate %358 by %c127_i32_127 dim 1 : vector<8x128xf32>, i32 -> vector<8x128xf32>
    %cst_128 = arith.constant 0.000000e+00 : f32
    %366 = vector.broadcast %cst_128 : f32 to vector<8x128xf32>
    %367 = arith.select %39, %366, %365 : vector<8x128xi1>, vector<8x128xf32>
    %368 = tpu.concatenate %364, %358, %367 in 0 : vector<8x128xf32>, vector<8x128xf32>, vector<8x128xf32> -> vector<24x128xf32>
    %cst_129 = arith.constant dense<0.000000e+00> : vector<32x128xf32>
    %369 = tpu.matmul %34, %368, %cst_129 {dimension_numbers = #tpu.dot_dimension_numbers<[1], [0], [0], [1], [0, 0, 1, 1], [], []>} : vector<32x24xf32>, vector<24x128xf32>, vector<32x128xf32> -> vector<32x128xf32>
    %c0_130 = arith.constant 0 : index
    %c1280 = arith.constant 1280 : index
    %370 = vector.load %arg7[%c0_130, %c1280] : memref<32x2048xf32, #tpu.memory_space<vmem>>, vector<32x128xf32>
    %371 = arith.addf %369, %370 : vector<32x128xf32>
    %372 = arith.negf %371 : vector<32x128xf32>
    %373 = math.exp %372 : vector<32x128xf32>
    %cst_131 = arith.constant 1.000000e+00 : f32
    %374 = vector.broadcast %cst_131 : f32 to vector<32x128xf32>
    %375 = arith.addf %374, %373 : vector<32x128xf32>
    %376 = arith.divf %374, %375 : vector<32x128xf32>
    %377 = vector.shape_cast %376 : vector<32x128xf32> to vector<4x8x128xf32>
    %378 = vector.extract_strided_slice %377 {offsets = [0, 0, 0], sizes = [1, 8, 128], strides = [1, 1, 1]} : vector<4x8x128xf32> to vector<1x8x128xf32>
    %379 = vector.shape_cast %378 : vector<1x8x128xf32> to vector<8x128xf32>
    %380 = vector.extract_strided_slice %377 {offsets = [1, 0, 0], sizes = [1, 8, 128], strides = [1, 1, 1]} : vector<4x8x128xf32> to vector<1x8x128xf32>
    %381 = vector.shape_cast %380 : vector<1x8x128xf32> to vector<8x128xf32>
    %382 = vector.extract_strided_slice %377 {offsets = [2, 0, 0], sizes = [1, 8, 128], strides = [1, 1, 1]} : vector<4x8x128xf32> to vector<1x8x128xf32>
    %383 = vector.shape_cast %382 : vector<1x8x128xf32> to vector<8x128xf32>
    %384 = vector.extract_strided_slice %377 {offsets = [3, 0, 0], sizes = [1, 8, 128], strides = [1, 1, 1]} : vector<4x8x128xf32> to vector<1x8x128xf32>
    %385 = vector.shape_cast %384 : vector<1x8x128xf32> to vector<8x128xf32>
    %386 = arith.mulf %383, %356 : vector<8x128xf32>
    %387 = arith.mulf %379, %381 : vector<8x128xf32>
    %388 = arith.addf %386, %387 : vector<8x128xf32>
    %389 = math.tanh %388 : vector<8x128xf32>
    %390 = arith.mulf %385, %389 : vector<8x128xf32>
    %c0_132 = arith.constant 0 : index
    %c10 = arith.constant 10 : index
    %c0_133 = arith.constant 0 : index
    %c0_134 = arith.constant 0 : index
    %391 = vector.load %arg6[%c0_132, %c10, %c0_133, %c0_134] : memref<1x16x8x128xf32, #tpu.memory_space<vmem>>, vector<1x1x8x128xf32>
    %392 = vector.shape_cast %391 : vector<1x1x8x128xf32> to vector<8x128xf32>
    %393 = vector.shape_cast %390 : vector<8x128xf32> to vector<1x1x8x128xf32>
    tpu.vector_store %arg6[%c0_132, %c10, %c0_133, %c0_134], %393 {strides = array<i32>} : memref<1x16x8x128xf32, #tpu.memory_space<vmem>>, vector<1x1x8x128xf32>,
    %c1_i32_135 = arith.constant 1 : i32
    %394 = tpu.dynamic_rotate %390 by %c1_i32_135 dim 1 : vector<8x128xf32>, i32 -> vector<8x128xf32>
    %cst_136 = arith.constant 0.000000e+00 : f32
    %395 = vector.broadcast %cst_136 : f32 to vector<8x128xf32>
    %396 = arith.select %37, %395, %394 : vector<8x128xi1>, vector<8x128xf32>
    %c127_i32_137 = arith.constant 127 : i32
    %397 = tpu.dynamic_rotate %390 by %c127_i32_137 dim 1 : vector<8x128xf32>, i32 -> vector<8x128xf32>
    %cst_138 = arith.constant 0.000000e+00 : f32
    %398 = vector.broadcast %cst_138 : f32 to vector<8x128xf32>
    %399 = arith.select %39, %398, %397 : vector<8x128xi1>, vector<8x128xf32>
    %400 = tpu.concatenate %396, %390, %399 in 0 : vector<8x128xf32>, vector<8x128xf32>, vector<8x128xf32> -> vector<24x128xf32>
    %cst_139 = arith.constant dense<0.000000e+00> : vector<32x128xf32>
    %401 = tpu.matmul %34, %400, %cst_139 {dimension_numbers = #tpu.dot_dimension_numbers<[1], [0], [0], [1], [0, 0, 1, 1], [], []>} : vector<32x24xf32>, vector<24x128xf32>, vector<32x128xf32> -> vector<32x128xf32>
    %c0_140 = arith.constant 0 : index
    %c1408 = arith.constant 1408 : index
    %402 = vector.load %arg7[%c0_140, %c1408] : memref<32x2048xf32, #tpu.memory_space<vmem>>, vector<32x128xf32>
    %403 = arith.addf %401, %402 : vector<32x128xf32>
    %404 = arith.negf %403 : vector<32x128xf32>
    %405 = math.exp %404 : vector<32x128xf32>
    %cst_141 = arith.constant 1.000000e+00 : f32
    %406 = vector.broadcast %cst_141 : f32 to vector<32x128xf32>
    %407 = arith.addf %406, %405 : vector<32x128xf32>
    %408 = arith.divf %406, %407 : vector<32x128xf32>
    %409 = vector.shape_cast %408 : vector<32x128xf32> to vector<4x8x128xf32>
    %410 = vector.extract_strided_slice %409 {offsets = [0, 0, 0], sizes = [1, 8, 128], strides = [1, 1, 1]} : vector<4x8x128xf32> to vector<1x8x128xf32>
    %411 = vector.shape_cast %410 : vector<1x8x128xf32> to vector<8x128xf32>
    %412 = vector.extract_strided_slice %409 {offsets = [1, 0, 0], sizes = [1, 8, 128], strides = [1, 1, 1]} : vector<4x8x128xf32> to vector<1x8x128xf32>
    %413 = vector.shape_cast %412 : vector<1x8x128xf32> to vector<8x128xf32>
    %414 = vector.extract_strided_slice %409 {offsets = [2, 0, 0], sizes = [1, 8, 128], strides = [1, 1, 1]} : vector<4x8x128xf32> to vector<1x8x128xf32>
    %415 = vector.shape_cast %414 : vector<1x8x128xf32> to vector<8x128xf32>
    %416 = vector.extract_strided_slice %409 {offsets = [3, 0, 0], sizes = [1, 8, 128], strides = [1, 1, 1]} : vector<4x8x128xf32> to vector<1x8x128xf32>
    %417 = vector.shape_cast %416 : vector<1x8x128xf32> to vector<8x128xf32>
    %418 = arith.mulf %415, %388 : vector<8x128xf32>
    %419 = arith.mulf %411, %413 : vector<8x128xf32>
    %420 = arith.addf %418, %419 : vector<8x128xf32>
    %421 = math.tanh %420 : vector<8x128xf32>
    %422 = arith.mulf %417, %421 : vector<8x128xf32>
    %c0_142 = arith.constant 0 : index
    %c11 = arith.constant 11 : index
    %c0_143 = arith.constant 0 : index
    %c0_144 = arith.constant 0 : index
    %423 = vector.load %arg6[%c0_142, %c11, %c0_143, %c0_144] : memref<1x16x8x128xf32, #tpu.memory_space<vmem>>, vector<1x1x8x128xf32>
    %424 = vector.shape_cast %423 : vector<1x1x8x128xf32> to vector<8x128xf32>
    %425 = vector.shape_cast %422 : vector<8x128xf32> to vector<1x1x8x128xf32>
    tpu.vector_store %arg6[%c0_142, %c11, %c0_143, %c0_144], %425 {strides = array<i32>} : memref<1x16x8x128xf32, #tpu.memory_space<vmem>>, vector<1x1x8x128xf32>,
    %c1_i32_145 = arith.constant 1 : i32
    %426 = tpu.dynamic_rotate %422 by %c1_i32_145 dim 1 : vector<8x128xf32>, i32 -> vector<8x128xf32>
    %cst_146 = arith.constant 0.000000e+00 : f32
    %427 = vector.broadcast %cst_146 : f32 to vector<8x128xf32>
    %428 = arith.select %37, %427, %426 : vector<8x128xi1>, vector<8x128xf32>
    %c127_i32_147 = arith.constant 127 : i32
    %429 = tpu.dynamic_rotate %422 by %c127_i32_147 dim 1 : vector<8x128xf32>, i32 -> vector<8x128xf32>
    %cst_148 = arith.constant 0.000000e+00 : f32
    %430 = vector.broadcast %cst_148 : f32 to vector<8x128xf32>
    %431 = arith.select %39, %430, %429 : vector<8x128xi1>, vector<8x128xf32>
    %432 = tpu.concatenate %428, %422, %431 in 0 : vector<8x128xf32>, vector<8x128xf32>, vector<8x128xf32> -> vector<24x128xf32>
    %cst_149 = arith.constant dense<0.000000e+00> : vector<32x128xf32>
    %433 = tpu.matmul %34, %432, %cst_149 {dimension_numbers = #tpu.dot_dimension_numbers<[1], [0], [0], [1], [0, 0, 1, 1], [], []>} : vector<32x24xf32>, vector<24x128xf32>, vector<32x128xf32> -> vector<32x128xf32>
    %c0_150 = arith.constant 0 : index
    %c1536 = arith.constant 1536 : index
    %434 = vector.load %arg7[%c0_150, %c1536] : memref<32x2048xf32, #tpu.memory_space<vmem>>, vector<32x128xf32>
    %435 = arith.addf %433, %434 : vector<32x128xf32>
    %436 = arith.negf %435 : vector<32x128xf32>
    %437 = math.exp %436 : vector<32x128xf32>
    %cst_151 = arith.constant 1.000000e+00 : f32
    %438 = vector.broadcast %cst_151 : f32 to vector<32x128xf32>
    %439 = arith.addf %438, %437 : vector<32x128xf32>
    %440 = arith.divf %438, %439 : vector<32x128xf32>
    %441 = vector.shape_cast %440 : vector<32x128xf32> to vector<4x8x128xf32>
    %442 = vector.extract_strided_slice %441 {offsets = [0, 0, 0], sizes = [1, 8, 128], strides = [1, 1, 1]} : vector<4x8x128xf32> to vector<1x8x128xf32>
    %443 = vector.shape_cast %442 : vector<1x8x128xf32> to vector<8x128xf32>
    %444 = vector.extract_strided_slice %441 {offsets = [1, 0, 0], sizes = [1, 8, 128], strides = [1, 1, 1]} : vector<4x8x128xf32> to vector<1x8x128xf32>
    %445 = vector.shape_cast %444 : vector<1x8x128xf32> to vector<8x128xf32>
    %446 = vector.extract_strided_slice %441 {offsets = [2, 0, 0], sizes = [1, 8, 128], strides = [1, 1, 1]} : vector<4x8x128xf32> to vector<1x8x128xf32>
    %447 = vector.shape_cast %446 : vector<1x8x128xf32> to vector<8x128xf32>
    %448 = vector.extract_strided_slice %441 {offsets = [3, 0, 0], sizes = [1, 8, 128], strides = [1, 1, 1]} : vector<4x8x128xf32> to vector<1x8x128xf32>
    %449 = vector.shape_cast %448 : vector<1x8x128xf32> to vector<8x128xf32>
    %450 = arith.mulf %447, %420 : vector<8x128xf32>
    %451 = arith.mulf %443, %445 : vector<8x128xf32>
    %452 = arith.addf %450, %451 : vector<8x128xf32>
    %453 = math.tanh %452 : vector<8x128xf32>
    %454 = arith.mulf %449, %453 : vector<8x128xf32>
    %c0_152 = arith.constant 0 : index
    %c12 = arith.constant 12 : index
    %c0_153 = arith.constant 0 : index
    %c0_154 = arith.constant 0 : index
    %455 = vector.load %arg6[%c0_152, %c12, %c0_153, %c0_154] : memref<1x16x8x128xf32, #tpu.memory_space<vmem>>, vector<1x1x8x128xf32>
    %456 = vector.shape_cast %455 : vector<1x1x8x128xf32> to vector<8x128xf32>
    %457 = vector.shape_cast %454 : vector<8x128xf32> to vector<1x1x8x128xf32>
    tpu.vector_store %arg6[%c0_152, %c12, %c0_153, %c0_154], %457 {strides = array<i32>} : memref<1x16x8x128xf32, #tpu.memory_space<vmem>>, vector<1x1x8x128xf32>,
    %c1_i32_155 = arith.constant 1 : i32
    %458 = tpu.dynamic_rotate %454 by %c1_i32_155 dim 1 : vector<8x128xf32>, i32 -> vector<8x128xf32>
    %cst_156 = arith.constant 0.000000e+00 : f32
    %459 = vector.broadcast %cst_156 : f32 to vector<8x128xf32>
    %460 = arith.select %37, %459, %458 : vector<8x128xi1>, vector<8x128xf32>
    %c127_i32_157 = arith.constant 127 : i32
    %461 = tpu.dynamic_rotate %454 by %c127_i32_157 dim 1 : vector<8x128xf32>, i32 -> vector<8x128xf32>
    %cst_158 = arith.constant 0.000000e+00 : f32
    %462 = vector.broadcast %cst_158 : f32 to vector<8x128xf32>
    %463 = arith.select %39, %462, %461 : vector<8x128xi1>, vector<8x128xf32>
    %464 = tpu.concatenate %460, %454, %463 in 0 : vector<8x128xf32>, vector<8x128xf32>, vector<8x128xf32> -> vector<24x128xf32>
    %cst_159 = arith.constant dense<0.000000e+00> : vector<32x128xf32>
    %465 = tpu.matmul %34, %464, %cst_159 {dimension_numbers = #tpu.dot_dimension_numbers<[1], [0], [0], [1], [0, 0, 1, 1], [], []>} : vector<32x24xf32>, vector<24x128xf32>, vector<32x128xf32> -> vector<32x128xf32>
    %c0_160 = arith.constant 0 : index
    %c1664 = arith.constant 1664 : index
    %466 = vector.load %arg7[%c0_160, %c1664] : memref<32x2048xf32, #tpu.memory_space<vmem>>, vector<32x128xf32>
    %467 = arith.addf %465, %466 : vector<32x128xf32>
    %468 = arith.negf %467 : vector<32x128xf32>
    %469 = math.exp %468 : vector<32x128xf32>
    %cst_161 = arith.constant 1.000000e+00 : f32
    %470 = vector.broadcast %cst_161 : f32 to vector<32x128xf32>
    %471 = arith.addf %470, %469 : vector<32x128xf32>
    %472 = arith.divf %470, %471 : vector<32x128xf32>
    %473 = vector.shape_cast %472 : vector<32x128xf32> to vector<4x8x128xf32>
    %474 = vector.extract_strided_slice %473 {offsets = [0, 0, 0], sizes = [1, 8, 128], strides = [1, 1, 1]} : vector<4x8x128xf32> to vector<1x8x128xf32>
    %475 = vector.shape_cast %474 : vector<1x8x128xf32> to vector<8x128xf32>
    %476 = vector.extract_strided_slice %473 {offsets = [1, 0, 0], sizes = [1, 8, 128], strides = [1, 1, 1]} : vector<4x8x128xf32> to vector<1x8x128xf32>
    %477 = vector.shape_cast %476 : vector<1x8x128xf32> to vector<8x128xf32>
    %478 = vector.extract_strided_slice %473 {offsets = [2, 0, 0], sizes = [1, 8, 128], strides = [1, 1, 1]} : vector<4x8x128xf32> to vector<1x8x128xf32>
    %479 = vector.shape_cast %478 : vector<1x8x128xf32> to vector<8x128xf32>
    %480 = vector.extract_strided_slice %473 {offsets = [3, 0, 0], sizes = [1, 8, 128], strides = [1, 1, 1]} : vector<4x8x128xf32> to vector<1x8x128xf32>
    %481 = vector.shape_cast %480 : vector<1x8x128xf32> to vector<8x128xf32>
    %482 = arith.mulf %479, %452 : vector<8x128xf32>
    %483 = arith.mulf %475, %477 : vector<8x128xf32>
    %484 = arith.addf %482, %483 : vector<8x128xf32>
    %485 = math.tanh %484 : vector<8x128xf32>
    %486 = arith.mulf %481, %485 : vector<8x128xf32>
    %c0_162 = arith.constant 0 : index
    %c13 = arith.constant 13 : index
    %c0_163 = arith.constant 0 : index
    %c0_164 = arith.constant 0 : index
    %487 = vector.load %arg6[%c0_162, %c13, %c0_163, %c0_164] : memref<1x16x8x128xf32, #tpu.memory_space<vmem>>, vector<1x1x8x128xf32>
    %488 = vector.shape_cast %487 : vector<1x1x8x128xf32> to vector<8x128xf32>
    %489 = vector.shape_cast %486 : vector<8x128xf32> to vector<1x1x8x128xf32>
    tpu.vector_store %arg6[%c0_162, %c13, %c0_163, %c0_164], %489 {strides = array<i32>} : memref<1x16x8x128xf32, #tpu.memory_space<vmem>>, vector<1x1x8x128xf32>,
    %c1_i32_165 = arith.constant 1 : i32
    %490 = tpu.dynamic_rotate %486 by %c1_i32_165 dim 1 : vector<8x128xf32>, i32 -> vector<8x128xf32>
    %cst_166 = arith.constant 0.000000e+00 : f32
    %491 = vector.broadcast %cst_166 : f32 to vector<8x128xf32>
    %492 = arith.select %37, %491, %490 : vector<8x128xi1>, vector<8x128xf32>
    %c127_i32_167 = arith.constant 127 : i32
    %493 = tpu.dynamic_rotate %486 by %c127_i32_167 dim 1 : vector<8x128xf32>, i32 -> vector<8x128xf32>
    %cst_168 = arith.constant 0.000000e+00 : f32
    %494 = vector.broadcast %cst_168 : f32 to vector<8x128xf32>
    %495 = arith.select %39, %494, %493 : vector<8x128xi1>, vector<8x128xf32>
    %496 = tpu.concatenate %492, %486, %495 in 0 : vector<8x128xf32>, vector<8x128xf32>, vector<8x128xf32> -> vector<24x128xf32>
    %cst_169 = arith.constant dense<0.000000e+00> : vector<32x128xf32>
    %497 = tpu.matmul %34, %496, %cst_169 {dimension_numbers = #tpu.dot_dimension_numbers<[1], [0], [0], [1], [0, 0, 1, 1], [], []>} : vector<32x24xf32>, vector<24x128xf32>, vector<32x128xf32> -> vector<32x128xf32>
    %c0_170 = arith.constant 0 : index
    %c1792 = arith.constant 1792 : index
    %498 = vector.load %arg7[%c0_170, %c1792] : memref<32x2048xf32, #tpu.memory_space<vmem>>, vector<32x128xf32>
    %499 = arith.addf %497, %498 : vector<32x128xf32>
    %500 = arith.negf %499 : vector<32x128xf32>
    %501 = math.exp %500 : vector<32x128xf32>
    %cst_171 = arith.constant 1.000000e+00 : f32
    %502 = vector.broadcast %cst_171 : f32 to vector<32x128xf32>
    %503 = arith.addf %502, %501 : vector<32x128xf32>
    %504 = arith.divf %502, %503 : vector<32x128xf32>
    %505 = vector.shape_cast %504 : vector<32x128xf32> to vector<4x8x128xf32>
    %506 = vector.extract_strided_slice %505 {offsets = [0, 0, 0], sizes = [1, 8, 128], strides = [1, 1, 1]} : vector<4x8x128xf32> to vector<1x8x128xf32>
    %507 = vector.shape_cast %506 : vector<1x8x128xf32> to vector<8x128xf32>
    %508 = vector.extract_strided_slice %505 {offsets = [1, 0, 0], sizes = [1, 8, 128], strides = [1, 1, 1]} : vector<4x8x128xf32> to vector<1x8x128xf32>
    %509 = vector.shape_cast %508 : vector<1x8x128xf32> to vector<8x128xf32>
    %510 = vector.extract_strided_slice %505 {offsets = [2, 0, 0], sizes = [1, 8, 128], strides = [1, 1, 1]} : vector<4x8x128xf32> to vector<1x8x128xf32>
    %511 = vector.shape_cast %510 : vector<1x8x128xf32> to vector<8x128xf32>
    %512 = vector.extract_strided_slice %505 {offsets = [3, 0, 0], sizes = [1, 8, 128], strides = [1, 1, 1]} : vector<4x8x128xf32> to vector<1x8x128xf32>
    %513 = vector.shape_cast %512 : vector<1x8x128xf32> to vector<8x128xf32>
    %514 = arith.mulf %511, %484 : vector<8x128xf32>
    %515 = arith.mulf %507, %509 : vector<8x128xf32>
    %516 = arith.addf %514, %515 : vector<8x128xf32>
    %517 = math.tanh %516 : vector<8x128xf32>
    %518 = arith.mulf %513, %517 : vector<8x128xf32>
    %c0_172 = arith.constant 0 : index
    %c14 = arith.constant 14 : index
    %c0_173 = arith.constant 0 : index
    %c0_174 = arith.constant 0 : index
    %519 = vector.load %arg6[%c0_172, %c14, %c0_173, %c0_174] : memref<1x16x8x128xf32, #tpu.memory_space<vmem>>, vector<1x1x8x128xf32>
    %520 = vector.shape_cast %519 : vector<1x1x8x128xf32> to vector<8x128xf32>
    %521 = vector.shape_cast %518 : vector<8x128xf32> to vector<1x1x8x128xf32>
    tpu.vector_store %arg6[%c0_172, %c14, %c0_173, %c0_174], %521 {strides = array<i32>} : memref<1x16x8x128xf32, #tpu.memory_space<vmem>>, vector<1x1x8x128xf32>,
    %c1_i32_175 = arith.constant 1 : i32
    %522 = tpu.dynamic_rotate %518 by %c1_i32_175 dim 1 : vector<8x128xf32>, i32 -> vector<8x128xf32>
    %cst_176 = arith.constant 0.000000e+00 : f32
    %523 = vector.broadcast %cst_176 : f32 to vector<8x128xf32>
    %524 = arith.select %37, %523, %522 : vector<8x128xi1>, vector<8x128xf32>
    %c127_i32_177 = arith.constant 127 : i32
    %525 = tpu.dynamic_rotate %518 by %c127_i32_177 dim 1 : vector<8x128xf32>, i32 -> vector<8x128xf32>
    %cst_178 = arith.constant 0.000000e+00 : f32
    %526 = vector.broadcast %cst_178 : f32 to vector<8x128xf32>
    %527 = arith.select %39, %526, %525 : vector<8x128xi1>, vector<8x128xf32>
    %528 = tpu.concatenate %524, %518, %527 in 0 : vector<8x128xf32>, vector<8x128xf32>, vector<8x128xf32> -> vector<24x128xf32>
    %cst_179 = arith.constant dense<0.000000e+00> : vector<32x128xf32>
    %529 = tpu.matmul %34, %528, %cst_179 {dimension_numbers = #tpu.dot_dimension_numbers<[1], [0], [0], [1], [0, 0, 1, 1], [], []>} : vector<32x24xf32>, vector<24x128xf32>, vector<32x128xf32> -> vector<32x128xf32>
    %c0_180 = arith.constant 0 : index
    %c1920 = arith.constant 1920 : index
    %530 = vector.load %arg7[%c0_180, %c1920] : memref<32x2048xf32, #tpu.memory_space<vmem>>, vector<32x128xf32>
    %531 = arith.addf %529, %530 : vector<32x128xf32>
    %532 = arith.negf %531 : vector<32x128xf32>
    %533 = math.exp %532 : vector<32x128xf32>
    %cst_181 = arith.constant 1.000000e+00 : f32
    %534 = vector.broadcast %cst_181 : f32 to vector<32x128xf32>
    %535 = arith.addf %534, %533 : vector<32x128xf32>
    %536 = arith.divf %534, %535 : vector<32x128xf32>
    %537 = vector.shape_cast %536 : vector<32x128xf32> to vector<4x8x128xf32>
    %538 = vector.extract_strided_slice %537 {offsets = [0, 0, 0], sizes = [1, 8, 128], strides = [1, 1, 1]} : vector<4x8x128xf32> to vector<1x8x128xf32>
    %539 = vector.shape_cast %538 : vector<1x8x128xf32> to vector<8x128xf32>
    %540 = vector.extract_strided_slice %537 {offsets = [1, 0, 0], sizes = [1, 8, 128], strides = [1, 1, 1]} : vector<4x8x128xf32> to vector<1x8x128xf32>
    %541 = vector.shape_cast %540 : vector<1x8x128xf32> to vector<8x128xf32>
    %542 = vector.extract_strided_slice %537 {offsets = [2, 0, 0], sizes = [1, 8, 128], strides = [1, 1, 1]} : vector<4x8x128xf32> to vector<1x8x128xf32>
    %543 = vector.shape_cast %542 : vector<1x8x128xf32> to vector<8x128xf32>
    %544 = vector.extract_strided_slice %537 {offsets = [3, 0, 0], sizes = [1, 8, 128], strides = [1, 1, 1]} : vector<4x8x128xf32> to vector<1x8x128xf32>
    %545 = vector.shape_cast %544 : vector<1x8x128xf32> to vector<8x128xf32>
    %546 = arith.mulf %543, %516 : vector<8x128xf32>
    %547 = arith.mulf %539, %541 : vector<8x128xf32>
    %548 = arith.addf %546, %547 : vector<8x128xf32>
    %549 = math.tanh %548 : vector<8x128xf32>
    %550 = arith.mulf %545, %549 : vector<8x128xf32>
    %c0_182 = arith.constant 0 : index
    %c15 = arith.constant 15 : index
    %c0_183 = arith.constant 0 : index
    %c0_184 = arith.constant 0 : index
    %551 = vector.load %arg6[%c0_182, %c15, %c0_183, %c0_184] : memref<1x16x8x128xf32, #tpu.memory_space<vmem>>, vector<1x1x8x128xf32>
    %552 = vector.shape_cast %551 : vector<1x1x8x128xf32> to vector<8x128xf32>
    %553 = vector.shape_cast %550 : vector<8x128xf32> to vector<1x1x8x128xf32>
    tpu.vector_store %arg6[%c0_182, %c15, %c0_183, %c0_184], %553 {strides = array<i32>} : memref<1x16x8x128xf32, #tpu.memory_space<vmem>>, vector<1x1x8x128xf32>,
    %c0_185 = arith.constant 0 : index
    %c0_186 = arith.constant 0 : index
    %554 = vector.load %arg8[%c0_185, %c0_186] : memref<8x128xf32, #tpu.memory_space<vmem>>, vector<8x128xf32>
    tpu.vector_store %arg8[%c0_185, %c0_186], %548 {strides = array<i32>} : memref<8x128xf32, #tpu.memory_space<vmem>>, vector<8x128xf32>,
    %c0_187 = arith.constant 0 : index
    %c0_188 = arith.constant 0 : index
    %555 = vector.load %arg9[%c0_187, %c0_188] : memref<8x128xf32, #tpu.memory_space<vmem>>, vector<8x128xf32>
    tpu.vector_store %arg9[%c0_187, %c0_188], %550 {strides = array<i32>} : memref<8x128xf32, #tpu.memory_space<vmem>>, vector<8x128xf32>,
    return
  }
  func.func @transform_0(%arg0: i32, %arg1: i32) -> (i32, i32, i32) {
    %c0_i32 = arith.constant 0 : i32
    %c0_i32_0 = arith.constant 0 : i32
    return %arg0, %c0_i32, %arg1 : i32, i32, i32
  }
  func.func @transform_1(%arg0: i32, %arg1: i32) -> (i32, i32) {
    %c0_i32 = arith.constant 0 : i32
    %c0_i32_0 = arith.constant 0 : i32
    %c0_i32_1 = arith.constant 0 : i32
    return %c0_i32, %c0_i32_0 : i32, i32
  }
  func.func @transform_2(%arg0: i32, %arg1: i32) -> (i32, i32) {
    %c0_i32 = arith.constant 0 : i32
    %c0_i32_0 = arith.constant 0 : i32
    %c0_i32_1 = arith.constant 0 : i32
    return %c0_i32, %c0_i32_0 : i32, i32
  }
  func.func @transform_3(%arg0: i32, %arg1: i32) -> (i32, i32) {
    %c0_i32 = arith.constant 0 : i32
    %c0_i32_0 = arith.constant 0 : i32
    %c0_i32_1 = arith.constant 0 : i32
    return %c0_i32, %c0_i32_0 : i32, i32
  }
  func.func @transform_4(%arg0: i32, %arg1: i32) -> (i32, i32, i32, i32) {
    %c0_i32 = arith.constant 0 : i32
    %c0_i32_0 = arith.constant 0 : i32
    %c0_i32_1 = arith.constant 0 : i32
    return %arg0, %arg1, %c0_i32, %c0_i32_0 : i32, i32, i32, i32
  }
}

</mosaic_0001>

<llo_original>
// kernel: tpu_custom_call.1
$region0: #{tpu_custom_call.1}
  #allocation0 [shape = 'u32[]', space=smem, size = 0x4, offset = 0x4, fixed_abs, tag = 'smem constant byte address 0x4 - core index']
  #allocation1 [shape = 'u32[72,128]{1,0:T(1,128)}', space=vmem, size = 0x9000, scoped, tag = 'internal scratch']
  #allocation2 [shape = 'f32[32,2048]{1,0:T(8,128)}', space=vmem, size = 0x40000, scoped, tag = 'scratch operand']
  #allocation3 [shape = 'f32[8,128]{1,0:T(8,128)}', space=vmem, size = 0x1000, scoped, tag = 'scratch operand']
  #allocation4 [shape = 'f32[8,128]{1,0:T(8,128)}', space=vmem, size = 0x1000, scoped, tag = 'scratch operand']
  %s0 = inlined_call_operand.hbm [shape: f32[2,8,2048], index: 0, kind: input, shape index: {}]
  %s1 = inlined_call_operand.vmem [shape: f32[32,16], index: 1, kind: input, shape index: {}]
  %s2 = inlined_call_operand.vmem [shape: f32[32,24], index: 2, kind: input, shape index: {}]
  %s3 = inlined_call_operand.vmem [shape: f32[32,1], index: 3, kind: input, shape index: {}]
  %s4 = inlined_call_operand.hbm [shape: f32[2,16,8,128], index: 4, kind: output, shape index: {}]
  %s5 = sld [smem:[#allocation0]]
  $region57: #{tpu_custom_call.1} parent=0
    _
  %s7 = ssub.s32 1, %s5
  %s8 = scalar_select 0, %s7, %s5
  $region1: #{tpu_custom_call.1} parent=0
    #allocation5 [shape = 'u8[131072]{0}', space=vmem, size = 0x20000, scoped, tag = 'input window, operand 0']
    #allocation6 [shape = 's32[2]{0}', space=sflag, size = 0x8, scoped, tag = 'scoped memory for tpu_custom_call.1']
    #allocation7 [shape = 's32[2]{0}', space=sflag, size = 0x8, scoped, tag = 'scoped memory for tpu_custom_call.1']
    #allocation8 [shape = 'u8[131072]{0}', space=vmem, size = 0x20000, scoped, tag = 'output window, operand 0']
    %9 = vsyncpa [#allocation6], 0
    %s10 = scalar_lea.sflag [#allocation6], 1
    %11 = vsyncpa %s10, 0
    %12 = vsyncpa [#allocation7], 0
    %s13 = scalar_lea.sflag [#allocation7], 1
    %14 = vsyncpa %s13, 0
    loop: start=0, step=1, limit=4
    $region2: #{tpu_custom_call.1} parent=1 // loop_pre_header
      _
    $region3: #{tpu_custom_call.1} parent=1 // loop_header
      %s16 = sphi 0, %s20
      %p17 = scmp.ge.s32.totalorder %s16, 4
      %s23 = sphi 0, %s35
      %s24 = sphi 0, %s31
      %s25 = sphi 0, %s23
      %s26 = sphi 0, %s24
      %s27 = sphi 0, %s25
      %s28 = sphi 0, %s26
      %s40 = sphi 0, %s42
      %s43 = sphi 0, %s40
      %s44 = sphi 0, %s43
      %s60 = sphi 0, %s44
      %s64 = sphi 0, %s64
      %s66 = sphi 0, %s64
      %s67 = sphi 0, %s66
      %s81 = sphi 0, %s67
      %s85 = sphi 0, %s85
      %s87 = sphi 0, %s85
      %s88 = sphi 0, %s87
      %s102 = sphi 0, %s88
      %s106 = sphi 0, %s106
      %s108 = sphi 0, %s106
      %s109 = sphi 0, %s108
      %s123 = sphi 0, %s109
      %s131 = sphi 0, %s133
      %s134 = sphi 0, %s131
      %s135 = sphi 0, %s134
      %s151 = sphi 0, %s135
    $region4: #{tpu_custom_call.1} parent=1 // loop_header_branch
      %19 = sbr.rel (%p17) target = $region8
    $region5: #{tpu_custom_call.1} parent=1 // loop_body
      %s21 = ssub.s32 %s16, 1
      %s22 = ssub.s32 %s16, 2
      %s29 = sadd.s32 1, %s24
      %p30 = scmp.ge.s32.totalorder %s29, 1
      %s31 = scalar_select %p30, 0, %s29
      %s32 = sadd.s32 1, %s23
      %s33 = scalar_select %p30, %s32, %s23
      %p34 = scmp.ge.s32.totalorder %s33, 2
      %s35 = scalar_select %p34, 0, %s33
      %s36 = ssub.s32 %s23, %s35
      %s37 = ssub.s32 %s24, %s31
      %s38 = sor.u32 %s36, %s37
      %p39 = scmp.eq.s32.totalorder %s38, 0
      %s41 = sadd.s32 %s40, 1
      %s42 = scalar_select %p39, %s40, %s41
      %p45 = pneg %p39
      %p46 = scmp.eq.s32.totalorder %s16, 1
      %p47 = por %p45, %p46
      %p48 = scmp.ne.s32.totalorder %s40, %s43
      %p49 = scmp.eq.s32.totalorder %s16, 0
      %p50 = por %p48, %p49
      %p51 = scmp.ne.s32.totalorder %s40, %s43
      %p52 = scmp.eq.s32.totalorder %s21, 1
      %p53 = por %p51, %p52
      %p54 = scmp.ne.s32.totalorder %s43, %s44
      %p55 = scmp.eq.s32.totalorder %s21, 0
      %p56 = por %p54, %p55
      %p57 = scmp.ne.s32.totalorder %s43, %s44
      %p58 = scmp.eq.s32.totalorder %s22, 1
      %p59 = por %p57, %p58
      %p61 = scmp.ne.s32.totalorder %s44, %s60
      %p62 = scmp.eq.s32.totalorder %s22, 0
      %p63 = por %p61, %p62
      %s65 = sadd.s32 %s64, 1
      %p68 = scmp.eq.s32.totalorder %s16, 1
      %p69 = scmp.ne.s32.totalorder %s64, %s66
      %p70 = scmp.eq.s32.totalorder %s16, 0
      %p71 = por %p69, %p70
      %p72 = scmp.ne.s32.totalorder %s64, %s66
      %p73 = scmp.eq.s32.totalorder %s21, 1
      %p74 = por %p72, %p73
      %p75 = scmp.ne.s32.totalorder %s66, %s67
      %p76 = scmp.eq.s32.totalorder %s21, 0
      %p77 = por %p75, %p76
      %p78 = scmp.ne.s32.totalorder %s66, %s67
      %p79 = scmp.eq.s32.totalorder %s22, 1
      %p80 = por %p78, %p79
      %p82 = scmp.ne.s32.totalorder %s67, %s81
      %p83 = scmp.eq.s32.totalorder %s22, 0
      %p84 = por %p82, %p83
      %s86 = sadd.s32 %s85, 1
      %p89 = scmp.eq.s32.totalorder %s16, 1
      %p90 = scmp.ne.s32.totalorder %s85, %s87
      %p91 = scmp.eq.s32.totalorder %s16, 0
      %p92 = por %p90, %p91
      %p93 = scmp.ne.s32.totalorder %s85, %s87
      %p94 = scmp.eq.s32.totalorder %s21, 1
      %p95 = por %p93, %p94
      %p96 = scmp.ne.s32.totalorder %s87, %s88
      %p97 = scmp.eq.s32.totalorder %s21, 0
      %p98 = por %p96, %p97
      %p99 = scmp.ne.s32.totalorder %s87, %s88
      %p100 = scmp.eq.s32.totalorder %s22, 1
      %p101 = por %p99, %p100
      %p103 = scmp.ne.s32.totalorder %s88, %s102
      %p104 = scmp.eq.s32.totalorder %s22, 0
      %p105 = por %p103, %p104
      %s107 = sadd.s32 %s106, 1
      %p110 = scmp.eq.s32.totalorder %s16, 1
      %p111 = scmp.ne.s32.totalorder %s106, %s108
      %p112 = scmp.eq.s32.totalorder %s16, 0
      %p113 = por %p111, %p112
      %p114 = scmp.ne.s32.totalorder %s106, %s108
      %p115 = scmp.eq.s32.totalorder %s21, 1
      %p116 = por %p114, %p115
      %p117 = scmp.ne.s32.totalorder %s108, %s109
      %p118 = scmp.eq.s32.totalorder %s21, 0
      %p119 = por %p117, %p118
      %p120 = scmp.ne.s32.totalorder %s108, %s109
      %p121 = scmp.eq.s32.totalorder %s22, 1
      %p122 = por %p120, %p121
      %p124 = scmp.ne.s32.totalorder %s109, %s123
      %p125 = scmp.eq.s32.totalorder %s22, 0
      %p126 = por %p124, %p125
      %s127 = ssub.s32 %s23, %s35
      %s128 = ssub.s32 %s24, %s31
      %s129 = sor.u32 %s127, %s128
      %p130 = scmp.eq.s32.totalorder %s129, 0
      %s132 = sadd.s32 %s131, 1
      %s133 = scalar_select %p130, %s131, %s132
      %p136 = pneg %p130
      %p137 = scmp.eq.s32.totalorder %s16, 1
      %p138 = por %p136, %p137
      %p139 = scmp.ne.s32.totalorder %s131, %s134
      %p140 = scmp.eq.s32.totalorder %s16, 0
      %p141 = por %p139, %p140
      %p142 = scmp.ne.s32.totalorder %s131, %s134
      %p143 = scmp.eq.s32.totalorder %s21, 1
      %p144 = por %p142, %p143
      %p145 = scmp.ne.s32.totalorder %s134, %s135
      %p146 = scmp.eq.s32.totalorder %s21, 0
      %p147 = por %p145, %p146
      %p148 = scmp.ne.s32.totalorder %s134, %s135
      %p149 = scmp.eq.s32.totalorder %s22, 1
      %p150 = por %p148, %p149
      %p152 = scmp.ne.s32.totalorder %s135, %s151
      %p153 = scmp.eq.s32.totalorder %s22, 0
      %p154 = por %p152, %p153
      %p155 = scmp.le.s32.totalorder 1, %s16
      %p156 = scmp.lt.s32.totalorder %s16, 3
      %p157 = pnand %p155, %p156
      %p158 = pneg %p157
      // Predicated region
      $region9: #{tpu_custom_call.1} parent=5 // pred_check
        _
      $region10: #{tpu_custom_call.1} parent=5 // pred_check_branch
        %160 = sbr.rel (%p157) target = $region12
      $region11: #{tpu_custom_call.1} parent=5 // pred_region
        %s161 = ssub.s32 %s16, 1
        // Predicated region
        $region13: #{tpu_custom_call.1} parent=11 // pred_check
          %p162 = pneg %p77
        $region14: #{tpu_custom_call.1} parent=11 // pred_check_branch
          %164 = sbr.rel (%p162) target = $region16
        $region15: #{tpu_custom_call.1} parent=11 // pred_region
          _
        $region16: #{tpu_custom_call.1} parent=11 // pred_fallthru
          _
        // Predicated region
        $region17: #{tpu_custom_call.1} parent=11 // pred_check
          %p165 = pneg %p98
        $region18: #{tpu_custom_call.1} parent=11 // pred_check_branch
          %167 = sbr.rel (%p165) target = $region20
        $region19: #{tpu_custom_call.1} parent=11 // pred_region
          _
        $region20: #{tpu_custom_call.1} parent=11 // pred_fallthru
          _
        // Predicated region
        $region21: #{tpu_custom_call.1} parent=11 // pred_check
          %p168 = pneg %p119
        $region22: #{tpu_custom_call.1} parent=11 // pred_check_branch
          %170 = sbr.rel (%p168) target = $region24
        $region23: #{tpu_custom_call.1} parent=11 // pred_region
          _
        $region24: #{tpu_custom_call.1} parent=11 // pred_fallthru
          _
      $region12: #{tpu_custom_call.1} parent=5 // pred_fallthru
        _
      %p171 = scmp.lt.s32.totalorder %s16, 2
      // Predicated region
      $region25: #{tpu_custom_call.1} parent=5 // pred_check
        %p172 = pneg %p171
      $region26: #{tpu_custom_call.1} parent=5 // pred_check_branch
        %174 = sbr.rel (%p172) target = $region28
      $region27: #{tpu_custom_call.1} parent=5 // pred_region
        // Predicated region
        $region29: #{tpu_custom_call.1} parent=27 // pred_check
          %p175 = pneg %p50
        $region30: #{tpu_custom_call.1} parent=27 // pred_check_branch
          %177 = sbr.rel (%p175) target = $region32
        $region31: #{tpu_custom_call.1} parent=27 // pred_region
          %s178 = sand.u32 %s40, 1
          %s179 = scalar_lea.sflag [#allocation6], %s178
          %s180 = sand.u32 %s40, 1
          %s181 = smul.addr %s180, 128
          %s182 = scalar_lea.vmem [#allocation5], %s181
          %s183 = smul.u32 16, %s24
          %185 = vsyncadd %s179, 0
          %s186 = smul.addr %s23, 16
          %s187 = sadd.s32 %s183, %s186
          %s188 = smul.addr %s187, 8
          %s189 = scalar_lea.hbm %s0, %s188
          %s191 = sshll.u32 %s189, 4
          %s192 = int_to_ptr.hbm [resolvable:$true] %s191
          %s193 = sshll.u32 %s182, 4
          %s194 = int_to_ptr.vmem [resolvable:$true] %s193
          %196 = dma.hbm_to_vmem [thread:$0]  %s192, 2048, %s194, %s179
        $region32: #{tpu_custom_call.1} parent=27 // pred_fallthru
          _
      $region28: #{tpu_custom_call.1} parent=5 // pred_fallthru
        _
      %p197 = scmp.le.s32.totalorder 1, %s16
      %p198 = scmp.lt.s32.totalorder %s16, 3
      %p199 = pnand %p197, %p198
      %p200 = pneg %p199
      // Predicated region
      $region33: #{tpu_custom_call.1} parent=5 // pred_check
        _
      $region34: #{tpu_custom_call.1} parent=5 // pred_check_branch
        %202 = sbr.rel (%p199) target = $region36
      $region35: #{tpu_custom_call.1} parent=5 // pred_region
        %s203 = ssub.s32 %s16, 1
        %s204 = sand.u32 %s43, 1
        %s205 = scalar_lea.sflag [#allocation6], %s204
        %s206 = sand.u32 %s43, 1
        %s207 = smul.addr %s206, 128
        %s208 = scalar_lea.vmem [#allocation5], %s207
        // Predicated region
        $region37: #{tpu_custom_call.1} parent=35 // pred_check
          %p209 = pneg %p56
        $region38: #{tpu_custom_call.1} parent=35 // pred_check_branch
          %211 = sbr.rel (%p209) target = $region40
        $region39: #{tpu_custom_call.1} parent=35 // pred_region
          %213 = dma.done %s205, 2048
        $region40: #{tpu_custom_call.1} parent=35 // pred_fallthru
          _
        %s214 = sand.u32 %s43, 1
        %s215 = scalar_lea.sflag [#allocation6], %s214
        %s216 = sand.u32 %s43, 1
        %s217 = smul.addr %s216, 128
        %s218 = scalar_lea.vmem [#allocation5], %s217
        %p219 = pneg %p56
        %p220 = pneg %p53
        %p221 = pneg %p77
        %p222 = pneg %p74
        %p223 = pneg %p98
        %p224 = pneg %p95
        %p225 = pneg %p119
        %p226 = pneg %p116
        %p227 = pneg %p147
        %p228 = pneg %p144
        %s229 = sand.u32 %s134, 1
        %s230 = scalar_lea.sflag [#allocation7], %s229
        %s231 = sand.u32 %s134, 1
        %s232 = smul.addr %s231, 128
        %s233 = scalar_lea.vmem [#allocation8], %s232
        %s234 = smul.u32 16, %s26
        %s235 = smul.u32 16, %s26
        %p236 = scmp.eq.s32.totalorder %s26, 0
        // Predicated region
        $region41: #{tpu_custom_call.1} parent=35 // pred_check
          %p237 = pneg %p236
        $region42: #{tpu_custom_call.1} parent=35 // pred_check_branch
          %239 = sbr.rel (%p237) target = $region44
        $region43: #{tpu_custom_call.1} parent=35 // pred_region
          %240 = vst [vmem:[#allocation3] sm:$0xff] 0.0
          %241 = vst [vmem:[#allocation4] sm:$0xff] 0.0
        $region44: #{tpu_custom_call.1} parent=35 // pred_fallthru
          _
        %v242 = vld [vmem:[%s208] sm:$0xff]
        %v243 = vld [vmem:[%s208 + $0x8] sm:$0xff]
        %v244 = vld [vmem:[%s208 + $0x10] sm:$0xff]
        %v245 = vld [vmem:[%s208 + $0x18] sm:$0xff]
        %v246 = vld [vmem:[%s208 + $0x20] sm:$0xff]
        %v247 = vld [vmem:[%s208 + $0x28] sm:$0xff]
        %v248 = vld [vmem:[%s208 + $0x30] sm:$0xff]
        %v249 = vld [vmem:[%s208 + $0x38] sm:$0xff]
        %v250 = vld [vmem:[%s208 + $0x40] sm:$0xff]
        %v251 = vld [vmem:[%s208 + $0x48] sm:$0xff]
        %v252 = vld [vmem:[%s208 + $0x50] sm:$0xff]
        %v253 = vld [vmem:[%s208 + $0x58] sm:$0xff]
        %v254 = vld [vmem:[%s208 + $0x60] sm:$0xff]
        %v255 = vld [vmem:[%s208 + $0x68] sm:$0xff]
        %v256 = vld [vmem:[%s208 + $0x70] sm:$0xff]
        %v257 = vld [vmem:[%s208 + $0x78] sm:$0xff]
        %v258 = vlaneseq
        %v259 = vand.u32 %v258, 127
        %v260 = vadd.s32 %v259, 128
        %v261 = vadd.s32 %v259, 256
        %v262 = vadd.s32 %v259, 384
        %v263 = vadd.s32 %v259, 512
        %v264 = vadd.s32 %v259, 640
        %v265 = vadd.s32 %v259, 768
        %v266 = vadd.s32 %v259, 896
        %v267 = vadd.s32 %v259, 1024
        %v268 = vadd.s32 %v259, 1152
        %v269 = vadd.s32 %v259, 1280
        %v270 = vadd.s32 %v259, 1408
        %v271 = vadd.s32 %v259, 1536
        %v272 = vadd.s32 %v259, 1664
        %v273 = vadd.s32 %v259, 1792
        %v274 = vadd.s32 %v259, 1920
        %vm275 = vcmp.lt.s32.totalorder %v259, 0
        %v276 = vsub.s32 0, %v259
        %v277 = vsel %vm275, %v276, %v259
        %v278 = vshrl.u32 %v277, 7
        %v279 = vand.u32 %v277, 127
        %v280 = vsub.s32 0, %v279
        %v281 = vsel %vm275, %v280, %v279
        %vm282 = vcmp.lt.s32.totalorder %v260, 0
        %v283 = vsub.s32 0, %v260
        %v284 = vsel %vm282, %v283, %v260
        %v285 = vshrl.u32 %v284, 7
        %v286 = vand.u32 %v284, 127
        %v287 = vsub.s32 0, %v286
        %v288 = vsel %vm282, %v287, %v286
        %vm289 = vcmp.lt.s32.totalorder %v261, 0
        %v290 = vsub.s32 0, %v261
        %v291 = vsel %vm289, %v290, %v261
        %v292 = vshrl.u32 %v291, 7
        %v293 = vand.u32 %v291, 127
        %v294 = vsub.s32 0, %v293
        %v295 = vsel %vm289, %v294, %v293
        %vm296 = vcmp.lt.s32.totalorder %v262, 0
        %v297 = vsub.s32 0, %v262
        %v298 = vsel %vm296, %v297, %v262
        %v299 = vshrl.u32 %v298, 7
        %v300 = vand.u32 %v298, 127
        %v301 = vsub.s32 0, %v300
        %v302 = vsel %vm296, %v301, %v300
        %vm303 = vcmp.lt.s32.totalorder %v263, 0
        %v304 = vsub.s32 0, %v263
        %v305 = vsel %vm303, %v304, %v263
        %v306 = vshrl.u32 %v305, 7
        %v307 = vand.u32 %v305, 127
        %v308 = vsub.s32 0, %v307
        %v309 = vsel %vm303, %v308, %v307
        %vm310 = vcmp.lt.s32.totalorder %v264, 0
        %v311 = vsub.s32 0, %v264
        %v312 = vsel %vm310, %v311, %v264
        %v313 = vshrl.u32 %v312, 7
        %v314 = vand.u32 %v312, 127
        %v315 = vsub.s32 0, %v314
        %v316 = vsel %vm310, %v315, %v314
        %vm317 = vcmp.lt.s32.totalorder %v265, 0
        %v318 = vsub.s32 0, %v265
        %v319 = vsel %vm317, %v318, %v265
        %v320 = vshrl.u32 %v319, 7
        %v321 = vand.u32 %v319, 127
        %v322 = vsub.s32 0, %v321
        %v323 = vsel %vm317, %v322, %v321
        %vm324 = vcmp.lt.s32.totalorder %v266, 0
        %v325 = vsub.s32 0, %v266
        %v326 = vsel %vm324, %v325, %v266
        %v327 = vshrl.u32 %v326, 7
        %v328 = vand.u32 %v326, 127
        %v329 = vsub.s32 0, %v328
        %v330 = vsel %vm324, %v329, %v328
        %vm331 = vcmp.lt.s32.totalorder %v267, 0
        %v332 = vsub.s32 0, %v267
        %v333 = vsel %vm331, %v332, %v267
        %v334 = vshrl.u32 %v333, 7
        %v335 = vand.u32 %v333, 127
        %v336 = vsub.s32 0, %v335
        %v337 = vsel %vm331, %v336, %v335
        %vm338 = vcmp.lt.s32.totalorder %v268, 0
        %v339 = vsub.s32 0, %v268
        %v340 = vsel %vm338, %v339, %v268
        %v341 = vshrl.u32 %v340, 7
        %v342 = vand.u32 %v340, 127
        %v343 = vsub.s32 0, %v342
        %v344 = vsel %vm338, %v343, %v342
        %vm345 = vcmp.lt.s32.totalorder %v269, 0
        %v346 = vsub.s32 0, %v269
        %v347 = vsel %vm345, %v346, %v269
        %v348 = vshrl.u32 %v347, 7
        %v349 = vand.u32 %v347, 127
        %v350 = vsub.s32 0, %v349
        %v351 = vsel %vm345, %v350, %v349
        %vm352 = vcmp.lt.s32.totalorder %v270, 0
        %v353 = vsub.s32 0, %v270
        %v354 = vsel %vm352, %v353, %v270
        %v355 = vshrl.u32 %v354, 7
        %v356 = vand.u32 %v354, 127
        %v357 = vsub.s32 0, %v356
        %v358 = vsel %vm352, %v357, %v356
        %vm359 = vcmp.lt.s32.totalorder %v271, 0
        %v360 = vsub.s32 0, %v271
        %v361 = vsel %vm359, %v360, %v271
        %v362 = vshrl.u32 %v361, 7
        %v363 = vand.u32 %v361, 127
        %v364 = vsub.s32 0, %v363
        %v365 = vsel %vm359, %v364, %v363
        %vm366 = vcmp.lt.s32.totalorder %v272, 0
        %v367 = vsub.s32 0, %v272
        %v368 = vsel %vm366, %v367, %v272
        %v369 = vshrl.u32 %v368, 7
        %v370 = vand.u32 %v368, 127
        %v371 = vsub.s32 0, %v370
        %v372 = vsel %vm366, %v371, %v370
        %vm373 = vcmp.lt.s32.totalorder %v273, 0
        %v374 = vsub.s32 0, %v273
        %v375 = vsel %vm373, %v374, %v273
        %v376 = vshrl.u32 %v375, 7
        %v377 = vand.u32 %v375, 127
        %v378 = vsub.s32 0, %v377
        %v379 = vsel %vm373, %v378, %v377
        %vm380 = vcmp.lt.s32.totalorder %v274, 0
        %v381 = vsub.s32 0, %v274
        %v382 = vsel %vm380, %v381, %v274
        %v383 = vshrl.u32 %v382, 7
        %v384 = vand.u32 %v382, 127
        %v385 = vsub.s32 0, %v384
        %v386 = vsel %vm380, %v385, %v384
        %vm387 = vcmp.ne.s32.totalorder %v281, 0
        %vm388 = vcmp.ne.s32.totalorder %v288, 0
        %vm389 = vcmp.ne.s32.totalorder %v295, 0
        %vm390 = vcmp.ne.s32.totalorder %v302, 0
        %vm391 = vcmp.ne.s32.totalorder %v309, 0
        %vm392 = vcmp.ne.s32.totalorder %v316, 0
        %vm393 = vcmp.ne.s32.totalorder %v323, 0
        %vm394 = vcmp.ne.s32.totalorder %v330, 0
        %vm395 = vcmp.ne.s32.totalorder %v337, 0
        %vm396 = vcmp.ne.s32.totalorder %v344, 0
        %vm397 = vcmp.ne.s32.totalorder %v351, 0
        %vm398 = vcmp.ne.s32.totalorder %v358, 0
        %vm399 = vcmp.ne.s32.totalorder %v365, 0
        %vm400 = vcmp.ne.s32.totalorder %v372, 0
        %vm401 = vcmp.ne.s32.totalorder %v379, 0
        %vm402 = vcmp.ne.s32.totalorder %v386, 0
        %vm403 = vcmp.lt.s32.totalorder %v281, 0
        %vm404 = vcmp.lt.s32.totalorder %v288, 0
        %vm405 = vcmp.lt.s32.totalorder %v295, 0
        %vm406 = vcmp.lt.s32.totalorder %v302, 0
        %vm407 = vcmp.lt.s32.totalorder %v309, 0
        %vm408 = vcmp.lt.s32.totalorder %v316, 0
        %vm409 = vcmp.lt.s32.totalorder %v323, 0
        %vm410 = vcmp.lt.s32.totalorder %v330, 0
        %vm411 = vcmp.lt.s32.totalorder %v337, 0
        %vm412 = vcmp.lt.s32.totalorder %v344, 0
        %vm413 = vcmp.lt.s32.totalorder %v351, 0
        %vm414 = vcmp.lt.s32.totalorder %v358, 0
        %vm415 = vcmp.lt.s32.totalorder %v365, 0
        %vm416 = vcmp.lt.s32.totalorder %v372, 0
        %vm417 = vcmp.lt.s32.totalorder %v379, 0
        %vm418 = vcmp.lt.s32.totalorder %v386, 0
        %vm419 = vmand %vm403, %vm387
        %vm420 = vmand %vm404, %vm388
        %vm421 = vmand %vm405, %vm389
        %vm422 = vmand %vm406, %vm390
        %vm423 = vmand %vm407, %vm391
        %vm424 = vmand %vm408, %vm392
        %vm425 = vmand %vm409, %vm393
        %vm426 = vmand %vm410, %vm394
        %vm427 = vmand %vm411, %vm395
        %vm428 = vmand %vm412, %vm396
        %vm429 = vmand %vm413, %vm397
        %vm430 = vmand %vm414, %vm398
        %vm431 = vmand %vm415, %vm399
        %vm432 = vmand %vm416, %vm400
        %vm433 = vmand %vm417, %vm401
        %vm434 = vmand %vm418, %vm402
        %v435 = vadd.s32 %v281, 128
        %v436 = vadd.s32 %v288, 128
        %v437 = vadd.s32 %v295, 128
        %v438 = vadd.s32 %v302, 128
        %v439 = vadd.s32 %v309, 128
        %v440 = vadd.s32 %v316, 128
        %v441 = vadd.s32 %v323, 128
        %v442 = vadd.s32 %v330, 128
        %v443 = vadd.s32 %v337, 128
        %v444 = vadd.s32 %v344, 128
        %v445 = vadd.s32 %v351, 128
        %v446 = vadd.s32 %v358, 128
        %v447 = vadd.s32 %v365, 128
        %v448 = vadd.s32 %v372, 128
        %v449 = vadd.s32 %v379, 128
        %v450 = vadd.s32 %v386, 128
        %v451 = vsel %vm419, %v435, %v281
        %v452 = vsel %vm420, %v436, %v288
        %v453 = vsel %vm421, %v437, %v295
        %v454 = vsel %vm422, %v438, %v302
        %v455 = vsel %vm423, %v439, %v309
        %v456 = vsel %vm424, %v440, %v316
        %v457 = vsel %vm425, %v441, %v323
        %v458 = vsel %vm426, %v442, %v330
        %v459 = vsel %vm427, %v443, %v337
        %v460 = vsel %vm428, %v444, %v344
        %v461 = vsel %vm429, %v445, %v351
        %v462 = vsel %vm430, %v446, %v358
        %v463 = vsel %vm431, %v447, %v365
        %v464 = vsel %vm432, %v448, %v372
        %v465 = vsel %vm433, %v449, %v379
        %v466 = vsel %vm434, %v450, %v386
        %vm467 = vcmp.eq.s32.totalorder %v451, 0
        %vm468 = vcmp.eq.s32.totalorder %v452, 0
        %vm469 = vcmp.eq.s32.totalorder %v453, 0
        %vm470 = vcmp.eq.s32.totalorder %v454, 0
        %vm471 = vcmp.eq.s32.totalorder %v455, 0
        %vm472 = vcmp.eq.s32.totalorder %v456, 0
        %vm473 = vcmp.eq.s32.totalorder %v457, 0
        %vm474 = vcmp.eq.s32.totalorder %v458, 0
        %vm475 = vcmp.eq.s32.totalorder %v459, 0
        %vm476 = vcmp.eq.s32.totalorder %v460, 0
        %vm477 = vcmp.eq.s32.totalorder %v461, 0
        %vm478 = vcmp.eq.s32.totalorder %v462, 0
        %vm479 = vcmp.eq.s32.totalorder %v463, 0
        %vm480 = vcmp.eq.s32.totalorder %v464, 0
        %vm481 = vcmp.eq.s32.totalorder %v465, 0
        %vm482 = vcmp.eq.s32.totalorder %v466, 0
        %483 = vrot.lane.b32.xlu0 %v242, 1
        %v484 = vpop.permute.xlu0 %483
        %485 = vrot.lane.b32.xlu0 %v243, 1
        %v486 = vpop.permute.xlu0 %485
        %487 = vrot.lane.b32.xlu0 %v244, 1
        %v488 = vpop.permute.xlu0 %487
        %489 = vrot.lane.b32.xlu0 %v245, 1
        %v490 = vpop.permute.xlu0 %489
        %491 = vrot.lane.b32.xlu0 %v246, 1
        %v492 = vpop.permute.xlu0 %491
        %493 = vrot.lane.b32.xlu0 %v247, 1
        %v494 = vpop.permute.xlu0 %493
        %495 = vrot.lane.b32.xlu0 %v248, 1
        %v496 = vpop.permute.xlu0 %495
        %497 = vrot.lane.b32.xlu0 %v249, 1
        %v498 = vpop.permute.xlu0 %497
        %499 = vrot.lane.b32.xlu0 %v250, 1
        %v500 = vpop.permute.xlu0 %499
        %501 = vrot.lane.b32.xlu0 %v251, 1
        %v502 = vpop.permute.xlu0 %501
        %503 = vrot.lane.b32.xlu0 %v252, 1
        %v504 = vpop.permute.xlu0 %503
        %505 = vrot.lane.b32.xlu0 %v253, 1
        %v506 = vpop.permute.xlu0 %505
        %507 = vrot.lane.b32.xlu0 %v254, 1
        %v508 = vpop.permute.xlu0 %507
        %509 = vrot.lane.b32.xlu0 %v255, 1
        %v510 = vpop.permute.xlu0 %509
        %511 = vrot.lane.b32.xlu0 %v256, 1
        %v512 = vpop.permute.xlu0 %511
        %513 = vrot.lane.b32.xlu0 %v257, 1
        %v514 = vpop.permute.xlu0 %513
        %vm515 = vcmp.lt.s32.totalorder %v259, 1
        %v516 = vsel %vm515, %v512, %v514
        %v517 = vsel %vm515, %v510, %v512
        %v518 = vsel %vm515, %v508, %v510
        %v519 = vsel %vm515, %v506, %v508
        %v520 = vsel %vm515, %v504, %v506
        %v521 = vsel %vm515, %v502, %v504
        %v522 = vsel %vm515, %v500, %v502
        %v523 = vsel %vm515, %v498, %v500
        %v524 = vsel %vm515, %v496, %v498
        %v525 = vsel %vm515, %v494, %v496
        %v526 = vsel %vm515, %v492, %v494
        %v527 = vsel %vm515, %v490, %v492
        %v528 = vsel %vm515, %v488, %v490
        %v529 = vsel %vm515, %v486, %v488
        %v530 = vsel %vm515, %v484, %v486
        %v531 = vsel %vm515, %v514, %v484
        %v532 = vsel %vm467, 0.0, %v531
        %v533 = vsel %vm468, 0.0, %v530
        %v534 = vsel %vm469, 0.0, %v529
        %v535 = vsel %vm470, 0.0, %v528
        %v536 = vsel %vm471, 0.0, %v527
        %v537 = vsel %vm472, 0.0, %v526
        %v538 = vsel %vm473, 0.0, %v525
        %v539 = vsel %vm474, 0.0, %v524
        %v540 = vsel %vm475, 0.0, %v523
        %v541 = vsel %vm476, 0.0, %v522
        %v542 = vsel %vm477, 0.0, %v521
        %v543 = vsel %vm478, 0.0, %v520
        %v544 = vsel %vm479, 0.0, %v519
        %v545 = vsel %vm480, 0.0, %v518
        %v546 = vsel %vm481, 0.0, %v517
        %v547 = vsel %vm482, 0.0, %v516
        %v548 = vld [vmem:[%s1] sm:$0xff]
        %v549 = vld [vmem:[%s1 + $0x8] sm:$0xff]
        %v550 = vld [vmem:[%s1 + $0x10] sm:$0xff]
        %v551 = vld [vmem:[%s1 + $0x18] sm:$0xff]
        %v552 = vld [vmem:[%s3] sm:$0xff]
        %v553 = vld [vmem:[%s3 + $0x8] sm:$0xff]
        %v554 = vld [vmem:[%s3 + $0x10] sm:$0xff]
        %v555 = vld [vmem:[%s3 + $0x18] sm:$0xff]
        %557 = vset.pattern.permute.xlu0 0
        %558 = vperm.xlu0 %557, %v552
        %v559 = vpop.permute.xlu0 %558
        %562 = vset.pattern.permute.xlu0 0
        %563 = vperm.xlu0 %562, %v553
        %v564 = vpop.permute.xlu0 %563
        %567 = vset.pattern.permute.xlu0 0
        %568 = vperm.xlu0 %567, %v554
        %v569 = vpop.permute.xlu0 %568
        %572 = vset.pattern.permute.xlu0 0
        %573 = vperm.xlu0 %572, %v555
        %v574 = vpop.permute.xlu0 %573
        %vm576 = vcmask 130048
        %v578 = vsel %vm576, %v548, 0
        %v581 = vsel %vm576, %v549, 0
        %v584 = vsel %vm576, %v550, 0
        %v587 = vsel %vm576, %v551, 0
        %589 = vmatpush.msra.mxu0 0.0
        %590 = vmatpush.msra.mxu0 0.0
        %591 = vmatpush.msra.mxu0 0.0
        %592 = vmatpush.msra.mxu0 0.0
        %593 = vmatpush.msra.mxu0 0.0
        %594 = vmatpush.msra.mxu0 0.0
        %595 = vmatpush.msra.mxu0 0.0
        %596 = vmatpush.msra.mxu0 0.0
        %597 = vmatpush.msra.mxu0 0.0
        %598 = vmatpush.msra.mxu0 0.0
        %599 = vmatpush.msra.mxu0 0.0
        %600 = vmatpush.msra.mxu0 0.0
        %601 = vmatpush.msra.mxu0 0.0
        %602 = vmatpush.msra.mxu0 0.0
        %603 = vmatpush.msra.mxu0 %v242
        %604 = vmatpush.msra.mxu0 %v532
        %605 = vmatmul.f32.gmra.mxu0 %v578
        %v606 = vpop.f32.mrf.mxu0
        %v607 = vadd.f32 %v559, %v606
        %608 = vmatmul.f32.gmra.mxu0 %v581
        %v609 = vpop.f32.mrf.mxu0
        %v610 = vadd.f32 %v564, %v609
        %611 = vmatmul.f32.gmra.mxu0 %v584
        %v612 = vpop.f32.mrf.mxu0
        %v613 = vadd.f32 %v569, %v612
        %614 = vmatmul.f32.gmra.mxu0 %v587
        %v615 = vpop.f32.mrf.mxu0
        %v616 = vadd.f32 %v574, %v615
        %617 = vdwg.mxu0
        %618 = vmatpush.msra.mxu0 0.0
        %619 = vmatpush.msra.mxu0 0.0
        %620 = vmatpush.msra.mxu0 0.0
        %621 = vmatpush.msra.mxu0 0.0
        %622 = vmatpush.msra.mxu0 0.0
        %623 = vmatpush.msra.mxu0 0.0
        %624 = vmatpush.msra.mxu0 0.0
        %625 = vmatpush.msra.mxu0 0.0
        %626 = vmatpush.msra.mxu0 0.0
        %627 = vmatpush.msra.mxu0 0.0
        %628 = vmatpush.msra.mxu0 0.0
        %629 = vmatpush.msra.mxu0 0.0
        %630 = vmatpush.msra.mxu0 0.0
        %631 = vmatpush.msra.mxu0 0.0
        %632 = vmatpush.msra.mxu0 %v243
        %633 = vmatpush.msra.mxu0 %v533
        %634 = vmatmul.f32.gmra.mxu0 %v578
        %v635 = vpop.f32.mrf.mxu0
        %v636 = vadd.f32 %v559, %v635
        %637 = vmatmul.f32.gmra.mxu0 %v581
        %v638 = vpop.f32.mrf.mxu0
        %v639 = vadd.f32 %v564, %v638
        %640 = vmatmul.f32.gmra.mxu0 %v584
        %v641 = vpop.f32.mrf.mxu0
        %v642 = vadd.f32 %v569, %v641
        %643 = vmatmul.f32.gmra.mxu0 %v587
        %v644 = vpop.f32.mrf.mxu0
        %v645 = vadd.f32 %v574, %v644
        %646 = vdwg.mxu0
        %647 = vmatpush.msra.mxu0 0.0
        %648 = vmatpush.msra.mxu0 0.0
        %649 = vmatpush.msra.mxu0 0.0
        %650 = vmatpush.msra.mxu0 0.0
        %651 = vmatpush.msra.mxu0 0.0
        %652 = vmatpush.msra.mxu0 0.0
        %653 = vmatpush.msra.mxu0 0.0
        %654 = vmatpush.msra.mxu0 0.0
        %655 = vmatpush.msra.mxu0 0.0
        %656 = vmatpush.msra.mxu0 0.0
        %657 = vmatpush.msra.mxu0 0.0
        %658 = vmatpush.msra.mxu0 0.0
        %659 = vmatpush.msra.mxu0 0.0
        %660 = vmatpush.msra.mxu0 0.0
        %661 = vmatpush.msra.mxu0 %v244
        %662 = vmatpush.msra.mxu0 %v534
        %663 = vmatmul.f32.gmra.mxu0 %v578
        %v664 = vpop.f32.mrf.mxu0
        %v665 = vadd.f32 %v559, %v664
        %666 = vmatmul.f32.gmra.mxu0 %v581
        %v667 = vpop.f32.mrf.mxu0
        %v668 = vadd.f32 %v564, %v667
        %669 = vmatmul.f32.gmra.mxu0 %v584
        %v670 = vpop.f32.mrf.mxu0
        %v671 = vadd.f32 %v569, %v670
        %672 = vmatmul.f32.gmra.mxu0 %v587
        %v673 = vpop.f32.mrf.mxu0
        %v674 = vadd.f32 %v574, %v673
        %675 = vdwg.mxu0
        %676 = vmatpush.msra.mxu0 0.0
        %677 = vmatpush.msra.mxu0 0.0
        %678 = vmatpush.msra.mxu0 0.0
        %679 = vmatpush.msra.mxu0 0.0
        %680 = vmatpush.msra.mxu0 0.0
        %681 = vmatpush.msra.mxu0 0.0
        %682 = vmatpush.msra.mxu0 0.0
        %683 = vmatpush.msra.mxu0 0.0
        %684 = vmatpush.msra.mxu0 0.0
        %685 = vmatpush.msra.mxu0 0.0
        %686 = vmatpush.msra.mxu0 0.0
        %687 = vmatpush.msra.mxu0 0.0
        %688 = vmatpush.msra.mxu0 0.0
        %689 = vmatpush.msra.mxu0 0.0
        %690 = vmatpush.msra.mxu0 %v245
        %691 = vmatpush.msra.mxu0 %v535
        %692 = vmatmul.f32.gmra.mxu0 %v578
        %v693 = vpop.f32.mrf.mxu0
        %v694 = vadd.f32 %v559, %v693
        %695 = vmatmul.f32.gmra.mxu0 %v581
        %v696 = vpop.f32.mrf.mxu0
        %v697 = vadd.f32 %v564, %v696
        %698 = vmatmul.f32.gmra.mxu0 %v584
        %v699 = vpop.f32.mrf.mxu0
        %v700 = vadd.f32 %v569, %v699
        %701 = vmatmul.f32.gmra.mxu0 %v587
        %v702 = vpop.f32.mrf.mxu0
        %v703 = vadd.f32 %v574, %v702
        %704 = vdwg.mxu0
        %705 = vmatpush.msra.mxu0 0.0
        %706 = vmatpush.msra.mxu0 0.0
        %707 = vmatpush.msra.mxu0 0.0
        %708 = vmatpush.msra.mxu0 0.0
        %709 = vmatpush.msra.mxu0 0.0
        %710 = vmatpush.msra.mxu0 0.0
        %711 = vmatpush.msra.mxu0 0.0
        %712 = vmatpush.msra.mxu0 0.0
        %713 = vmatpush.msra.mxu0 0.0
        %714 = vmatpush.msra.mxu0 0.0
        %715 = vmatpush.msra.mxu0 0.0
        %716 = vmatpush.msra.mxu0 0.0
        %717 = vmatpush.msra.mxu0 0.0
        %718 = vmatpush.msra.mxu0 0.0
        %719 = vmatpush.msra.mxu0 %v246
        %720 = vmatpush.msra.mxu0 %v536
        %721 = vmatmul.f32.gmra.mxu0 %v578
        %v722 = vpop.f32.mrf.mxu0
        %v723 = vadd.f32 %v559, %v722
        %724 = vmatmul.f32.gmra.mxu0 %v581
        %v725 = vpop.f32.mrf.mxu0
        %v726 = vadd.f32 %v564, %v725
        %727 = vmatmul.f32.gmra.mxu0 %v584
        %v728 = vpop.f32.mrf.mxu0
        %v729 = vadd.f32 %v569, %v728
        %730 = vmatmul.f32.gmra.mxu0 %v587
        %v731 = vpop.f32.mrf.mxu0
        %v732 = vadd.f32 %v574, %v731
        %733 = vdwg.mxu0
        %734 = vmatpush.msra.mxu0 0.0
        %735 = vmatpush.msra.mxu0 0.0
        %736 = vmatpush.msra.mxu0 0.0
        %737 = vmatpush.msra.mxu0 0.0
        %738 = vmatpush.msra.mxu0 0.0
        %739 = vmatpush.msra.mxu0 0.0
        %740 = vmatpush.msra.mxu0 0.0
        %741 = vmatpush.msra.mxu0 0.0
        %742 = vmatpush.msra.mxu0 0.0
        %743 = vmatpush.msra.mxu0 0.0
        %744 = vmatpush.msra.mxu0 0.0
        %745 = vmatpush.msra.mxu0 0.0
        %746 = vmatpush.msra.mxu0 0.0
        %747 = vmatpush.msra.mxu0 0.0
        %748 = vmatpush.msra.mxu0 %v247
        %749 = vmatpush.msra.mxu0 %v537
        %750 = vmatmul.f32.gmra.mxu0 %v578
        %v751 = vpop.f32.mrf.mxu0
        %v752 = vadd.f32 %v559, %v751
        %753 = vmatmul.f32.gmra.mxu0 %v581
        %v754 = vpop.f32.mrf.mxu0
        %v755 = vadd.f32 %v564, %v754
        %756 = vmatmul.f32.gmra.mxu0 %v584
        %v757 = vpop.f32.mrf.mxu0
        %v758 = vadd.f32 %v569, %v757
        %759 = vmatmul.f32.gmra.mxu0 %v587
        %v760 = vpop.f32.mrf.mxu0
        %v761 = vadd.f32 %v574, %v760
        %762 = vdwg.mxu0
        %763 = vmatpush.msra.mxu0 0.0
        %764 = vmatpush.msra.mxu0 0.0
        %765 = vmatpush.msra.mxu0 0.0
        %766 = vmatpush.msra.mxu0 0.0
        %767 = vmatpush.msra.mxu0 0.0
        %768 = vmatpush.msra.mxu0 0.0
        %769 = vmatpush.msra.mxu0 0.0
        %770 = vmatpush.msra.mxu0 0.0
        %771 = vmatpush.msra.mxu0 0.0
        %772 = vmatpush.msra.mxu0 0.0
        %773 = vmatpush.msra.mxu0 0.0
        %774 = vmatpush.msra.mxu0 0.0
        %775 = vmatpush.msra.mxu0 0.0
        %776 = vmatpush.msra.mxu0 0.0
        %777 = vmatpush.msra.mxu0 %v248
        %778 = vmatpush.msra.mxu0 %v538
        %779 = vmatmul.f32.gmra.mxu0 %v578
        %v780 = vpop.f32.mrf.mxu0
        %v781 = vadd.f32 %v559, %v780
        %782 = vmatmul.f32.gmra.mxu0 %v581
        %v783 = vpop.f32.mrf.mxu0
        %v784 = vadd.f32 %v564, %v783
        %785 = vmatmul.f32.gmra.mxu0 %v584
        %v786 = vpop.f32.mrf.mxu0
        %v787 = vadd.f32 %v569, %v786
        %788 = vmatmul.f32.gmra.mxu0 %v587
        %v789 = vpop.f32.mrf.mxu0
        %v790 = vadd.f32 %v574, %v789
        %791 = vdwg.mxu0
        %792 = vmatpush.msra.mxu0 0.0
        %793 = vmatpush.msra.mxu0 0.0
        %794 = vmatpush.msra.mxu0 0.0
        %795 = vmatpush.msra.mxu0 0.0
        %796 = vmatpush.msra.mxu0 0.0
        %797 = vmatpush.msra.mxu0 0.0
        %798 = vmatpush.msra.mxu0 0.0
        %799 = vmatpush.msra.mxu0 0.0
        %800 = vmatpush.msra.mxu0 0.0
        %801 = vmatpush.msra.mxu0 0.0
        %802 = vmatpush.msra.mxu0 0.0
        %803 = vmatpush.msra.mxu0 0.0
        %804 = vmatpush.msra.mxu0 0.0
        %805 = vmatpush.msra.mxu0 0.0
        %806 = vmatpush.msra.mxu0 %v249
        %807 = vmatpush.msra.mxu0 %v539
        %808 = vmatmul.f32.gmra.mxu0 %v578
        %v809 = vpop.f32.mrf.mxu0
        %v810 = vadd.f32 %v559, %v809
        %811 = vmatmul.f32.gmra.mxu0 %v581
        %v812 = vpop.f32.mrf.mxu0
        %v813 = vadd.f32 %v564, %v812
        %814 = vmatmul.f32.gmra.mxu0 %v584
        %v815 = vpop.f32.mrf.mxu0
        %v816 = vadd.f32 %v569, %v815
        %817 = vmatmul.f32.gmra.mxu0 %v587
        %v818 = vpop.f32.mrf.mxu0
        %v819 = vadd.f32 %v574, %v818
        %820 = vdwg.mxu0
        %821 = vmatpush.msra.mxu0 0.0
        %822 = vmatpush.msra.mxu0 0.0
        %823 = vmatpush.msra.mxu0 0.0
        %824 = vmatpush.msra.mxu0 0.0
        %825 = vmatpush.msra.mxu0 0.0
        %826 = vmatpush.msra.mxu0 0.0
        %827 = vmatpush.msra.mxu0 0.0
        %828 = vmatpush.msra.mxu0 0.0
        %829 = vmatpush.msra.mxu0 0.0
        %830 = vmatpush.msra.mxu0 0.0
        %831 = vmatpush.msra.mxu0 0.0
        %832 = vmatpush.msra.mxu0 0.0
        %833 = vmatpush.msra.mxu0 0.0
        %834 = vmatpush.msra.mxu0 0.0
        %835 = vmatpush.msra.mxu0 %v250
        %836 = vmatpush.msra.mxu0 %v540
        %837 = vmatmul.f32.gmra.mxu0 %v578
        %v838 = vpop.f32.mrf.mxu0
        %v839 = vadd.f32 %v559, %v838
        %840 = vmatmul.f32.gmra.mxu0 %v581
        %v841 = vpop.f32.mrf.mxu0
        %v842 = vadd.f32 %v564, %v841
        %843 = vmatmul.f32.gmra.mxu0 %v584
        %v844 = vpop.f32.mrf.mxu0
        %v845 = vadd.f32 %v569, %v844
        %846 = vmatmul.f32.gmra.mxu0 %v587
        %v847 = vpop.f32.mrf.mxu0
        %v848 = vadd.f32 %v574, %v847
        %849 = vdwg.mxu0
        %850 = vmatpush.msra.mxu0 0.0
        %851 = vmatpush.msra.mxu0 0.0
        %852 = vmatpush.msra.mxu0 0.0
        %853 = vmatpush.msra.mxu0 0.0
        %854 = vmatpush.msra.mxu0 0.0
        %855 = vmatpush.msra.mxu0 0.0
        %856 = vmatpush.msra.mxu0 0.0
        %857 = vmatpush.msra.mxu0 0.0
        %858 = vmatpush.msra.mxu0 0.0
        %859 = vmatpush.msra.mxu0 0.0
        %860 = vmatpush.msra.mxu0 0.0
        %861 = vmatpush.msra.mxu0 0.0
        %862 = vmatpush.msra.mxu0 0.0
        %863 = vmatpush.msra.mxu0 0.0
        %864 = vmatpush.msra.mxu0 %v251
        %865 = vmatpush.msra.mxu0 %v541
        %866 = vmatmul.f32.gmra.mxu0 %v578
        %v867 = vpop.f32.mrf.mxu0
        %v868 = vadd.f32 %v559, %v867
        %869 = vmatmul.f32.gmra.mxu0 %v581
        %v870 = vpop.f32.mrf.mxu0
        %v871 = vadd.f32 %v564, %v870
        %872 = vmatmul.f32.gmra.mxu0 %v584
        %v873 = vpop.f32.mrf.mxu0
        %v874 = vadd.f32 %v569, %v873
        %875 = vmatmul.f32.gmra.mxu0 %v587
        %v876 = vpop.f32.mrf.mxu0
        %v877 = vadd.f32 %v574, %v876
        %878 = vdwg.mxu0
        %879 = vmatpush.msra.mxu0 0.0
        %880 = vmatpush.msra.mxu0 0.0
        %881 = vmatpush.msra.mxu0 0.0
        %882 = vmatpush.msra.mxu0 0.0
        %883 = vmatpush.msra.mxu0 0.0
        %884 = vmatpush.msra.mxu0 0.0
        %885 = vmatpush.msra.mxu0 0.0
        %886 = vmatpush.msra.mxu0 0.0
        %887 = vmatpush.msra.mxu0 0.0
        %888 = vmatpush.msra.mxu0 0.0
        %889 = vmatpush.msra.mxu0 0.0
        %890 = vmatpush.msra.mxu0 0.0
        %891 = vmatpush.msra.mxu0 0.0
        %892 = vmatpush.msra.mxu0 0.0
        %893 = vmatpush.msra.mxu0 %v252
        %894 = vmatpush.msra.mxu0 %v542
        %895 = vmatmul.f32.gmra.mxu0 %v578
        %v896 = vpop.f32.mrf.mxu0
        %v897 = vadd.f32 %v559, %v896
        %898 = vmatmul.f32.gmra.mxu0 %v581
        %v899 = vpop.f32.mrf.mxu0
        %v900 = vadd.f32 %v564, %v899
        %901 = vmatmul.f32.gmra.mxu0 %v584
        %v902 = vpop.f32.mrf.mxu0
        %v903 = vadd.f32 %v569, %v902
        %904 = vmatmul.f32.gmra.mxu0 %v587
        %v905 = vpop.f32.mrf.mxu0
        %v906 = vadd.f32 %v574, %v905
        %907 = vdwg.mxu0
        %908 = vmatpush.msra.mxu0 0.0
        %909 = vmatpush.msra.mxu0 0.0
        %910 = vmatpush.msra.mxu0 0.0
        %911 = vmatpush.msra.mxu0 0.0
        %912 = vmatpush.msra.mxu0 0.0
        %913 = vmatpush.msra.mxu0 0.0
        %914 = vmatpush.msra.mxu0 0.0
        %915 = vmatpush.msra.mxu0 0.0
        %916 = vmatpush.msra.mxu0 0.0
        %917 = vmatpush.msra.mxu0 0.0
        %918 = vmatpush.msra.mxu0 0.0
        %919 = vmatpush.msra.mxu0 0.0
        %920 = vmatpush.msra.mxu0 0.0
        %921 = vmatpush.msra.mxu0 0.0
        %922 = vmatpush.msra.mxu0 %v253
        %923 = vmatpush.msra.mxu0 %v543
        %924 = vmatmul.f32.gmra.mxu0 %v578
        %v925 = vpop.f32.mrf.mxu0
        %v926 = vadd.f32 %v559, %v925
        %927 = vmatmul.f32.gmra.mxu0 %v581
        %v928 = vpop.f32.mrf.mxu0
        %v929 = vadd.f32 %v564, %v928
        %930 = vmatmul.f32.gmra.mxu0 %v584
        %v931 = vpop.f32.mrf.mxu0
        %v932 = vadd.f32 %v569, %v931
        %933 = vmatmul.f32.gmra.mxu0 %v587
        %v934 = vpop.f32.mrf.mxu0
        %v935 = vadd.f32 %v574, %v934
        %936 = vdwg.mxu0
        %937 = vmatpush.msra.mxu0 0.0
        %938 = vmatpush.msra.mxu0 0.0
        %939 = vmatpush.msra.mxu0 0.0
        %940 = vmatpush.msra.mxu0 0.0
        %941 = vmatpush.msra.mxu0 0.0
        %942 = vmatpush.msra.mxu0 0.0
        %943 = vmatpush.msra.mxu0 0.0
        %944 = vmatpush.msra.mxu0 0.0
        %945 = vmatpush.msra.mxu0 0.0
        %946 = vmatpush.msra.mxu0 0.0
        %947 = vmatpush.msra.mxu0 0.0
        %948 = vmatpush.msra.mxu0 0.0
        %949 = vmatpush.msra.mxu0 0.0
        %950 = vmatpush.msra.mxu0 0.0
        %951 = vmatpush.msra.mxu0 %v254
        %952 = vmatpush.msra.mxu0 %v544
        %953 = vmatmul.f32.gmra.mxu0 %v578
        %v954 = vpop.f32.mrf.mxu0
        %v955 = vadd.f32 %v559, %v954
        %956 = vmatmul.f32.gmra.mxu0 %v581
        %v957 = vpop.f32.mrf.mxu0
        %v958 = vadd.f32 %v564, %v957
        %959 = vmatmul.f32.gmra.mxu0 %v584
        %v960 = vpop.f32.mrf.mxu0
        %v961 = vadd.f32 %v569, %v960
        %962 = vmatmul.f32.gmra.mxu0 %v587
        %v963 = vpop.f32.mrf.mxu0
        %v964 = vadd.f32 %v574, %v963
        %965 = vdwg.mxu0
        %966 = vmatpush.msra.mxu0 0.0
        %967 = vmatpush.msra.mxu0 0.0
        %968 = vmatpush.msra.mxu0 0.0
        %969 = vmatpush.msra.mxu0 0.0
        %970 = vmatpush.msra.mxu0 0.0
        %971 = vmatpush.msra.mxu0 0.0
        %972 = vmatpush.msra.mxu0 0.0
        %973 = vmatpush.msra.mxu0 0.0
        %974 = vmatpush.msra.mxu0 0.0
        %975 = vmatpush.msra.mxu0 0.0
        %976 = vmatpush.msra.mxu0 0.0
        %977 = vmatpush.msra.mxu0 0.0
        %978 = vmatpush.msra.mxu0 0.0
        %979 = vmatpush.msra.mxu0 0.0
        %980 = vmatpush.msra.mxu0 %v255
        %981 = vmatpush.msra.mxu0 %v545
        %982 = vmatmul.f32.gmra.mxu0 %v578
        %v983 = vpop.f32.mrf.mxu0
        %v984 = vadd.f32 %v559, %v983
        %985 = vmatmul.f32.gmra.mxu0 %v581
        %v986 = vpop.f32.mrf.mxu0
        %v987 = vadd.f32 %v564, %v986
        %988 = vmatmul.f32.gmra.mxu0 %v584
        %v989 = vpop.f32.mrf.mxu0
        %v990 = vadd.f32 %v569, %v989
        %991 = vmatmul.f32.gmra.mxu0 %v587
        %v992 = vpop.f32.mrf.mxu0
        %v993 = vadd.f32 %v574, %v992
        %994 = vdwg.mxu0
        %995 = vmatpush.msra.mxu0 0.0
        %996 = vmatpush.msra.mxu0 0.0
        %997 = vmatpush.msra.mxu0 0.0
        %998 = vmatpush.msra.mxu0 0.0
        %999 = vmatpush.msra.mxu0 0.0
        %1000 = vmatpush.msra.mxu0 0.0
        %1001 = vmatpush.msra.mxu0 0.0
        %1002 = vmatpush.msra.mxu0 0.0
        %1003 = vmatpush.msra.mxu0 0.0
        %1004 = vmatpush.msra.mxu0 0.0
        %1005 = vmatpush.msra.mxu0 0.0
        %1006 = vmatpush.msra.mxu0 0.0
        %1007 = vmatpush.msra.mxu0 0.0
        %1008 = vmatpush.msra.mxu0 0.0
        %1009 = vmatpush.msra.mxu0 %v256
        %1010 = vmatpush.msra.mxu0 %v546
        %1011 = vmatmul.f32.gmra.mxu0 %v578
        %v1012 = vpop.f32.mrf.mxu0
        %v1013 = vadd.f32 %v559, %v1012
        %1014 = vmatmul.f32.gmra.mxu0 %v581
        %v1015 = vpop.f32.mrf.mxu0
        %v1016 = vadd.f32 %v564, %v1015
        %1017 = vmatmul.f32.gmra.mxu0 %v584
        %v1018 = vpop.f32.mrf.mxu0
        %v1019 = vadd.f32 %v569, %v1018
        %1020 = vmatmul.f32.gmra.mxu0 %v587
        %v1021 = vpop.f32.mrf.mxu0
        %v1022 = vadd.f32 %v574, %v1021
        %1023 = vdwg.mxu0
        %1024 = vmatpush.msra.mxu0 0.0
        %1025 = vmatpush.msra.mxu0 0.0
        %1026 = vmatpush.msra.mxu0 0.0
        %1027 = vmatpush.msra.mxu0 0.0
        %1028 = vmatpush.msra.mxu0 0.0
        %1029 = vmatpush.msra.mxu0 0.0
        %1030 = vmatpush.msra.mxu0 0.0
        %1031 = vmatpush.msra.mxu0 0.0
        %1032 = vmatpush.msra.mxu0 0.0
        %1033 = vmatpush.msra.mxu0 0.0
        %1034 = vmatpush.msra.mxu0 0.0
        %1035 = vmatpush.msra.mxu0 0.0
        %1036 = vmatpush.msra.mxu0 0.0
        %1037 = vmatpush.msra.mxu0 0.0
        %1038 = vmatpush.msra.mxu0 %v257
        %1039 = vmatpush.msra.mxu0 %v547
        %1040 = vmatmul.f32.gmra.mxu0 %v578
        %v1041 = vpop.f32.mrf.mxu0
        %v1042 = vadd.f32 %v559, %v1041
        %1043 = vmatmul.f32.gmra.mxu0 %v581
        %v1044 = vpop.f32.mrf.mxu0
        %v1045 = vadd.f32 %v564, %v1044
        %1046 = vmatmul.f32.gmra.mxu0 %v584
        %v1047 = vpop.f32.mrf.mxu0
        %v1048 = vadd.f32 %v569, %v1047
        %1049 = vmatmul.f32.gmra.mxu0 %v587
        %v1050 = vpop.f32.mrf.mxu0
        %v1051 = vadd.f32 %v574, %v1050
        %1052 = vdwg.mxu0
        %1053 = vst [vmem:[#allocation2] sm:$0xff] %v607
        %1054 = vst [vmem:[#allocation2 + $0x8] sm:$0xff] %v636
        %1055 = vst [vmem:[#allocation2 + $0x10] sm:$0xff] %v665
        %1056 = vst [vmem:[#allocation2 + $0x18] sm:$0xff] %v694
        %1057 = vst [vmem:[#allocation2 + $0x20] sm:$0xff] %v723
        %1058 = vst [vmem:[#allocation2 + $0x28] sm:$0xff] %v752
        %1059 = vst [vmem:[#allocation2 + $0x30] sm:$0xff] %v781
        %1060 = vst [vmem:[#allocation2 + $0x38] sm:$0xff] %v810
        %1061 = vst [vmem:[#allocation2 + $0x40] sm:$0xff] %v839
        %1062 = vst [vmem:[#allocation2 + $0x48] sm:$0xff] %v868
        %1063 = vst [vmem:[#allocation2 + $0x50] sm:$0xff] %v897
        %1064 = vst [vmem:[#allocation2 + $0x58] sm:$0xff] %v926
        %1065 = vst [vmem:[#allocation2 + $0x60] sm:$0xff] %v955
        %1066 = vst [vmem:[#allocation2 + $0x68] sm:$0xff] %v984
        %1067 = vst [vmem:[#allocation2 + $0x70] sm:$0xff] %v1013
        %1068 = vst [vmem:[#allocation2 + $0x78] sm:$0xff] %v1042
        %1069 = vst [vmem:[#allocation2 + $0x80] sm:$0xff] %v610
        %1070 = vst [vmem:[#allocation2 + $0x88] sm:$0xff] %v639
        %1071 = vst [vmem:[#allocation2 + $0x90] sm:$0xff] %v668
        %1072 = vst [vmem:[#allocation2 + $0x98] sm:$0xff] %v697
        %1073 = vst [vmem:[#allocation2 + $0xa0] sm:$0xff] %v726
        %1074 = vst [vmem:[#allocation2 + $0xa8] sm:$0xff] %v755
        %1075 = vst [vmem:[#allocation2 + $0xb0] sm:$0xff] %v784
        %1076 = vst [vmem:[#allocation2 + $0xb8] sm:$0xff] %v813
        %1077 = vst [vmem:[#allocation2 + $0xc0] sm:$0xff] %v842
        %1078 = vst [vmem:[#allocation2 + $0xc8] sm:$0xff] %v871
        %1079 = vst [vmem:[#allocation2 + $0xd0] sm:$0xff] %v900
        %1080 = vst [vmem:[#allocation2 + $0xd8] sm:$0xff] %v929
        %1081 = vst [vmem:[#allocation2 + $0xe0] sm:$0xff] %v958
        %1082 = vst [vmem:[#allocation2 + $0xe8] sm:$0xff] %v987
        %1083 = vst [vmem:[#allocation2 + $0xf0] sm:$0xff] %v1016
        %1084 = vst [vmem:[#allocation2 + $0xf8] sm:$0xff] %v1045
        %1085 = vst [vmem:[#allocation2 + $0x100] sm:$0xff] %v613
        %1086 = vst [vmem:[#allocation2 + $0x108] sm:$0xff] %v642
        %1087 = vst [vmem:[#allocation2 + $0x110] sm:$0xff] %v671
        %1088 = vst [vmem:[#allocation2 + $0x118] sm:$0xff] %v700
        %1089 = vst [vmem:[#allocation2 + $0x120] sm:$0xff] %v729
        %1090 = vst [vmem:[#allocation2 + $0x128] sm:$0xff] %v758
        %1091 = vst [vmem:[#allocation2 + $0x130] sm:$0xff] %v787
        %1092 = vst [vmem:[#allocation2 + $0x138] sm:$0xff] %v816
        %1093 = vst [vmem:[#allocation2 + $0x140] sm:$0xff] %v845
        %1094 = vst [vmem:[#allocation2 + $0x148] sm:$0xff] %v874
        %1095 = vst [vmem:[#allocation2 + $0x150] sm:$0xff] %v903
        %1096 = vst [vmem:[#allocation2 + $0x158] sm:$0xff] %v932
        %1097 = vst [vmem:[#allocation2 + $0x160] sm:$0xff] %v961
        %1098 = vst [vmem:[#allocation2 + $0x168] sm:$0xff] %v990
        %1099 = vst [vmem:[#allocation2 + $0x170] sm:$0xff] %v1019
        %1100 = vst [vmem:[#allocation2 + $0x178] sm:$0xff] %v1048
        %1101 = vst [vmem:[#allocation2 + $0x180] sm:$0xff] %v616
        %1102 = vst [vmem:[#allocation2 + $0x188] sm:$0xff] %v645
        %1103 = vst [vmem:[#allocation2 + $0x190] sm:$0xff] %v674
        %1104 = vst [vmem:[#allocation2 + $0x198] sm:$0xff] %v703
        %1105 = vst [vmem:[#allocation2 + $0x1a0] sm:$0xff] %v732
        %1106 = vst [vmem:[#allocation2 + $0x1a8] sm:$0xff] %v761
        %1107 = vst [vmem:[#allocation2 + $0x1b0] sm:$0xff] %v790
        %1108 = vst [vmem:[#allocation2 + $0x1b8] sm:$0xff] %v819
        %1109 = vst [vmem:[#allocation2 + $0x1c0] sm:$0xff] %v848
        %1110 = vst [vmem:[#allocation2 + $0x1c8] sm:$0xff] %v877
        %1111 = vst [vmem:[#allocation2 + $0x1d0] sm:$0xff] %v906
        %1112 = vst [vmem:[#allocation2 + $0x1d8] sm:$0xff] %v935
        %1113 = vst [vmem:[#allocation2 + $0x1e0] sm:$0xff] %v964
        %1114 = vst [vmem:[#allocation2 + $0x1e8] sm:$0xff] %v993
        %1115 = vst [vmem:[#allocation2 + $0x1f0] sm:$0xff] %v1022
        %1116 = vst [vmem:[#allocation2 + $0x1f8] sm:$0xff] %v1051
        %v1117 = vld [vmem:[%s2] sm:$0xff]
        %v1118 = vld [vmem:[%s2 + $0x8] sm:$0xff]
        %v1119 = vld [vmem:[%s2 + $0x10] sm:$0xff]
        %v1120 = vld [vmem:[%s2 + $0x18] sm:$0xff]
        %vm1121 = vcmp.eq.s32.totalorder %v259, 0
        %vm1122 = vcmp.eq.s32.totalorder %v259, 127
        %v1123 = vld [vmem:[#allocation3] sm:$0xff]
        %v1124 = vld [vmem:[#allocation4] sm:$0xff]
        %1125 = vrot.lane.b32.xlu0 %v1124, 1
        %v1126 = vpop.permute.xlu0 %1125
        %v1127 = vsel %vm1121, 0.0, %v1126
        %1128 = vrot.lane.b32.xlu0 %v1124, 127
        %v1129 = vpop.permute.xlu0 %1128
        %v1130 = vsel %vm1122, 0.0, %v1129
        %v1131 = vld [vmem:[#allocation2] sm:$0xff]
        %v1132 = vld [vmem:[#allocation2 + $0x80] sm:$0xff]
        %v1133 = vld [vmem:[#allocation2 + $0x100] sm:$0xff]
        %v1134 = vld [vmem:[#allocation2 + $0x180] sm:$0xff]
        %vm1135 = vcmask 195584
        %v1137 = vsel %vm1135, %v1117, 0
        %v1140 = vsel %vm1135, %v1118, 0
        %v1143 = vsel %vm1135, %v1119, 0
        %v1146 = vsel %vm1135, %v1120, 0
        %1148 = vmatpush.msra.mxu0 0.0
        %1149 = vmatpush.msra.mxu0 0.0
        %1150 = vmatpush.msra.mxu0 0.0
        %1151 = vmatpush.msra.mxu0 0.0
        %1152 = vmatpush.msra.mxu0 0.0
        %1153 = vmatpush.msra.mxu0 0.0
        %1154 = vmatpush.msra.mxu0 0.0
        %1155 = vmatpush.msra.mxu0 0.0
        %1156 = vmatpush.msra.mxu0 0.0
        %1157 = vmatpush.msra.mxu0 0.0
        %1158 = vmatpush.msra.mxu0 0.0
        %1159 = vmatpush.msra.mxu0 0.0
        %1160 = vmatpush.msra.mxu0 0.0
        %1161 = vmatpush.msra.mxu0 %v1130
        %1162 = vmatpush.msra.mxu0 %v1124
        %1163 = vmatpush.msra.mxu0 %v1127
        %1164 = vmatmul.f32.gmra.mxu0 %v1137
        %v1165 = vpop.f32.mrf.mxu0
        %v1166 = vadd.f32 %v1131, %v1165
        %1167 = vmatmul.f32.gmra.mxu0 %v1140
        %v1168 = vpop.f32.mrf.mxu0
        %v1169 = vadd.f32 %v1132, %v1168
        %1170 = vmatmul.f32.gmra.mxu0 %v1143
        %v1171 = vpop.f32.mrf.mxu0
        %v1172 = vadd.f32 %v1133, %v1171
        %1173 = vmatmul.f32.gmra.mxu0 %v1146
        %v1174 = vpop.f32.mrf.mxu0
        %v1175 = vadd.f32 %v1134, %v1174
        %1176 = vdwg.mxu0
        %v1177 = vxor.u32 %v1166, 2147483648
        %v1178 = vxor.u32 %v1169, 2147483648
        %v1179 = vxor.u32 %v1172, 2147483648
        %v1180 = vxor.u32 %v1175, 2147483648
        %v1181 = vmul.f32 %v1177, 1.442695
        %v1182 = vpow.pop %v1181
        %v1183 = vmul.f32 %v1178, 1.442695
        %v1184 = vpow.pop %v1183
        %v1185 = vmul.f32 %v1179, 1.442695
        %v1186 = vpow.pop %v1185
        %v1187 = vmul.f32 %v1180, 1.442695
        %v1188 = vpow.pop %v1187
        %v1189 = vadd.f32 %v1182, 1.0
        %v1190 = vadd.f32 %v1184, 1.0
        %v1191 = vadd.f32 %v1186, 1.0
        %v1192 = vadd.f32 %v1188, 1.0
        %v1193 = vrcp.pop %v1189
        %v1194 = vmul.f32 %v1189, %v1193
        %v1195 = vsub.f32 1.0, %v1194
        %v1196 = vmul.f32 %v1193, %v1195
        %v1197 = vadd.f32 %v1193, %v1196
        %vm1198 = vweird.f32 %v1189
        %vm1199 = vweird.f32 %v1193
        %vm1200 = vmor %vm1198, %vm1199
        %v1201 = vsel %vm1200, %v1193, %v1197
        %v1202 = vand.u32 2147483647, %v1189
        %vm1203 = vcmp.eq.f32.partialorder %v1202, 8.507059e+37
        %v1204 = vand.u32 %v1189, 2147483648
        %v1205 = vor.u32 1.1754944e-38, %v1204
        %v1206 = vsel %vm1203, %v1205, %v1201
        %v1207 = vmul.f32 1.0, %v1206
        %v1208 = vrcp.pop %v1190
        %v1209 = vmul.f32 %v1190, %v1208
        %v1210 = vsub.f32 1.0, %v1209
        %v1211 = vmul.f32 %v1208, %v1210
        %v1212 = vadd.f32 %v1208, %v1211
        %vm1213 = vweird.f32 %v1190
        %vm1214 = vweird.f32 %v1208
        %vm1215 = vmor %vm1213, %vm1214
        %v1216 = vsel %vm1215, %v1208, %v1212
        %v1217 = vand.u32 2147483647, %v1190
        %vm1218 = vcmp.eq.f32.partialorder %v1217, 8.507059e+37
        %v1219 = vand.u32 %v1190, 2147483648
        %v1220 = vor.u32 1.1754944e-38, %v1219
        %v1221 = vsel %vm1218, %v1220, %v1216
        %v1222 = vmul.f32 1.0, %v1221
        %v1223 = vrcp.pop %v1191
        %v1224 = vmul.f32 %v1191, %v1223
        %v1225 = vsub.f32 1.0, %v1224
        %v1226 = vmul.f32 %v1223, %v1225
        %v1227 = vadd.f32 %v1223, %v1226
        %vm1228 = vweird.f32 %v1191
        %vm1229 = vweird.f32 %v1223
        %vm1230 = vmor %vm1228, %vm1229
        %v1231 = vsel %vm1230, %v1223, %v1227
        %v1232 = vand.u32 2147483647, %v1191
        %vm1233 = vcmp.eq.f32.partialorder %v1232, 8.507059e+37
        %v1234 = vand.u32 %v1191, 2147483648
        %v1235 = vor.u32 1.1754944e-38, %v1234
        %v1236 = vsel %vm1233, %v1235, %v1231
        %v1237 = vmul.f32 1.0, %v1236
        %v1238 = vrcp.pop %v1192
        %v1239 = vmul.f32 %v1192, %v1238
        %v1240 = vsub.f32 1.0, %v1239
        %v1241 = vmul.f32 %v1238, %v1240
        %v1242 = vadd.f32 %v1238, %v1241
        %vm1243 = vweird.f32 %v1192
        %vm1244 = vweird.f32 %v1238
        %vm1245 = vmor %vm1243, %vm1244
        %v1246 = vsel %vm1245, %v1238, %v1242
        %v1247 = vand.u32 2147483647, %v1192
        %vm1248 = vcmp.eq.f32.partialorder %v1247, 8.507059e+37
        %v1249 = vand.u32 %v1192, 2147483648
        %v1250 = vor.u32 1.1754944e-38, %v1249
        %v1251 = vsel %vm1248, %v1250, %v1246
        %v1252 = vmul.f32 1.0, %v1251
        %v1253 = vmul.f32 %v1237, %v1123
        %v1254 = vmul.f32 %v1207, %v1222
        %v1255 = vadd.f32 %v1253, %v1254
        %v1256 = vtanh.pop %v1255
        %v1257 = vmul.f32 %v1252, %v1256
        %1258 = vst [vmem:[%s233] sm:$0xff] %v1257
        %1259 = vrot.lane.b32.xlu0 %v1257, 1
        %v1260 = vpop.permute.xlu0 %1259
        %v1261 = vsel %vm1121, 0.0, %v1260
        %1262 = vrot.lane.b32.xlu0 %v1257, 127
        %v1263 = vpop.permute.xlu0 %1262
        %v1264 = vsel %vm1122, 0.0, %v1263
        %v1265 = vld [vmem:[#allocation2 + $0x8] sm:$0xff]
        %v1266 = vld [vmem:[#allocation2 + $0x88] sm:$0xff]
        %v1267 = vld [vmem:[#allocation2 + $0x108] sm:$0xff]
        %v1268 = vld [vmem:[#allocation2 + $0x188] sm:$0xff]
        %1269 = vmatpush.msra.mxu0 0.0
        %1270 = vmatpush.msra.mxu0 0.0
        %1271 = vmatpush.msra.mxu0 0.0
        %1272 = vmatpush.msra.mxu0 0.0
        %1273 = vmatpush.msra.mxu0 0.0
        %1274 = vmatpush.msra.mxu0 0.0
        %1275 = vmatpush.msra.mxu0 0.0
        %1276 = vmatpush.msra.mxu0 0.0
        %1277 = vmatpush.msra.mxu0 0.0
        %1278 = vmatpush.msra.mxu0 0.0
        %1279 = vmatpush.msra.mxu0 0.0
        %1280 = vmatpush.msra.mxu0 0.0
        %1281 = vmatpush.msra.mxu0 0.0
        %1282 = vmatpush.msra.mxu0 %v1264
        %1283 = vmatpush.msra.mxu0 %v1257
        %1284 = vmatpush.msra.mxu0 %v1261
        %1285 = vmatmul.f32.gmra.mxu0 %v1137
        %v1286 = vpop.f32.mrf.mxu0
        %v1287 = vadd.f32 %v1265, %v1286
        %1288 = vmatmul.f32.gmra.mxu0 %v1140
        %v1289 = vpop.f32.mrf.mxu0
        %v1290 = vadd.f32 %v1266, %v1289
        %1291 = vmatmul.f32.gmra.mxu0 %v1143
        %v1292 = vpop.f32.mrf.mxu0
        %v1293 = vadd.f32 %v1267, %v1292
        %1294 = vmatmul.f32.gmra.mxu0 %v1146
        %v1295 = vpop.f32.mrf.mxu0
        %v1296 = vadd.f32 %v1268, %v1295
        %1297 = vdwg.mxu0
        %v1298 = vxor.u32 %v1287, 2147483648
        %v1299 = vxor.u32 %v1290, 2147483648
        %v1300 = vxor.u32 %v1293, 2147483648
        %v1301 = vxor.u32 %v1296, 2147483648
        %v1302 = vmul.f32 %v1298, 1.442695
        %v1303 = vpow.pop %v1302
        %v1304 = vmul.f32 %v1299, 1.442695
        %v1305 = vpow.pop %v1304
        %v1306 = vmul.f32 %v1300, 1.442695
        %v1307 = vpow.pop %v1306
        %v1308 = vmul.f32 %v1301, 1.442695
        %v1309 = vpow.pop %v1308
        %v1310 = vadd.f32 %v1303, 1.0
        %v1311 = vadd.f32 %v1305, 1.0
        %v1312 = vadd.f32 %v1307, 1.0
        %v1313 = vadd.f32 %v1309, 1.0
        %v1314 = vrcp.pop %v1310
        %v1315 = vmul.f32 %v1310, %v1314
        %v1316 = vsub.f32 1.0, %v1315
        %v1317 = vmul.f32 %v1314, %v1316
        %v1318 = vadd.f32 %v1314, %v1317
        %vm1319 = vweird.f32 %v1310
        %vm1320 = vweird.f32 %v1314
        %vm1321 = vmor %vm1319, %vm1320
        %v1322 = vsel %vm1321, %v1314, %v1318
        %v1323 = vand.u32 2147483647, %v1310
        %vm1324 = vcmp.eq.f32.partialorder %v1323, 8.507059e+37
        %v1325 = vand.u32 %v1310, 2147483648
        %v1326 = vor.u32 1.1754944e-38, %v1325
        %v1327 = vsel %vm1324, %v1326, %v1322
        %v1328 = vmul.f32 1.0, %v1327
        %v1329 = vrcp.pop %v1311
        %v1330 = vmul.f32 %v1311, %v1329
        %v1331 = vsub.f32 1.0, %v1330
        %v1332 = vmul.f32 %v1329, %v1331
        %v1333 = vadd.f32 %v1329, %v1332
        %vm1334 = vweird.f32 %v1311
        %vm1335 = vweird.f32 %v1329
        %vm1336 = vmor %vm1334, %vm1335
        %v1337 = vsel %vm1336, %v1329, %v1333
        %v1338 = vand.u32 2147483647, %v1311
        %vm1339 = vcmp.eq.f32.partialorder %v1338, 8.507059e+37
        %v1340 = vand.u32 %v1311, 2147483648
        %v1341 = vor.u32 1.1754944e-38, %v1340
        %v1342 = vsel %vm1339, %v1341, %v1337
        %v1343 = vmul.f32 1.0, %v1342
        %v1344 = vrcp.pop %v1312
        %v1345 = vmul.f32 %v1312, %v1344
        %v1346 = vsub.f32 1.0, %v1345
        %v1347 = vmul.f32 %v1344, %v1346
        %v1348 = vadd.f32 %v1344, %v1347
        %vm1349 = vweird.f32 %v1312
        %vm1350 = vweird.f32 %v1344
        %vm1351 = vmor %vm1349, %vm1350
        %v1352 = vsel %vm1351, %v1344, %v1348
        %v1353 = vand.u32 2147483647, %v1312
        %vm1354 = vcmp.eq.f32.partialorder %v1353, 8.507059e+37
        %v1355 = vand.u32 %v1312, 2147483648
        %v1356 = vor.u32 1.1754944e-38, %v1355
        %v1357 = vsel %vm1354, %v1356, %v1352
        %v1358 = vmul.f32 1.0, %v1357
        %v1359 = vrcp.pop %v1313
        %v1360 = vmul.f32 %v1313, %v1359
        %v1361 = vsub.f32 1.0, %v1360
        %v1362 = vmul.f32 %v1359, %v1361
        %v1363 = vadd.f32 %v1359, %v1362
        %vm1364 = vweird.f32 %v1313
        %vm1365 = vweird.f32 %v1359
        %vm1366 = vmor %vm1364, %vm1365
        %v1367 = vsel %vm1366, %v1359, %v1363
        %v1368 = vand.u32 2147483647, %v1313
        %vm1369 = vcmp.eq.f32.partialorder %v1368, 8.507059e+37
        %v1370 = vand.u32 %v1313, 2147483648
        %v1371 = vor.u32 1.1754944e-38, %v1370
        %v1372 = vsel %vm1369, %v1371, %v1367
        %v1373 = vmul.f32 1.0, %v1372
        %v1374 = vmul.f32 %v1358, %v1255
        %v1375 = vmul.f32 %v1328, %v1343
        %v1376 = vadd.f32 %v1374, %v1375
        %v1377 = vtanh.pop %v1376
        %v1378 = vmul.f32 %v1373, %v1377
        %s1379 = scalar_lea.vmem %s233, 8 [#allocation8]
        %1380 = vst [vmem:[%s1379] sm:$0xff] %v1378
        %1381 = vrot.lane.b32.xlu0 %v1378, 1
        %v1382 = vpop.permute.xlu0 %1381
        %v1383 = vsel %vm1121, 0.0, %v1382
        %1384 = vrot.lane.b32.xlu0 %v1378, 127
        %v1385 = vpop.permute.xlu0 %1384
        %v1386 = vsel %vm1122, 0.0, %v1385
        %v1387 = vld [vmem:[#allocation2 + $0x10] sm:$0xff]
        %v1388 = vld [vmem:[#allocation2 + $0x90] sm:$0xff]
        %v1389 = vld [vmem:[#allocation2 + $0x110] sm:$0xff]
        %v1390 = vld [vmem:[#allocation2 + $0x190] sm:$0xff]
        %1391 = vmatpush.msra.mxu0 0.0
        %1392 = vmatpush.msra.mxu0 0.0
        %1393 = vmatpush.msra.mxu0 0.0
        %1394 = vmatpush.msra.mxu0 0.0
        %1395 = vmatpush.msra.mxu0 0.0
        %1396 = vmatpush.msra.mxu0 0.0
        %1397 = vmatpush.msra.mxu0 0.0
        %1398 = vmatpush.msra.mxu0 0.0
        %1399 = vmatpush.msra.mxu0 0.0
        %1400 = vmatpush.msra.mxu0 0.0
        %1401 = vmatpush.msra.mxu0 0.0
        %1402 = vmatpush.msra.mxu0 0.0
        %1403 = vmatpush.msra.mxu0 0.0
        %1404 = vmatpush.msra.mxu0 %v1386
        %1405 = vmatpush.msra.mxu0 %v1378
        %1406 = vmatpush.msra.mxu0 %v1383
        %1407 = vmatmul.f32.gmra.mxu0 %v1137
        %v1408 = vpop.f32.mrf.mxu0
        %v1409 = vadd.f32 %v1387, %v1408
        %1410 = vmatmul.f32.gmra.mxu0 %v1140
        %v1411 = vpop.f32.mrf.mxu0
        %v1412 = vadd.f32 %v1388, %v1411
        %1413 = vmatmul.f32.gmra.mxu0 %v1143
        %v1414 = vpop.f32.mrf.mxu0
        %v1415 = vadd.f32 %v1389, %v1414
        %1416 = vmatmul.f32.gmra.mxu0 %v1146
        %v1417 = vpop.f32.mrf.mxu0
        %v1418 = vadd.f32 %v1390, %v1417
        %1419 = vdwg.mxu0
        %v1420 = vxor.u32 %v1409, 2147483648
        %v1421 = vxor.u32 %v1412, 2147483648
        %v1422 = vxor.u32 %v1415, 2147483648
        %v1423 = vxor.u32 %v1418, 2147483648
        %v1424 = vmul.f32 %v1420, 1.442695
        %v1425 = vpow.pop %v1424
        %v1426 = vmul.f32 %v1421, 1.442695
        %v1427 = vpow.pop %v1426
        %v1428 = vmul.f32 %v1422, 1.442695
        %v1429 = vpow.pop %v1428
        %v1430 = vmul.f32 %v1423, 1.442695
        %v1431 = vpow.pop %v1430
        %v1432 = vadd.f32 %v1425, 1.0
        %v1433 = vadd.f32 %v1427, 1.0
        %v1434 = vadd.f32 %v1429, 1.0
        %v1435 = vadd.f32 %v1431, 1.0
        %v1436 = vrcp.pop %v1432
        %v1437 = vmul.f32 %v1432, %v1436
        %v1438 = vsub.f32 1.0, %v1437
        %v1439 = vmul.f32 %v1436, %v1438
        %v1440 = vadd.f32 %v1436, %v1439
        %vm1441 = vweird.f32 %v1432
        %vm1442 = vweird.f32 %v1436
        %vm1443 = vmor %vm1441, %vm1442
        %v1444 = vsel %vm1443, %v1436, %v1440
        %v1445 = vand.u32 2147483647, %v1432
        %vm1446 = vcmp.eq.f32.partialorder %v1445, 8.507059e+37
        %v1447 = vand.u32 %v1432, 2147483648
        %v1448 = vor.u32 1.1754944e-38, %v1447
        %v1449 = vsel %vm1446, %v1448, %v1444
        %v1450 = vmul.f32 1.0, %v1449
        %v1451 = vrcp.pop %v1433
        %v1452 = vmul.f32 %v1433, %v1451
        %v1453 = vsub.f32 1.0, %v1452
        %v1454 = vmul.f32 %v1451, %v1453
        %v1455 = vadd.f32 %v1451, %v1454
        %vm1456 = vweird.f32 %v1433
        %vm1457 = vweird.f32 %v1451
        %vm1458 = vmor %vm1456, %vm1457
        %v1459 = vsel %vm1458, %v1451, %v1455
        %v1460 = vand.u32 2147483647, %v1433
        %vm1461 = vcmp.eq.f32.partialorder %v1460, 8.507059e+37
        %v1462 = vand.u32 %v1433, 2147483648
        %v1463 = vor.u32 1.1754944e-38, %v1462
        %v1464 = vsel %vm1461, %v1463, %v1459
        %v1465 = vmul.f32 1.0, %v1464
        %v1466 = vrcp.pop %v1434
        %v1467 = vmul.f32 %v1434, %v1466
        %v1468 = vsub.f32 1.0, %v1467
        %v1469 = vmul.f32 %v1466, %v1468
        %v1470 = vadd.f32 %v1466, %v1469
        %vm1471 = vweird.f32 %v1434
        %vm1472 = vweird.f32 %v1466
        %vm1473 = vmor %vm1471, %vm1472
        %v1474 = vsel %vm1473, %v1466, %v1470
        %v1475 = vand.u32 2147483647, %v1434
        %vm1476 = vcmp.eq.f32.partialorder %v1475, 8.507059e+37
        %v1477 = vand.u32 %v1434, 2147483648
        %v1478 = vor.u32 1.1754944e-38, %v1477
        %v1479 = vsel %vm1476, %v1478, %v1474
        %v1480 = vmul.f32 1.0, %v1479
        %v1481 = vrcp.pop %v1435
        %v1482 = vmul.f32 %v1435, %v1481
        %v1483 = vsub.f32 1.0, %v1482
        %v1484 = vmul.f32 %v1481, %v1483
        %v1485 = vadd.f32 %v1481, %v1484
        %vm1486 = vweird.f32 %v1435
        %vm1487 = vweird.f32 %v1481
        %vm1488 = vmor %vm1486, %vm1487
        %v1489 = vsel %vm1488, %v1481, %v1485
        %v1490 = vand.u32 2147483647, %v1435
        %vm1491 = vcmp.eq.f32.partialorder %v1490, 8.507059e+37
        %v1492 = vand.u32 %v1435, 2147483648
        %v1493 = vor.u32 1.1754944e-38, %v1492
        %v1494 = vsel %vm1491, %v1493, %v1489
        %v1495 = vmul.f32 1.0, %v1494
        %v1496 = vmul.f32 %v1480, %v1376
        %v1497 = vmul.f32 %v1450, %v1465
        %v1498 = vadd.f32 %v1496, %v1497
        %v1499 = vtanh.pop %v1498
        %v1500 = vmul.f32 %v1495, %v1499
        %s1501 = scalar_lea.vmem %s233, 16 [#allocation8]
        %1502 = vst [vmem:[%s1501] sm:$0xff] %v1500
        %1503 = vrot.lane.b32.xlu0 %v1500, 1
        %v1504 = vpop.permute.xlu0 %1503
        %v1505 = vsel %vm1121, 0.0, %v1504
        %1506 = vrot.lane.b32.xlu0 %v1500, 127
        %v1507 = vpop.permute.xlu0 %1506
        %v1508 = vsel %vm1122, 0.0, %v1507
        %v1509 = vld [vmem:[#allocation2 + $0x18] sm:$0xff]
        %v1510 = vld [vmem:[#allocation2 + $0x98] sm:$0xff]
        %v1511 = vld [vmem:[#allocation2 + $0x118] sm:$0xff]
        %v1512 = vld [vmem:[#allocation2 + $0x198] sm:$0xff]
        %1513 = vmatpush.msra.mxu0 0.0
        %1514 = vmatpush.msra.mxu0 0.0
        %1515 = vmatpush.msra.mxu0 0.0
        %1516 = vmatpush.msra.mxu0 0.0
        %1517 = vmatpush.msra.mxu0 0.0
        %1518 = vmatpush.msra.mxu0 0.0
        %1519 = vmatpush.msra.mxu0 0.0
        %1520 = vmatpush.msra.mxu0 0.0
        %1521 = vmatpush.msra.mxu0 0.0
        %1522 = vmatpush.msra.mxu0 0.0
        %1523 = vmatpush.msra.mxu0 0.0
        %1524 = vmatpush.msra.mxu0 0.0
        %1525 = vmatpush.msra.mxu0 0.0
        %1526 = vmatpush.msra.mxu0 %v1508
        %1527 = vmatpush.msra.mxu0 %v1500
        %1528 = vmatpush.msra.mxu0 %v1505
        %1529 = vmatmul.f32.gmra.mxu0 %v1137
        %v1530 = vpop.f32.mrf.mxu0
        %v1531 = vadd.f32 %v1509, %v1530
        %1532 = vmatmul.f32.gmra.mxu0 %v1140
        %v1533 = vpop.f32.mrf.mxu0
        %v1534 = vadd.f32 %v1510, %v1533
        %1535 = vmatmul.f32.gmra.mxu0 %v1143
        %v1536 = vpop.f32.mrf.mxu0
        %v1537 = vadd.f32 %v1511, %v1536
        %1538 = vmatmul.f32.gmra.mxu0 %v1146
        %v1539 = vpop.f32.mrf.mxu0
        %v1540 = vadd.f32 %v1512, %v1539
        %1541 = vdwg.mxu0
        %v1542 = vxor.u32 %v1531, 2147483648
        %v1543 = vxor.u32 %v1534, 2147483648
        %v1544 = vxor.u32 %v1537, 2147483648
        %v1545 = vxor.u32 %v1540, 2147483648
        %v1546 = vmul.f32 %v1542, 1.442695
        %v1547 = vpow.pop %v1546
        %v1548 = vmul.f32 %v1543, 1.442695
        %v1549 = vpow.pop %v1548
        %v1550 = vmul.f32 %v1544, 1.442695
        %v1551 = vpow.pop %v1550
        %v1552 = vmul.f32 %v1545, 1.442695
        %v1553 = vpow.pop %v1552
        %v1554 = vadd.f32 %v1547, 1.0
        %v1555 = vadd.f32 %v1549, 1.0
        %v1556 = vadd.f32 %v1551, 1.0
        %v1557 = vadd.f32 %v1553, 1.0
        %v1558 = vrcp.pop %v1554
        %v1559 = vmul.f32 %v1554, %v1558
        %v1560 = vsub.f32 1.0, %v1559
        %v1561 = vmul.f32 %v1558, %v1560
        %v1562 = vadd.f32 %v1558, %v1561
        %vm1563 = vweird.f32 %v1554
        %vm1564 = vweird.f32 %v1558
        %vm1565 = vmor %vm1563, %vm1564
        %v1566 = vsel %vm1565, %v1558, %v1562
        %v1567 = vand.u32 2147483647, %v1554
        %vm1568 = vcmp.eq.f32.partialorder %v1567, 8.507059e+37
        %v1569 = vand.u32 %v1554, 2147483648
        %v1570 = vor.u32 1.1754944e-38, %v1569
        %v1571 = vsel %vm1568, %v1570, %v1566
        %v1572 = vmul.f32 1.0, %v1571
        %v1573 = vrcp.pop %v1555
        %v1574 = vmul.f32 %v1555, %v1573
        %v1575 = vsub.f32 1.0, %v1574
        %v1576 = vmul.f32 %v1573, %v1575
        %v1577 = vadd.f32 %v1573, %v1576
        %vm1578 = vweird.f32 %v1555
        %vm1579 = vweird.f32 %v1573
        %vm1580 = vmor %vm1578, %vm1579
        %v1581 = vsel %vm1580, %v1573, %v1577
        %v1582 = vand.u32 2147483647, %v1555
        %vm1583 = vcmp.eq.f32.partialorder %v1582, 8.507059e+37
        %v1584 = vand.u32 %v1555, 2147483648
        %v1585 = vor.u32 1.1754944e-38, %v1584
        %v1586 = vsel %vm1583, %v1585, %v1581
        %v1587 = vmul.f32 1.0, %v1586
        %v1588 = vrcp.pop %v1556
        %v1589 = vmul.f32 %v1556, %v1588
        %v1590 = vsub.f32 1.0, %v1589
        %v1591 = vmul.f32 %v1588, %v1590
        %v1592 = vadd.f32 %v1588, %v1591
        %vm1593 = vweird.f32 %v1556
        %vm1594 = vweird.f32 %v1588
        %vm1595 = vmor %vm1593, %vm1594
        %v1596 = vsel %vm1595, %v1588, %v1592
        %v1597 = vand.u32 2147483647, %v1556
        %vm1598 = vcmp.eq.f32.partialorder %v1597, 8.507059e+37
        %v1599 = vand.u32 %v1556, 2147483648
        %v1600 = vor.u32 1.1754944e-38, %v1599
        %v1601 = vsel %vm1598, %v1600, %v1596
        %v1602 = vmul.f32 1.0, %v1601
        %v1603 = vrcp.pop %v1557
        %v1604 = vmul.f32 %v1557, %v1603
        %v1605 = vsub.f32 1.0, %v1604
        %v1606 = vmul.f32 %v1603, %v1605
        %v1607 = vadd.f32 %v1603, %v1606
        %vm1608 = vweird.f32 %v1557
        %vm1609 = vweird.f32 %v1603
        %vm1610 = vmor %vm1608, %vm1609
        %v1611 = vsel %vm1610, %v1603, %v1607
        %v1612 = vand.u32 2147483647, %v1557
        %vm1613 = vcmp.eq.f32.partialorder %v1612, 8.507059e+37
        %v1614 = vand.u32 %v1557, 2147483648
        %v1615 = vor.u32 1.1754944e-38, %v1614
        %v1616 = vsel %vm1613, %v1615, %v1611
        %v1617 = vmul.f32 1.0, %v1616
        %v1618 = vmul.f32 %v1602, %v1498
        %v1619 = vmul.f32 %v1572, %v1587
        %v1620 = vadd.f32 %v1618, %v1619
        %v1621 = vtanh.pop %v1620
        %v1622 = vmul.f32 %v1617, %v1621
        %s1623 = scalar_lea.vmem %s233, 24 [#allocation8]
        %1624 = vst [vmem:[%s1623] sm:$0xff] %v1622
        %1625 = vrot.lane.b32.xlu0 %v1622, 1
        %v1626 = vpop.permute.xlu0 %1625
        %v1627 = vsel %vm1121, 0.0, %v1626
        %1628 = vrot.lane.b32.xlu0 %v1622, 127
        %v1629 = vpop.permute.xlu0 %1628
        %v1630 = vsel %vm1122, 0.0, %v1629
        %v1631 = vld [vmem:[#allocation2 + $0x20] sm:$0xff]
        %v1632 = vld [vmem:[#allocation2 + $0xa0] sm:$0xff]
        %v1633 = vld [vmem:[#allocation2 + $0x120] sm:$0xff]
        %v1634 = vld [vmem:[#allocation2 + $0x1a0] sm:$0xff]
        %1635 = vmatpush.msra.mxu0 0.0
        %1636 = vmatpush.msra.mxu0 0.0
        %1637 = vmatpush.msra.mxu0 0.0
        %1638 = vmatpush.msra.mxu0 0.0
        %1639 = vmatpush.msra.mxu0 0.0
        %1640 = vmatpush.msra.mxu0 0.0
        %1641 = vmatpush.msra.mxu0 0.0
        %1642 = vmatpush.msra.mxu0 0.0
        %1643 = vmatpush.msra.mxu0 0.0
        %1644 = vmatpush.msra.mxu0 0.0
        %1645 = vmatpush.msra.mxu0 0.0
        %1646 = vmatpush.msra.mxu0 0.0
        %1647 = vmatpush.msra.mxu0 0.0
        %1648 = vmatpush.msra.mxu0 %v1630
        %1649 = vmatpush.msra.mxu0 %v1622
        %1650 = vmatpush.msra.mxu0 %v1627
        %1651 = vmatmul.f32.gmra.mxu0 %v1137
        %v1652 = vpop.f32.mrf.mxu0
        %v1653 = vadd.f32 %v1631, %v1652
        %1654 = vmatmul.f32.gmra.mxu0 %v1140
        %v1655 = vpop.f32.mrf.mxu0
        %v1656 = vadd.f32 %v1632, %v1655
        %1657 = vmatmul.f32.gmra.mxu0 %v1143
        %v1658 = vpop.f32.mrf.mxu0
        %v1659 = vadd.f32 %v1633, %v1658
        %1660 = vmatmul.f32.gmra.mxu0 %v1146
        %v1661 = vpop.f32.mrf.mxu0
        %v1662 = vadd.f32 %v1634, %v1661
        %1663 = vdwg.mxu0
        %v1664 = vxor.u32 %v1653, 2147483648
        %v1665 = vxor.u32 %v1656, 2147483648
        %v1666 = vxor.u32 %v1659, 2147483648
        %v1667 = vxor.u32 %v1662, 2147483648
        %v1668 = vmul.f32 %v1664, 1.442695
        %v1669 = vpow.pop %v1668
        %v1670 = vmul.f32 %v1665, 1.442695
        %v1671 = vpow.pop %v1670
        %v1672 = vmul.f32 %v1666, 1.442695
        %v1673 = vpow.pop %v1672
        %v1674 = vmul.f32 %v1667, 1.442695
        %v1675 = vpow.pop %v1674
        %v1676 = vadd.f32 %v1669, 1.0
        %v1677 = vadd.f32 %v1671, 1.0
        %v1678 = vadd.f32 %v1673, 1.0
        %v1679 = vadd.f32 %v1675, 1.0
        %v1680 = vrcp.pop %v1676
        %v1681 = vmul.f32 %v1676, %v1680
        %v1682 = vsub.f32 1.0, %v1681
        %v1683 = vmul.f32 %v1680, %v1682
        %v1684 = vadd.f32 %v1680, %v1683
        %vm1685 = vweird.f32 %v1676
        %vm1686 = vweird.f32 %v1680
        %vm1687 = vmor %vm1685, %vm1686
        %v1688 = vsel %vm1687, %v1680, %v1684
        %v1689 = vand.u32 2147483647, %v1676
        %vm1690 = vcmp.eq.f32.partialorder %v1689, 8.507059e+37
        %v1691 = vand.u32 %v1676, 2147483648
        %v1692 = vor.u32 1.1754944e-38, %v1691
        %v1693 = vsel %vm1690, %v1692, %v1688
        %v1694 = vmul.f32 1.0, %v1693
        %v1695 = vrcp.pop %v1677
        %v1696 = vmul.f32 %v1677, %v1695
        %v1697 = vsub.f32 1.0, %v1696
        %v1698 = vmul.f32 %v1695, %v1697
        %v1699 = vadd.f32 %v1695, %v1698
        %vm1700 = vweird.f32 %v1677
        %vm1701 = vweird.f32 %v1695
        %vm1702 = vmor %vm1700, %vm1701
        %v1703 = vsel %vm1702, %v1695, %v1699
        %v1704 = vand.u32 2147483647, %v1677
        %vm1705 = vcmp.eq.f32.partialorder %v1704, 8.507059e+37
        %v1706 = vand.u32 %v1677, 2147483648
        %v1707 = vor.u32 1.1754944e-38, %v1706
        %v1708 = vsel %vm1705, %v1707, %v1703
        %v1709 = vmul.f32 1.0, %v1708
        %v1710 = vrcp.pop %v1678
        %v1711 = vmul.f32 %v1678, %v1710
        %v1712 = vsub.f32 1.0, %v1711
        %v1713 = vmul.f32 %v1710, %v1712
        %v1714 = vadd.f32 %v1710, %v1713
        %vm1715 = vweird.f32 %v1678
        %vm1716 = vweird.f32 %v1710
        %vm1717 = vmor %vm1715, %vm1716
        %v1718 = vsel %vm1717, %v1710, %v1714
        %v1719 = vand.u32 2147483647, %v1678
        %vm1720 = vcmp.eq.f32.partialorder %v1719, 8.507059e+37
        %v1721 = vand.u32 %v1678, 2147483648
        %v1722 = vor.u32 1.1754944e-38, %v1721
        %v1723 = vsel %vm1720, %v1722, %v1718
        %v1724 = vmul.f32 1.0, %v1723
        %v1725 = vrcp.pop %v1679
        %v1726 = vmul.f32 %v1679, %v1725
        %v1727 = vsub.f32 1.0, %v1726
        %v1728 = vmul.f32 %v1725, %v1727
        %v1729 = vadd.f32 %v1725, %v1728
        %vm1730 = vweird.f32 %v1679
        %vm1731 = vweird.f32 %v1725
        %vm1732 = vmor %vm1730, %vm1731
        %v1733 = vsel %vm1732, %v1725, %v1729
        %v1734 = vand.u32 2147483647, %v1679
        %vm1735 = vcmp.eq.f32.partialorder %v1734, 8.507059e+37
        %v1736 = vand.u32 %v1679, 2147483648
        %v1737 = vor.u32 1.1754944e-38, %v1736
        %v1738 = vsel %vm1735, %v1737, %v1733
        %v1739 = vmul.f32 1.0, %v1738
        %v1740 = vmul.f32 %v1724, %v1620
        %v1741 = vmul.f32 %v1694, %v1709
        %v1742 = vadd.f32 %v1740, %v1741
        %v1743 = vtanh.pop %v1742
        %v1744 = vmul.f32 %v1739, %v1743
        %s1745 = scalar_lea.vmem %s233, 32 [#allocation8]
        %1746 = vst [vmem:[%s1745] sm:$0xff] %v1744
        %1747 = vrot.lane.b32.xlu0 %v1744, 1
        %v1748 = vpop.permute.xlu0 %1747
        %v1749 = vsel %vm1121, 0.0, %v1748
        %1750 = vrot.lane.b32.xlu0 %v1744, 127
        %v1751 = vpop.permute.xlu0 %1750
        %v1752 = vsel %vm1122, 0.0, %v1751
        %v1753 = vld [vmem:[#allocation2 + $0x28] sm:$0xff]
        %v1754 = vld [vmem:[#allocation2 + $0xa8] sm:$0xff]
        %v1755 = vld [vmem:[#allocation2 + $0x128] sm:$0xff]
        %v1756 = vld [vmem:[#allocation2 + $0x1a8] sm:$0xff]
        %1757 = vmatpush.msra.mxu0 0.0
        %1758 = vmatpush.msra.mxu0 0.0
        %1759 = vmatpush.msra.mxu0 0.0
        %1760 = vmatpush.msra.mxu0 0.0
        %1761 = vmatpush.msra.mxu0 0.0
        %1762 = vmatpush.msra.mxu0 0.0
        %1763 = vmatpush.msra.mxu0 0.0
        %1764 = vmatpush.msra.mxu0 0.0
        %1765 = vmatpush.msra.mxu0 0.0
        %1766 = vmatpush.msra.mxu0 0.0
        %1767 = vmatpush.msra.mxu0 0.0
        %1768 = vmatpush.msra.mxu0 0.0
        %1769 = vmatpush.msra.mxu0 0.0
        %1770 = vmatpush.msra.mxu0 %v1752
        %1771 = vmatpush.msra.mxu0 %v1744
        %1772 = vmatpush.msra.mxu0 %v1749
        %1773 = vmatmul.f32.gmra.mxu0 %v1137
        %v1774 = vpop.f32.mrf.mxu0
        %v1775 = vadd.f32 %v1753, %v1774
        %1776 = vmatmul.f32.gmra.mxu0 %v1140
        %v1777 = vpop.f32.mrf.mxu0
        %v1778 = vadd.f32 %v1754, %v1777
        %1779 = vmatmul.f32.gmra.mxu0 %v1143
        %v1780 = vpop.f32.mrf.mxu0
        %v1781 = vadd.f32 %v1755, %v1780
        %1782 = vmatmul.f32.gmra.mxu0 %v1146
        %v1783 = vpop.f32.mrf.mxu0
        %v1784 = vadd.f32 %v1756, %v1783
        %1785 = vdwg.mxu0
        %v1786 = vxor.u32 %v1775, 2147483648
        %v1787 = vxor.u32 %v1778, 2147483648
        %v1788 = vxor.u32 %v1781, 2147483648
        %v1789 = vxor.u32 %v1784, 2147483648
        %v1790 = vmul.f32 %v1786, 1.442695
        %v1791 = vpow.pop %v1790
        %v1792 = vmul.f32 %v1787, 1.442695
        %v1793 = vpow.pop %v1792
        %v1794 = vmul.f32 %v1788, 1.442695
        %v1795 = vpow.pop %v1794
        %v1796 = vmul.f32 %v1789, 1.442695
        %v1797 = vpow.pop %v1796
        %v1798 = vadd.f32 %v1791, 1.0
        %v1799 = vadd.f32 %v1793, 1.0
        %v1800 = vadd.f32 %v1795, 1.0
        %v1801 = vadd.f32 %v1797, 1.0
        %v1802 = vrcp.pop %v1798
        %v1803 = vmul.f32 %v1798, %v1802
        %v1804 = vsub.f32 1.0, %v1803
        %v1805 = vmul.f32 %v1802, %v1804
        %v1806 = vadd.f32 %v1802, %v1805
        %vm1807 = vweird.f32 %v1798
        %vm1808 = vweird.f32 %v1802
        %vm1809 = vmor %vm1807, %vm1808
        %v1810 = vsel %vm1809, %v1802, %v1806
        %v1811 = vand.u32 2147483647, %v1798
        %vm1812 = vcmp.eq.f32.partialorder %v1811, 8.507059e+37
        %v1813 = vand.u32 %v1798, 2147483648
        %v1814 = vor.u32 1.1754944e-38, %v1813
        %v1815 = vsel %vm1812, %v1814, %v1810
        %v1816 = vmul.f32 1.0, %v1815
        %v1817 = vrcp.pop %v1799
        %v1818 = vmul.f32 %v1799, %v1817
        %v1819 = vsub.f32 1.0, %v1818
        %v1820 = vmul.f32 %v1817, %v1819
        %v1821 = vadd.f32 %v1817, %v1820
        %vm1822 = vweird.f32 %v1799
        %vm1823 = vweird.f32 %v1817
        %vm1824 = vmor %vm1822, %vm1823
        %v1825 = vsel %vm1824, %v1817, %v1821
        %v1826 = vand.u32 2147483647, %v1799
        %vm1827 = vcmp.eq.f32.partialorder %v1826, 8.507059e+37
        %v1828 = vand.u32 %v1799, 2147483648
        %v1829 = vor.u32 1.1754944e-38, %v1828
        %v1830 = vsel %vm1827, %v1829, %v1825
        %v1831 = vmul.f32 1.0, %v1830
        %v1832 = vrcp.pop %v1800
        %v1833 = vmul.f32 %v1800, %v1832
        %v1834 = vsub.f32 1.0, %v1833
        %v1835 = vmul.f32 %v1832, %v1834
        %v1836 = vadd.f32 %v1832, %v1835
        %vm1837 = vweird.f32 %v1800
        %vm1838 = vweird.f32 %v1832
        %vm1839 = vmor %vm1837, %vm1838
        %v1840 = vsel %vm1839, %v1832, %v1836
        %v1841 = vand.u32 2147483647, %v1800
        %vm1842 = vcmp.eq.f32.partialorder %v1841, 8.507059e+37
        %v1843 = vand.u32 %v1800, 2147483648
        %v1844 = vor.u32 1.1754944e-38, %v1843
        %v1845 = vsel %vm1842, %v1844, %v1840
        %v1846 = vmul.f32 1.0, %v1845
        %v1847 = vrcp.pop %v1801
        %v1848 = vmul.f32 %v1801, %v1847
        %v1849 = vsub.f32 1.0, %v1848
        %v1850 = vmul.f32 %v1847, %v1849
        %v1851 = vadd.f32 %v1847, %v1850
        %vm1852 = vweird.f32 %v1801
        %vm1853 = vweird.f32 %v1847
        %vm1854 = vmor %vm1852, %vm1853
        %v1855 = vsel %vm1854, %v1847, %v1851
        %v1856 = vand.u32 2147483647, %v1801
        %vm1857 = vcmp.eq.f32.partialorder %v1856, 8.507059e+37
        %v1858 = vand.u32 %v1801, 2147483648
        %v1859 = vor.u32 1.1754944e-38, %v1858
        %v1860 = vsel %vm1857, %v1859, %v1855
        %v1861 = vmul.f32 1.0, %v1860
        %v1862 = vmul.f32 %v1846, %v1742
        %v1863 = vmul.f32 %v1816, %v1831
        %v1864 = vadd.f32 %v1862, %v1863
        %v1865 = vtanh.pop %v1864
        %v1866 = vmul.f32 %v1861, %v1865
        %s1867 = scalar_lea.vmem %s233, 40 [#allocation8]
        %1868 = vst [vmem:[%s1867] sm:$0xff] %v1866
        %1869 = vrot.lane.b32.xlu0 %v1866, 1
        %v1870 = vpop.permute.xlu0 %1869
        %v1871 = vsel %vm1121, 0.0, %v1870
        %1872 = vrot.lane.b32.xlu0 %v1866, 127
        %v1873 = vpop.permute.xlu0 %1872
        %v1874 = vsel %vm1122, 0.0, %v1873
        %v1875 = vld [vmem:[#allocation2 + $0x30] sm:$0xff]
        %v1876 = vld [vmem:[#allocation2 + $0xb0] sm:$0xff]
        %v1877 = vld [vmem:[#allocation2 + $0x130] sm:$0xff]
        %v1878 = vld [vmem:[#allocation2 + $0x1b0] sm:$0xff]
        %1879 = vmatpush.msra.mxu0 0.0
        %1880 = vmatpush.msra.mxu0 0.0
        %1881 = vmatpush.msra.mxu0 0.0
        %1882 = vmatpush.msra.mxu0 0.0
        %1883 = vmatpush.msra.mxu0 0.0
        %1884 = vmatpush.msra.mxu0 0.0
        %1885 = vmatpush.msra.mxu0 0.0
        %1886 = vmatpush.msra.mxu0 0.0
        %1887 = vmatpush.msra.mxu0 0.0
        %1888 = vmatpush.msra.mxu0 0.0
        %1889 = vmatpush.msra.mxu0 0.0
        %1890 = vmatpush.msra.mxu0 0.0
        %1891 = vmatpush.msra.mxu0 0.0
        %1892 = vmatpush.msra.mxu0 %v1874
        %1893 = vmatpush.msra.mxu0 %v1866
        %1894 = vmatpush.msra.mxu0 %v1871
        %1895 = vmatmul.f32.gmra.mxu0 %v1137
        %v1896 = vpop.f32.mrf.mxu0
        %v1897 = vadd.f32 %v1875, %v1896
        %1898 = vmatmul.f32.gmra.mxu0 %v1140
        %v1899 = vpop.f32.mrf.mxu0
        %v1900 = vadd.f32 %v1876, %v1899
        %1901 = vmatmul.f32.gmra.mxu0 %v1143
        %v1902 = vpop.f32.mrf.mxu0
        %v1903 = vadd.f32 %v1877, %v1902
        %1904 = vmatmul.f32.gmra.mxu0 %v1146
        %v1905 = vpop.f32.mrf.mxu0
        %v1906 = vadd.f32 %v1878, %v1905
        %1907 = vdwg.mxu0
        %v1908 = vxor.u32 %v1897, 2147483648
        %v1909 = vxor.u32 %v1900, 2147483648
        %v1910 = vxor.u32 %v1903, 2147483648
        %v1911 = vxor.u32 %v1906, 2147483648
        %v1912 = vmul.f32 %v1908, 1.442695
        %v1913 = vpow.pop %v1912
        %v1914 = vmul.f32 %v1909, 1.442695
        %v1915 = vpow.pop %v1914
        %v1916 = vmul.f32 %v1910, 1.442695
        %v1917 = vpow.pop %v1916
        %v1918 = vmul.f32 %v1911, 1.442695
        %v1919 = vpow.pop %v1918
        %v1920 = vadd.f32 %v1913, 1.0
        %v1921 = vadd.f32 %v1915, 1.0
        %v1922 = vadd.f32 %v1917, 1.0
        %v1923 = vadd.f32 %v1919, 1.0
        %v1924 = vrcp.pop %v1920
        %v1925 = vmul.f32 %v1920, %v1924
        %v1926 = vsub.f32 1.0, %v1925
        %v1927 = vmul.f32 %v1924, %v1926
        %v1928 = vadd.f32 %v1924, %v1927
        %vm1929 = vweird.f32 %v1920
        %vm1930 = vweird.f32 %v1924
        %vm1931 = vmor %vm1929, %vm1930
        %v1932 = vsel %vm1931, %v1924, %v1928
        %v1933 = vand.u32 2147483647, %v1920
        %vm1934 = vcmp.eq.f32.partialorder %v1933, 8.507059e+37
        %v1935 = vand.u32 %v1920, 2147483648
        %v1936 = vor.u32 1.1754944e-38, %v1935
        %v1937 = vsel %vm1934, %v1936, %v1932
        %v1938 = vmul.f32 1.0, %v1937
        %v1939 = vrcp.pop %v1921
        %v1940 = vmul.f32 %v1921, %v1939
        %v1941 = vsub.f32 1.0, %v1940
        %v1942 = vmul.f32 %v1939, %v1941
        %v1943 = vadd.f32 %v1939, %v1942
        %vm1944 = vweird.f32 %v1921
        %vm1945 = vweird.f32 %v1939
        %vm1946 = vmor %vm1944, %vm1945
        %v1947 = vsel %vm1946, %v1939, %v1943
        %v1948 = vand.u32 2147483647, %v1921
        %vm1949 = vcmp.eq.f32.partialorder %v1948, 8.507059e+37
        %v1950 = vand.u32 %v1921, 2147483648
        %v1951 = vor.u32 1.1754944e-38, %v1950
        %v1952 = vsel %vm1949, %v1951, %v1947
        %v1953 = vmul.f32 1.0, %v1952
        %v1954 = vrcp.pop %v1922
        %v1955 = vmul.f32 %v1922, %v1954
        %v1956 = vsub.f32 1.0, %v1955
        %v1957 = vmul.f32 %v1954, %v1956
        %v1958 = vadd.f32 %v1954, %v1957
        %vm1959 = vweird.f32 %v1922
        %vm1960 = vweird.f32 %v1954
        %vm1961 = vmor %vm1959, %vm1960
        %v1962 = vsel %vm1961, %v1954, %v1958
        %v1963 = vand.u32 2147483647, %v1922
        %vm1964 = vcmp.eq.f32.partialorder %v1963, 8.507059e+37
        %v1965 = vand.u32 %v1922, 2147483648
        %v1966 = vor.u32 1.1754944e-38, %v1965
        %v1967 = vsel %vm1964, %v1966, %v1962
        %v1968 = vmul.f32 1.0, %v1967
        %v1969 = vrcp.pop %v1923
        %v1970 = vmul.f32 %v1923, %v1969
        %v1971 = vsub.f32 1.0, %v1970
        %v1972 = vmul.f32 %v1969, %v1971
        %v1973 = vadd.f32 %v1969, %v1972
        %vm1974 = vweird.f32 %v1923
        %vm1975 = vweird.f32 %v1969
        %vm1976 = vmor %vm1974, %vm1975
        %v1977 = vsel %vm1976, %v1969, %v1973
        %v1978 = vand.u32 2147483647, %v1923
        %vm1979 = vcmp.eq.f32.partialorder %v1978, 8.507059e+37
        %v1980 = vand.u32 %v1923, 2147483648
        %v1981 = vor.u32 1.1754944e-38, %v1980
        %v1982 = vsel %vm1979, %v1981, %v1977
        %v1983 = vmul.f32 1.0, %v1982
        %v1984 = vmul.f32 %v1968, %v1864
        %v1985 = vmul.f32 %v1938, %v1953
        %v1986 = vadd.f32 %v1984, %v1985
        %v1987 = vtanh.pop %v1986
        %v1988 = vmul.f32 %v1983, %v1987
        %s1989 = scalar_lea.vmem %s233, 48 [#allocation8]
        %1990 = vst [vmem:[%s1989] sm:$0xff] %v1988
        %1991 = vrot.lane.b32.xlu0 %v1988, 1
        %v1992 = vpop.permute.xlu0 %1991
        %v1993 = vsel %vm1121, 0.0, %v1992
        %1994 = vrot.lane.b32.xlu0 %v1988, 127
        %v1995 = vpop.permute.xlu0 %1994
        %v1996 = vsel %vm1122, 0.0, %v1995
        %v1997 = vld [vmem:[#allocation2 + $0x38] sm:$0xff]
        %v1998 = vld [vmem:[#allocation2 + $0xb8] sm:$0xff]
        %v1999 = vld [vmem:[#allocation2 + $0x138] sm:$0xff]
        %v2000 = vld [vmem:[#allocation2 + $0x1b8] sm:$0xff]
        %2001 = vmatpush.msra.mxu0 0.0
        %2002 = vmatpush.msra.mxu0 0.0
        %2003 = vmatpush.msra.mxu0 0.0
        %2004 = vmatpush.msra.mxu0 0.0
        %2005 = vmatpush.msra.mxu0 0.0
        %2006 = vmatpush.msra.mxu0 0.0
        %2007 = vmatpush.msra.mxu0 0.0
        %2008 = vmatpush.msra.mxu0 0.0
        %2009 = vmatpush.msra.mxu0 0.0
        %2010 = vmatpush.msra.mxu0 0.0
        %2011 = vmatpush.msra.mxu0 0.0
        %2012 = vmatpush.msra.mxu0 0.0
        %2013 = vmatpush.msra.mxu0 0.0
        %2014 = vmatpush.msra.mxu0 %v1996
        %2015 = vmatpush.msra.mxu0 %v1988
        %2016 = vmatpush.msra.mxu0 %v1993
        %2017 = vmatmul.f32.gmra.mxu0 %v1137
        %v2018 = vpop.f32.mrf.mxu0
        %v2019 = vadd.f32 %v1997, %v2018
        %2020 = vmatmul.f32.gmra.mxu0 %v1140
        %v2021 = vpop.f32.mrf.mxu0
        %v2022 = vadd.f32 %v1998, %v2021
        %2023 = vmatmul.f32.gmra.mxu0 %v1143
        %v2024 = vpop.f32.mrf.mxu0
        %v2025 = vadd.f32 %v1999, %v2024
        %2026 = vmatmul.f32.gmra.mxu0 %v1146
        %v2027 = vpop.f32.mrf.mxu0
        %v2028 = vadd.f32 %v2000, %v2027
        %2029 = vdwg.mxu0
        %v2030 = vxor.u32 %v2019, 2147483648
        %v2031 = vxor.u32 %v2022, 2147483648
        %v2032 = vxor.u32 %v2025, 2147483648
        %v2033 = vxor.u32 %v2028, 2147483648
        %v2034 = vmul.f32 %v2030, 1.442695
        %v2035 = vpow.pop %v2034
        %v2036 = vmul.f32 %v2031, 1.442695
        %v2037 = vpow.pop %v2036
        %v2038 = vmul.f32 %v2032, 1.442695
        %v2039 = vpow.pop %v2038
        %v2040 = vmul.f32 %v2033, 1.442695
        %v2041 = vpow.pop %v2040
        %v2042 = vadd.f32 %v2035, 1.0
        %v2043 = vadd.f32 %v2037, 1.0
        %v2044 = vadd.f32 %v2039, 1.0
        %v2045 = vadd.f32 %v2041, 1.0
        %v2046 = vrcp.pop %v2042
        %v2047 = vmul.f32 %v2042, %v2046
        %v2048 = vsub.f32 1.0, %v2047
        %v2049 = vmul.f32 %v2046, %v2048
        %v2050 = vadd.f32 %v2046, %v2049
        %vm2051 = vweird.f32 %v2042
        %vm2052 = vweird.f32 %v2046
        %vm2053 = vmor %vm2051, %vm2052
        %v2054 = vsel %vm2053, %v2046, %v2050
        %v2055 = vand.u32 2147483647, %v2042
        %vm2056 = vcmp.eq.f32.partialorder %v2055, 8.507059e+37
        %v2057 = vand.u32 %v2042, 2147483648
        %v2058 = vor.u32 1.1754944e-38, %v2057
        %v2059 = vsel %vm2056, %v2058, %v2054
        %v2060 = vmul.f32 1.0, %v2059
        %v2061 = vrcp.pop %v2043
        %v2062 = vmul.f32 %v2043, %v2061
        %v2063 = vsub.f32 1.0, %v2062
        %v2064 = vmul.f32 %v2061, %v2063
        %v2065 = vadd.f32 %v2061, %v2064
        %vm2066 = vweird.f32 %v2043
        %vm2067 = vweird.f32 %v2061
        %vm2068 = vmor %vm2066, %vm2067
        %v2069 = vsel %vm2068, %v2061, %v2065
        %v2070 = vand.u32 2147483647, %v2043
        %vm2071 = vcmp.eq.f32.partialorder %v2070, 8.507059e+37
        %v2072 = vand.u32 %v2043, 2147483648
        %v2073 = vor.u32 1.1754944e-38, %v2072
        %v2074 = vsel %vm2071, %v2073, %v2069
        %v2075 = vmul.f32 1.0, %v2074
        %v2076 = vrcp.pop %v2044
        %v2077 = vmul.f32 %v2044, %v2076
        %v2078 = vsub.f32 1.0, %v2077
        %v2079 = vmul.f32 %v2076, %v2078
        %v2080 = vadd.f32 %v2076, %v2079
        %vm2081 = vweird.f32 %v2044
        %vm2082 = vweird.f32 %v2076
        %vm2083 = vmor %vm2081, %vm2082
        %v2084 = vsel %vm2083, %v2076, %v2080
        %v2085 = vand.u32 2147483647, %v2044
        %vm2086 = vcmp.eq.f32.partialorder %v2085, 8.507059e+37
        %v2087 = vand.u32 %v2044, 2147483648
        %v2088 = vor.u32 1.1754944e-38, %v2087
        %v2089 = vsel %vm2086, %v2088, %v2084
        %v2090 = vmul.f32 1.0, %v2089
        %v2091 = vrcp.pop %v2045
        %v2092 = vmul.f32 %v2045, %v2091
        %v2093 = vsub.f32 1.0, %v2092
        %v2094 = vmul.f32 %v2091, %v2093
        %v2095 = vadd.f32 %v2091, %v2094
        %vm2096 = vweird.f32 %v2045
        %vm2097 = vweird.f32 %v2091
        %vm2098 = vmor %vm2096, %vm2097
        %v2099 = vsel %vm2098, %v2091, %v2095
        %v2100 = vand.u32 2147483647, %v2045
        %vm2101 = vcmp.eq.f32.partialorder %v2100, 8.507059e+37
        %v2102 = vand.u32 %v2045, 2147483648
        %v2103 = vor.u32 1.1754944e-38, %v2102
        %v2104 = vsel %vm2101, %v2103, %v2099
        %v2105 = vmul.f32 1.0, %v2104
        %v2106 = vmul.f32 %v2090, %v1986
        %v2107 = vmul.f32 %v2060, %v2075
        %v2108 = vadd.f32 %v2106, %v2107
        %v2109 = vtanh.pop %v2108
        %v2110 = vmul.f32 %v2105, %v2109
        %s2111 = scalar_lea.vmem %s233, 56 [#allocation8]
        %2112 = vst [vmem:[%s2111] sm:$0xff] %v2110
        %2113 = vrot.lane.b32.xlu0 %v2110, 1
        %v2114 = vpop.permute.xlu0 %2113
        %v2115 = vsel %vm1121, 0.0, %v2114
        %2116 = vrot.lane.b32.xlu0 %v2110, 127
        %v2117 = vpop.permute.xlu0 %2116
        %v2118 = vsel %vm1122, 0.0, %v2117
        %v2119 = vld [vmem:[#allocation2 + $0x40] sm:$0xff]
        %v2120 = vld [vmem:[#allocation2 + $0xc0] sm:$0xff]
        %v2121 = vld [vmem:[#allocation2 + $0x140] sm:$0xff]
        %v2122 = vld [vmem:[#allocation2 + $0x1c0] sm:$0xff]
        %2123 = vmatpush.msra.mxu0 0.0
        %2124 = vmatpush.msra.mxu0 0.0
        %2125 = vmatpush.msra.mxu0 0.0
        %2126 = vmatpush.msra.mxu0 0.0
        %2127 = vmatpush.msra.mxu0 0.0
        %2128 = vmatpush.msra.mxu0 0.0
        %2129 = vmatpush.msra.mxu0 0.0
        %2130 = vmatpush.msra.mxu0 0.0
        %2131 = vmatpush.msra.mxu0 0.0
        %2132 = vmatpush.msra.mxu0 0.0
        %2133 = vmatpush.msra.mxu0 0.0
        %2134 = vmatpush.msra.mxu0 0.0
        %2135 = vmatpush.msra.mxu0 0.0
        %2136 = vmatpush.msra.mxu0 %v2118
        %2137 = vmatpush.msra.mxu0 %v2110
        %2138 = vmatpush.msra.mxu0 %v2115
        %2139 = vmatmul.f32.gmra.mxu0 %v1137
        %v2140 = vpop.f32.mrf.mxu0
        %v2141 = vadd.f32 %v2119, %v2140
        %2142 = vmatmul.f32.gmra.mxu0 %v1140
        %v2143 = vpop.f32.mrf.mxu0
        %v2144 = vadd.f32 %v2120, %v2143
        %2145 = vmatmul.f32.gmra.mxu0 %v1143
        %v2146 = vpop.f32.mrf.mxu0
        %v2147 = vadd.f32 %v2121, %v2146
        %2148 = vmatmul.f32.gmra.mxu0 %v1146
        %v2149 = vpop.f32.mrf.mxu0
        %v2150 = vadd.f32 %v2122, %v2149
        %2151 = vdwg.mxu0
        %v2152 = vxor.u32 %v2141, 2147483648
        %v2153 = vxor.u32 %v2144, 2147483648
        %v2154 = vxor.u32 %v2147, 2147483648
        %v2155 = vxor.u32 %v2150, 2147483648
        %v2156 = vmul.f32 %v2152, 1.442695
        %v2157 = vpow.pop %v2156
        %v2158 = vmul.f32 %v2153, 1.442695
        %v2159 = vpow.pop %v2158
        %v2160 = vmul.f32 %v2154, 1.442695
        %v2161 = vpow.pop %v2160
        %v2162 = vmul.f32 %v2155, 1.442695
        %v2163 = vpow.pop %v2162
        %v2164 = vadd.f32 %v2157, 1.0
        %v2165 = vadd.f32 %v2159, 1.0
        %v2166 = vadd.f32 %v2161, 1.0
        %v2167 = vadd.f32 %v2163, 1.0
        %v2168 = vrcp.pop %v2164
        %v2169 = vmul.f32 %v2164, %v2168
        %v2170 = vsub.f32 1.0, %v2169
        %v2171 = vmul.f32 %v2168, %v2170
        %v2172 = vadd.f32 %v2168, %v2171
        %vm2173 = vweird.f32 %v2164
        %vm2174 = vweird.f32 %v2168
        %vm2175 = vmor %vm2173, %vm2174
        %v2176 = vsel %vm2175, %v2168, %v2172
        %v2177 = vand.u32 2147483647, %v2164
        %vm2178 = vcmp.eq.f32.partialorder %v2177, 8.507059e+37
        %v2179 = vand.u32 %v2164, 2147483648
        %v2180 = vor.u32 1.1754944e-38, %v2179
        %v2181 = vsel %vm2178, %v2180, %v2176
        %v2182 = vmul.f32 1.0, %v2181
        %v2183 = vrcp.pop %v2165
        %v2184 = vmul.f32 %v2165, %v2183
        %v2185 = vsub.f32 1.0, %v2184
        %v2186 = vmul.f32 %v2183, %v2185
        %v2187 = vadd.f32 %v2183, %v2186
        %vm2188 = vweird.f32 %v2165
        %vm2189 = vweird.f32 %v2183
        %vm2190 = vmor %vm2188, %vm2189
        %v2191 = vsel %vm2190, %v2183, %v2187
        %v2192 = vand.u32 2147483647, %v2165
        %vm2193 = vcmp.eq.f32.partialorder %v2192, 8.507059e+37
        %v2194 = vand.u32 %v2165, 2147483648
        %v2195 = vor.u32 1.1754944e-38, %v2194
        %v2196 = vsel %vm2193, %v2195, %v2191
        %v2197 = vmul.f32 1.0, %v2196
        %v2198 = vrcp.pop %v2166
        %v2199 = vmul.f32 %v2166, %v2198
        %v2200 = vsub.f32 1.0, %v2199
        %v2201 = vmul.f32 %v2198, %v2200
        %v2202 = vadd.f32 %v2198, %v2201
        %vm2203 = vweird.f32 %v2166
        %vm2204 = vweird.f32 %v2198
        %vm2205 = vmor %vm2203, %vm2204
        %v2206 = vsel %vm2205, %v2198, %v2202
        %v2207 = vand.u32 2147483647, %v2166
        %vm2208 = vcmp.eq.f32.partialorder %v2207, 8.507059e+37
        %v2209 = vand.u32 %v2166, 2147483648
        %v2210 = vor.u32 1.1754944e-38, %v2209
        %v2211 = vsel %vm2208, %v2210, %v2206
        %v2212 = vmul.f32 1.0, %v2211
        %v2213 = vrcp.pop %v2167
        %v2214 = vmul.f32 %v2167, %v2213
        %v2215 = vsub.f32 1.0, %v2214
        %v2216 = vmul.f32 %v2213, %v2215
        %v2217 = vadd.f32 %v2213, %v2216
        %vm2218 = vweird.f32 %v2167
        %vm2219 = vweird.f32 %v2213
        %vm2220 = vmor %vm2218, %vm2219
        %v2221 = vsel %vm2220, %v2213, %v2217
        %v2222 = vand.u32 2147483647, %v2167
        %vm2223 = vcmp.eq.f32.partialorder %v2222, 8.507059e+37
        %v2224 = vand.u32 %v2167, 2147483648
        %v2225 = vor.u32 1.1754944e-38, %v2224
        %v2226 = vsel %vm2223, %v2225, %v2221
        %v2227 = vmul.f32 1.0, %v2226
        %v2228 = vmul.f32 %v2212, %v2108
        %v2229 = vmul.f32 %v2182, %v2197
        %v2230 = vadd.f32 %v2228, %v2229
        %v2231 = vtanh.pop %v2230
        %v2232 = vmul.f32 %v2227, %v2231
        %s2233 = scalar_lea.vmem %s233, 64 [#allocation8]
        %2234 = vst [vmem:[%s2233] sm:$0xff] %v2232
        %2235 = vrot.lane.b32.xlu0 %v2232, 1
        %v2236 = vpop.permute.xlu0 %2235
        %v2237 = vsel %vm1121, 0.0, %v2236
        %2238 = vrot.lane.b32.xlu0 %v2232, 127
        %v2239 = vpop.permute.xlu0 %2238
        %v2240 = vsel %vm1122, 0.0, %v2239
        %v2241 = vld [vmem:[#allocation2 + $0x48] sm:$0xff]
        %v2242 = vld [vmem:[#allocation2 + $0xc8] sm:$0xff]
        %v2243 = vld [vmem:[#allocation2 + $0x148] sm:$0xff]
        %v2244 = vld [vmem:[#allocation2 + $0x1c8] sm:$0xff]
        %2245 = vmatpush.msra.mxu0 0.0
        %2246 = vmatpush.msra.mxu0 0.0
        %2247 = vmatpush.msra.mxu0 0.0
        %2248 = vmatpush.msra.mxu0 0.0
        %2249 = vmatpush.msra.mxu0 0.0
        %2250 = vmatpush.msra.mxu0 0.0
        %2251 = vmatpush.msra.mxu0 0.0
        %2252 = vmatpush.msra.mxu0 0.0
        %2253 = vmatpush.msra.mxu0 0.0
        %2254 = vmatpush.msra.mxu0 0.0
        %2255 = vmatpush.msra.mxu0 0.0
        %2256 = vmatpush.msra.mxu0 0.0
        %2257 = vmatpush.msra.mxu0 0.0
        %2258 = vmatpush.msra.mxu0 %v2240
        %2259 = vmatpush.msra.mxu0 %v2232
        %2260 = vmatpush.msra.mxu0 %v2237
        %2261 = vmatmul.f32.gmra.mxu0 %v1137
        %v2262 = vpop.f32.mrf.mxu0
        %v2263 = vadd.f32 %v2241, %v2262
        %2264 = vmatmul.f32.gmra.mxu0 %v1140
        %v2265 = vpop.f32.mrf.mxu0
        %v2266 = vadd.f32 %v2242, %v2265
        %2267 = vmatmul.f32.gmra.mxu0 %v1143
        %v2268 = vpop.f32.mrf.mxu0
        %v2269 = vadd.f32 %v2243, %v2268
        %2270 = vmatmul.f32.gmra.mxu0 %v1146
        %v2271 = vpop.f32.mrf.mxu0
        %v2272 = vadd.f32 %v2244, %v2271
        %2273 = vdwg.mxu0
        %v2274 = vxor.u32 %v2263, 2147483648
        %v2275 = vxor.u32 %v2266, 2147483648
        %v2276 = vxor.u32 %v2269, 2147483648
        %v2277 = vxor.u32 %v2272, 2147483648
        %v2278 = vmul.f32 %v2274, 1.442695
        %v2279 = vpow.pop %v2278
        %v2280 = vmul.f32 %v2275, 1.442695
        %v2281 = vpow.pop %v2280
        %v2282 = vmul.f32 %v2276, 1.442695
        %v2283 = vpow.pop %v2282
        %v2284 = vmul.f32 %v2277, 1.442695
        %v2285 = vpow.pop %v2284
        %v2286 = vadd.f32 %v2279, 1.0
        %v2287 = vadd.f32 %v2281, 1.0
        %v2288 = vadd.f32 %v2283, 1.0
        %v2289 = vadd.f32 %v2285, 1.0
        %v2290 = vrcp.pop %v2286
        %v2291 = vmul.f32 %v2286, %v2290
        %v2292 = vsub.f32 1.0, %v2291
        %v2293 = vmul.f32 %v2290, %v2292
        %v2294 = vadd.f32 %v2290, %v2293
        %vm2295 = vweird.f32 %v2286
        %vm2296 = vweird.f32 %v2290
        %vm2297 = vmor %vm2295, %vm2296
        %v2298 = vsel %vm2297, %v2290, %v2294
        %v2299 = vand.u32 2147483647, %v2286
        %vm2300 = vcmp.eq.f32.partialorder %v2299, 8.507059e+37
        %v2301 = vand.u32 %v2286, 2147483648
        %v2302 = vor.u32 1.1754944e-38, %v2301
        %v2303 = vsel %vm2300, %v2302, %v2298
        %v2304 = vmul.f32 1.0, %v2303
        %v2305 = vrcp.pop %v2287
        %v2306 = vmul.f32 %v2287, %v2305
        %v2307 = vsub.f32 1.0, %v2306
        %v2308 = vmul.f32 %v2305, %v2307
        %v2309 = vadd.f32 %v2305, %v2308
        %vm2310 = vweird.f32 %v2287
        %vm2311 = vweird.f32 %v2305
        %vm2312 = vmor %vm2310, %vm2311
        %v2313 = vsel %vm2312, %v2305, %v2309
        %v2314 = vand.u32 2147483647, %v2287
        %vm2315 = vcmp.eq.f32.partialorder %v2314, 8.507059e+37
        %v2316 = vand.u32 %v2287, 2147483648
        %v2317 = vor.u32 1.1754944e-38, %v2316
        %v2318 = vsel %vm2315, %v2317, %v2313
        %v2319 = vmul.f32 1.0, %v2318
        %v2320 = vrcp.pop %v2288
        %v2321 = vmul.f32 %v2288, %v2320
        %v2322 = vsub.f32 1.0, %v2321
        %v2323 = vmul.f32 %v2320, %v2322
        %v2324 = vadd.f32 %v2320, %v2323
        %vm2325 = vweird.f32 %v2288
        %vm2326 = vweird.f32 %v2320
        %vm2327 = vmor %vm2325, %vm2326
        %v2328 = vsel %vm2327, %v2320, %v2324
        %v2329 = vand.u32 2147483647, %v2288
        %vm2330 = vcmp.eq.f32.partialorder %v2329, 8.507059e+37
        %v2331 = vand.u32 %v2288, 2147483648
        %v2332 = vor.u32 1.1754944e-38, %v2331
        %v2333 = vsel %vm2330, %v2332, %v2328
        %v2334 = vmul.f32 1.0, %v2333
        %v2335 = vrcp.pop %v2289
        %v2336 = vmul.f32 %v2289, %v2335
        %v2337 = vsub.f32 1.0, %v2336
        %v2338 = vmul.f32 %v2335, %v2337
        %v2339 = vadd.f32 %v2335, %v2338
        %vm2340 = vweird.f32 %v2289
        %vm2341 = vweird.f32 %v2335
        %vm2342 = vmor %vm2340, %vm2341
        %v2343 = vsel %vm2342, %v2335, %v2339
        %v2344 = vand.u32 2147483647, %v2289
        %vm2345 = vcmp.eq.f32.partialorder %v2344, 8.507059e+37
        %v2346 = vand.u32 %v2289, 2147483648
        %v2347 = vor.u32 1.1754944e-38, %v2346
        %v2348 = vsel %vm2345, %v2347, %v2343
        %v2349 = vmul.f32 1.0, %v2348
        %v2350 = vmul.f32 %v2334, %v2230
        %v2351 = vmul.f32 %v2304, %v2319
        %v2352 = vadd.f32 %v2350, %v2351
        %v2353 = vtanh.pop %v2352
        %v2354 = vmul.f32 %v2349, %v2353
        %s2355 = scalar_lea.vmem %s233, 72 [#allocation8]
        %2356 = vst [vmem:[%s2355] sm:$0xff] %v2354
        %2357 = vrot.lane.b32.xlu0 %v2354, 1
        %v2358 = vpop.permute.xlu0 %2357
        %v2359 = vsel %vm1121, 0.0, %v2358
        %2360 = vrot.lane.b32.xlu0 %v2354, 127
        %v2361 = vpop.permute.xlu0 %2360
        %v2362 = vsel %vm1122, 0.0, %v2361
        %v2363 = vld [vmem:[#allocation2 + $0x50] sm:$0xff]
        %v2364 = vld [vmem:[#allocation2 + $0xd0] sm:$0xff]
        %v2365 = vld [vmem:[#allocation2 + $0x150] sm:$0xff]
        %v2366 = vld [vmem:[#allocation2 + $0x1d0] sm:$0xff]
        %2367 = vmatpush.msra.mxu0 0.0
        %2368 = vmatpush.msra.mxu0 0.0
        %2369 = vmatpush.msra.mxu0 0.0
        %2370 = vmatpush.msra.mxu0 0.0
        %2371 = vmatpush.msra.mxu0 0.0
        %2372 = vmatpush.msra.mxu0 0.0
        %2373 = vmatpush.msra.mxu0 0.0
        %2374 = vmatpush.msra.mxu0 0.0
        %2375 = vmatpush.msra.mxu0 0.0
        %2376 = vmatpush.msra.mxu0 0.0
        %2377 = vmatpush.msra.mxu0 0.0
        %2378 = vmatpush.msra.mxu0 0.0
        %2379 = vmatpush.msra.mxu0 0.0
        %2380 = vmatpush.msra.mxu0 %v2362
        %2381 = vmatpush.msra.mxu0 %v2354
        %2382 = vmatpush.msra.mxu0 %v2359
        %2383 = vmatmul.f32.gmra.mxu0 %v1137
        %v2384 = vpop.f32.mrf.mxu0
        %v2385 = vadd.f32 %v2363, %v2384
        %2386 = vmatmul.f32.gmra.mxu0 %v1140
        %v2387 = vpop.f32.mrf.mxu0
        %v2388 = vadd.f32 %v2364, %v2387
        %2389 = vmatmul.f32.gmra.mxu0 %v1143
        %v2390 = vpop.f32.mrf.mxu0
        %v2391 = vadd.f32 %v2365, %v2390
        %2392 = vmatmul.f32.gmra.mxu0 %v1146
        %v2393 = vpop.f32.mrf.mxu0
        %v2394 = vadd.f32 %v2366, %v2393
        %2395 = vdwg.mxu0
        %v2396 = vxor.u32 %v2385, 2147483648
        %v2397 = vxor.u32 %v2388, 2147483648
        %v2398 = vxor.u32 %v2391, 2147483648
        %v2399 = vxor.u32 %v2394, 2147483648
        %v2400 = vmul.f32 %v2396, 1.442695
        %v2401 = vpow.pop %v2400
        %v2402 = vmul.f32 %v2397, 1.442695
        %v2403 = vpow.pop %v2402
        %v2404 = vmul.f32 %v2398, 1.442695
        %v2405 = vpow.pop %v2404
        %v2406 = vmul.f32 %v2399, 1.442695
        %v2407 = vpow.pop %v2406
        %v2408 = vadd.f32 %v2401, 1.0
        %v2409 = vadd.f32 %v2403, 1.0
        %v2410 = vadd.f32 %v2405, 1.0
        %v2411 = vadd.f32 %v2407, 1.0
        %v2412 = vrcp.pop %v2408
        %v2413 = vmul.f32 %v2408, %v2412
        %v2414 = vsub.f32 1.0, %v2413
        %v2415 = vmul.f32 %v2412, %v2414
        %v2416 = vadd.f32 %v2412, %v2415
        %vm2417 = vweird.f32 %v2408
        %vm2418 = vweird.f32 %v2412
        %vm2419 = vmor %vm2417, %vm2418
        %v2420 = vsel %vm2419, %v2412, %v2416
        %v2421 = vand.u32 2147483647, %v2408
        %vm2422 = vcmp.eq.f32.partialorder %v2421, 8.507059e+37
        %v2423 = vand.u32 %v2408, 2147483648
        %v2424 = vor.u32 1.1754944e-38, %v2423
        %v2425 = vsel %vm2422, %v2424, %v2420
        %v2426 = vmul.f32 1.0, %v2425
        %v2427 = vrcp.pop %v2409
        %v2428 = vmul.f32 %v2409, %v2427
        %v2429 = vsub.f32 1.0, %v2428
        %v2430 = vmul.f32 %v2427, %v2429
        %v2431 = vadd.f32 %v2427, %v2430
        %vm2432 = vweird.f32 %v2409
        %vm2433 = vweird.f32 %v2427
        %vm2434 = vmor %vm2432, %vm2433
        %v2435 = vsel %vm2434, %v2427, %v2431
        %v2436 = vand.u32 2147483647, %v2409
        %vm2437 = vcmp.eq.f32.partialorder %v2436, 8.507059e+37
        %v2438 = vand.u32 %v2409, 2147483648
        %v2439 = vor.u32 1.1754944e-38, %v2438
        %v2440 = vsel %vm2437, %v2439, %v2435
        %v2441 = vmul.f32 1.0, %v2440
        %v2442 = vrcp.pop %v2410
        %v2443 = vmul.f32 %v2410, %v2442
        %v2444 = vsub.f32 1.0, %v2443
        %v2445 = vmul.f32 %v2442, %v2444
        %v2446 = vadd.f32 %v2442, %v2445
        %vm2447 = vweird.f32 %v2410
        %vm2448 = vweird.f32 %v2442
        %vm2449 = vmor %vm2447, %vm2448
        %v2450 = vsel %vm2449, %v2442, %v2446
        %v2451 = vand.u32 2147483647, %v2410
        %vm2452 = vcmp.eq.f32.partialorder %v2451, 8.507059e+37
        %v2453 = vand.u32 %v2410, 2147483648
        %v2454 = vor.u32 1.1754944e-38, %v2453
        %v2455 = vsel %vm2452, %v2454, %v2450
        %v2456 = vmul.f32 1.0, %v2455
        %v2457 = vrcp.pop %v2411
        %v2458 = vmul.f32 %v2411, %v2457
        %v2459 = vsub.f32 1.0, %v2458
        %v2460 = vmul.f32 %v2457, %v2459
        %v2461 = vadd.f32 %v2457, %v2460
        %vm2462 = vweird.f32 %v2411
        %vm2463 = vweird.f32 %v2457
        %vm2464 = vmor %vm2462, %vm2463
        %v2465 = vsel %vm2464, %v2457, %v2461
        %v2466 = vand.u32 2147483647, %v2411
        %vm2467 = vcmp.eq.f32.partialorder %v2466, 8.507059e+37
        %v2468 = vand.u32 %v2411, 2147483648
        %v2469 = vor.u32 1.1754944e-38, %v2468
        %v2470 = vsel %vm2467, %v2469, %v2465
        %v2471 = vmul.f32 1.0, %v2470
        %v2472 = vmul.f32 %v2456, %v2352
        %v2473 = vmul.f32 %v2426, %v2441
        %v2474 = vadd.f32 %v2472, %v2473
        %v2475 = vtanh.pop %v2474
        %v2476 = vmul.f32 %v2471, %v2475
        %s2477 = scalar_lea.vmem %s233, 80 [#allocation8]
        %2478 = vst [vmem:[%s2477] sm:$0xff] %v2476
        %2479 = vrot.lane.b32.xlu0 %v2476, 1
        %v2480 = vpop.permute.xlu0 %2479
        %v2481 = vsel %vm1121, 0.0, %v2480
        %2482 = vrot.lane.b32.xlu0 %v2476, 127
        %v2483 = vpop.permute.xlu0 %2482
        %v2484 = vsel %vm1122, 0.0, %v2483
        %v2485 = vld [vmem:[#allocation2 + $0x58] sm:$0xff]
        %v2486 = vld [vmem:[#allocation2 + $0xd8] sm:$0xff]
        %v2487 = vld [vmem:[#allocation2 + $0x158] sm:$0xff]
        %v2488 = vld [vmem:[#allocation2 + $0x1d8] sm:$0xff]
        %2489 = vmatpush.msra.mxu0 0.0
        %2490 = vmatpush.msra.mxu0 0.0
        %2491 = vmatpush.msra.mxu0 0.0
        %2492 = vmatpush.msra.mxu0 0.0
        %2493 = vmatpush.msra.mxu0 0.0
        %2494 = vmatpush.msra.mxu0 0.0
        %2495 = vmatpush.msra.mxu0 0.0
        %2496 = vmatpush.msra.mxu0 0.0
        %2497 = vmatpush.msra.mxu0 0.0
        %2498 = vmatpush.msra.mxu0 0.0
        %2499 = vmatpush.msra.mxu0 0.0
        %2500 = vmatpush.msra.mxu0 0.0
        %2501 = vmatpush.msra.mxu0 0.0
        %2502 = vmatpush.msra.mxu0 %v2484
        %2503 = vmatpush.msra.mxu0 %v2476
        %2504 = vmatpush.msra.mxu0 %v2481
        %2505 = vmatmul.f32.gmra.mxu0 %v1137
        %v2506 = vpop.f32.mrf.mxu0
        %v2507 = vadd.f32 %v2485, %v2506
        %2508 = vmatmul.f32.gmra.mxu0 %v1140
        %v2509 = vpop.f32.mrf.mxu0
        %v2510 = vadd.f32 %v2486, %v2509
        %2511 = vmatmul.f32.gmra.mxu0 %v1143
        %v2512 = vpop.f32.mrf.mxu0
        %v2513 = vadd.f32 %v2487, %v2512
        %2514 = vmatmul.f32.gmra.mxu0 %v1146
        %v2515 = vpop.f32.mrf.mxu0
        %v2516 = vadd.f32 %v2488, %v2515
        %2517 = vdwg.mxu0
        %v2518 = vxor.u32 %v2507, 2147483648
        %v2519 = vxor.u32 %v2510, 2147483648
        %v2520 = vxor.u32 %v2513, 2147483648
        %v2521 = vxor.u32 %v2516, 2147483648
        %v2522 = vmul.f32 %v2518, 1.442695
        %v2523 = vpow.pop %v2522
        %v2524 = vmul.f32 %v2519, 1.442695
        %v2525 = vpow.pop %v2524
        %v2526 = vmul.f32 %v2520, 1.442695
        %v2527 = vpow.pop %v2526
        %v2528 = vmul.f32 %v2521, 1.442695
        %v2529 = vpow.pop %v2528
        %v2530 = vadd.f32 %v2523, 1.0
        %v2531 = vadd.f32 %v2525, 1.0
        %v2532 = vadd.f32 %v2527, 1.0
        %v2533 = vadd.f32 %v2529, 1.0
        %v2534 = vrcp.pop %v2530
        %v2535 = vmul.f32 %v2530, %v2534
        %v2536 = vsub.f32 1.0, %v2535
        %v2537 = vmul.f32 %v2534, %v2536
        %v2538 = vadd.f32 %v2534, %v2537
        %vm2539 = vweird.f32 %v2530
        %vm2540 = vweird.f32 %v2534
        %vm2541 = vmor %vm2539, %vm2540
        %v2542 = vsel %vm2541, %v2534, %v2538
        %v2543 = vand.u32 2147483647, %v2530
        %vm2544 = vcmp.eq.f32.partialorder %v2543, 8.507059e+37
        %v2545 = vand.u32 %v2530, 2147483648
        %v2546 = vor.u32 1.1754944e-38, %v2545
        %v2547 = vsel %vm2544, %v2546, %v2542
        %v2548 = vmul.f32 1.0, %v2547
        %v2549 = vrcp.pop %v2531
        %v2550 = vmul.f32 %v2531, %v2549
        %v2551 = vsub.f32 1.0, %v2550
        %v2552 = vmul.f32 %v2549, %v2551
        %v2553 = vadd.f32 %v2549, %v2552
        %vm2554 = vweird.f32 %v2531
        %vm2555 = vweird.f32 %v2549
        %vm2556 = vmor %vm2554, %vm2555
        %v2557 = vsel %vm2556, %v2549, %v2553
        %v2558 = vand.u32 2147483647, %v2531
        %vm2559 = vcmp.eq.f32.partialorder %v2558, 8.507059e+37
        %v2560 = vand.u32 %v2531, 2147483648
        %v2561 = vor.u32 1.1754944e-38, %v2560
        %v2562 = vsel %vm2559, %v2561, %v2557
        %v2563 = vmul.f32 1.0, %v2562
        %v2564 = vrcp.pop %v2532
        %v2565 = vmul.f32 %v2532, %v2564
        %v2566 = vsub.f32 1.0, %v2565
        %v2567 = vmul.f32 %v2564, %v2566
        %v2568 = vadd.f32 %v2564, %v2567
        %vm2569 = vweird.f32 %v2532
        %vm2570 = vweird.f32 %v2564
        %vm2571 = vmor %vm2569, %vm2570
        %v2572 = vsel %vm2571, %v2564, %v2568
        %v2573 = vand.u32 2147483647, %v2532
        %vm2574 = vcmp.eq.f32.partialorder %v2573, 8.507059e+37
        %v2575 = vand.u32 %v2532, 2147483648
        %v2576 = vor.u32 1.1754944e-38, %v2575
        %v2577 = vsel %vm2574, %v2576, %v2572
        %v2578 = vmul.f32 1.0, %v2577
        %v2579 = vrcp.pop %v2533
        %v2580 = vmul.f32 %v2533, %v2579
        %v2581 = vsub.f32 1.0, %v2580
        %v2582 = vmul.f32 %v2579, %v2581
        %v2583 = vadd.f32 %v2579, %v2582
        %vm2584 = vweird.f32 %v2533
        %vm2585 = vweird.f32 %v2579
        %vm2586 = vmor %vm2584, %vm2585
        %v2587 = vsel %vm2586, %v2579, %v2583
        %v2588 = vand.u32 2147483647, %v2533
        %vm2589 = vcmp.eq.f32.partialorder %v2588, 8.507059e+37
        %v2590 = vand.u32 %v2533, 2147483648
        %v2591 = vor.u32 1.1754944e-38, %v2590
        %v2592 = vsel %vm2589, %v2591, %v2587
        %v2593 = vmul.f32 1.0, %v2592
        %v2594 = vmul.f32 %v2578, %v2474
        %v2595 = vmul.f32 %v2548, %v2563
        %v2596 = vadd.f32 %v2594, %v2595
        %v2597 = vtanh.pop %v2596
        %v2598 = vmul.f32 %v2593, %v2597
        %s2599 = scalar_lea.vmem %s233, 88 [#allocation8]
        %2600 = vst [vmem:[%s2599] sm:$0xff] %v2598
        %2601 = vrot.lane.b32.xlu0 %v2598, 1
        %v2602 = vpop.permute.xlu0 %2601
        %v2603 = vsel %vm1121, 0.0, %v2602
        %2604 = vrot.lane.b32.xlu0 %v2598, 127
        %v2605 = vpop.permute.xlu0 %2604
        %v2606 = vsel %vm1122, 0.0, %v2605
        %v2607 = vld [vmem:[#allocation2 + $0x60] sm:$0xff]
        %v2608 = vld [vmem:[#allocation2 + $0xe0] sm:$0xff]
        %v2609 = vld [vmem:[#allocation2 + $0x160] sm:$0xff]
        %v2610 = vld [vmem:[#allocation2 + $0x1e0] sm:$0xff]
        %2611 = vmatpush.msra.mxu0 0.0
        %2612 = vmatpush.msra.mxu0 0.0
        %2613 = vmatpush.msra.mxu0 0.0
        %2614 = vmatpush.msra.mxu0 0.0
        %2615 = vmatpush.msra.mxu0 0.0
        %2616 = vmatpush.msra.mxu0 0.0
        %2617 = vmatpush.msra.mxu0 0.0
        %2618 = vmatpush.msra.mxu0 0.0
        %2619 = vmatpush.msra.mxu0 0.0
        %2620 = vmatpush.msra.mxu0 0.0
        %2621 = vmatpush.msra.mxu0 0.0
        %2622 = vmatpush.msra.mxu0 0.0
        %2623 = vmatpush.msra.mxu0 0.0
        %2624 = vmatpush.msra.mxu0 %v2606
        %2625 = vmatpush.msra.mxu0 %v2598
        %2626 = vmatpush.msra.mxu0 %v2603
        %2627 = vmatmul.f32.gmra.mxu0 %v1137
        %v2628 = vpop.f32.mrf.mxu0
        %v2629 = vadd.f32 %v2607, %v2628
        %2630 = vmatmul.f32.gmra.mxu0 %v1140
        %v2631 = vpop.f32.mrf.mxu0
        %v2632 = vadd.f32 %v2608, %v2631
        %2633 = vmatmul.f32.gmra.mxu0 %v1143
        %v2634 = vpop.f32.mrf.mxu0
        %v2635 = vadd.f32 %v2609, %v2634
        %2636 = vmatmul.f32.gmra.mxu0 %v1146
        %v2637 = vpop.f32.mrf.mxu0
        %v2638 = vadd.f32 %v2610, %v2637
        %2639 = vdwg.mxu0
        %v2640 = vxor.u32 %v2629, 2147483648
        %v2641 = vxor.u32 %v2632, 2147483648
        %v2642 = vxor.u32 %v2635, 2147483648
        %v2643 = vxor.u32 %v2638, 2147483648
        %v2644 = vmul.f32 %v2640, 1.442695
        %v2645 = vpow.pop %v2644
        %v2646 = vmul.f32 %v2641, 1.442695
        %v2647 = vpow.pop %v2646
        %v2648 = vmul.f32 %v2642, 1.442695
        %v2649 = vpow.pop %v2648
        %v2650 = vmul.f32 %v2643, 1.442695
        %v2651 = vpow.pop %v2650
        %v2652 = vadd.f32 %v2645, 1.0
        %v2653 = vadd.f32 %v2647, 1.0
        %v2654 = vadd.f32 %v2649, 1.0
        %v2655 = vadd.f32 %v2651, 1.0
        %v2656 = vrcp.pop %v2652
        %v2657 = vmul.f32 %v2652, %v2656
        %v2658 = vsub.f32 1.0, %v2657
        %v2659 = vmul.f32 %v2656, %v2658
        %v2660 = vadd.f32 %v2656, %v2659
        %vm2661 = vweird.f32 %v2652
        %vm2662 = vweird.f32 %v2656
        %vm2663 = vmor %vm2661, %vm2662
        %v2664 = vsel %vm2663, %v2656, %v2660
        %v2665 = vand.u32 2147483647, %v2652
        %vm2666 = vcmp.eq.f32.partialorder %v2665, 8.507059e+37
        %v2667 = vand.u32 %v2652, 2147483648
        %v2668 = vor.u32 1.1754944e-38, %v2667
        %v2669 = vsel %vm2666, %v2668, %v2664
        %v2670 = vmul.f32 1.0, %v2669
        %v2671 = vrcp.pop %v2653
        %v2672 = vmul.f32 %v2653, %v2671
        %v2673 = vsub.f32 1.0, %v2672
        %v2674 = vmul.f32 %v2671, %v2673
        %v2675 = vadd.f32 %v2671, %v2674
        %vm2676 = vweird.f32 %v2653
        %vm2677 = vweird.f32 %v2671
        %vm2678 = vmor %vm2676, %vm2677
        %v2679 = vsel %vm2678, %v2671, %v2675
        %v2680 = vand.u32 2147483647, %v2653
        %vm2681 = vcmp.eq.f32.partialorder %v2680, 8.507059e+37
        %v2682 = vand.u32 %v2653, 2147483648
        %v2683 = vor.u32 1.1754944e-38, %v2682
        %v2684 = vsel %vm2681, %v2683, %v2679
        %v2685 = vmul.f32 1.0, %v2684
        %v2686 = vrcp.pop %v2654
        %v2687 = vmul.f32 %v2654, %v2686
        %v2688 = vsub.f32 1.0, %v2687
        %v2689 = vmul.f32 %v2686, %v2688
        %v2690 = vadd.f32 %v2686, %v2689
        %vm2691 = vweird.f32 %v2654
        %vm2692 = vweird.f32 %v2686
        %vm2693 = vmor %vm2691, %vm2692
        %v2694 = vsel %vm2693, %v2686, %v2690
        %v2695 = vand.u32 2147483647, %v2654
        %vm2696 = vcmp.eq.f32.partialorder %v2695, 8.507059e+37
        %v2697 = vand.u32 %v2654, 2147483648
        %v2698 = vor.u32 1.1754944e-38, %v2697
        %v2699 = vsel %vm2696, %v2698, %v2694
        %v2700 = vmul.f32 1.0, %v2699
        %v2701 = vrcp.pop %v2655
        %v2702 = vmul.f32 %v2655, %v2701
        %v2703 = vsub.f32 1.0, %v2702
        %v2704 = vmul.f32 %v2701, %v2703
        %v2705 = vadd.f32 %v2701, %v2704
        %vm2706 = vweird.f32 %v2655
        %vm2707 = vweird.f32 %v2701
        %vm2708 = vmor %vm2706, %vm2707
        %v2709 = vsel %vm2708, %v2701, %v2705
        %v2710 = vand.u32 2147483647, %v2655
        %vm2711 = vcmp.eq.f32.partialorder %v2710, 8.507059e+37
        %v2712 = vand.u32 %v2655, 2147483648
        %v2713 = vor.u32 1.1754944e-38, %v2712
        %v2714 = vsel %vm2711, %v2713, %v2709
        %v2715 = vmul.f32 1.0, %v2714
        %v2716 = vmul.f32 %v2700, %v2596
        %v2717 = vmul.f32 %v2670, %v2685
        %v2718 = vadd.f32 %v2716, %v2717
        %v2719 = vtanh.pop %v2718
        %v2720 = vmul.f32 %v2715, %v2719
        %s2721 = scalar_lea.vmem %s233, 96 [#allocation8]
        %2722 = vst [vmem:[%s2721] sm:$0xff] %v2720
        %2723 = vrot.lane.b32.xlu0 %v2720, 1
        %v2724 = vpop.permute.xlu0 %2723
        %v2725 = vsel %vm1121, 0.0, %v2724
        %2726 = vrot.lane.b32.xlu0 %v2720, 127
        %v2727 = vpop.permute.xlu0 %2726
        %v2728 = vsel %vm1122, 0.0, %v2727
        %v2729 = vld [vmem:[#allocation2 + $0x68] sm:$0xff]
        %v2730 = vld [vmem:[#allocation2 + $0xe8] sm:$0xff]
        %v2731 = vld [vmem:[#allocation2 + $0x168] sm:$0xff]
        %v2732 = vld [vmem:[#allocation2 + $0x1e8] sm:$0xff]
        %2733 = vmatpush.msra.mxu0 0.0
        %2734 = vmatpush.msra.mxu0 0.0
        %2735 = vmatpush.msra.mxu0 0.0
        %2736 = vmatpush.msra.mxu0 0.0
        %2737 = vmatpush.msra.mxu0 0.0
        %2738 = vmatpush.msra.mxu0 0.0
        %2739 = vmatpush.msra.mxu0 0.0
        %2740 = vmatpush.msra.mxu0 0.0
        %2741 = vmatpush.msra.mxu0 0.0
        %2742 = vmatpush.msra.mxu0 0.0
        %2743 = vmatpush.msra.mxu0 0.0
        %2744 = vmatpush.msra.mxu0 0.0
        %2745 = vmatpush.msra.mxu0 0.0
        %2746 = vmatpush.msra.mxu0 %v2728
        %2747 = vmatpush.msra.mxu0 %v2720
        %2748 = vmatpush.msra.mxu0 %v2725
        %2749 = vmatmul.f32.gmra.mxu0 %v1137
        %v2750 = vpop.f32.mrf.mxu0
        %v2751 = vadd.f32 %v2729, %v2750
        %2752 = vmatmul.f32.gmra.mxu0 %v1140
        %v2753 = vpop.f32.mrf.mxu0
        %v2754 = vadd.f32 %v2730, %v2753
        %2755 = vmatmul.f32.gmra.mxu0 %v1143
        %v2756 = vpop.f32.mrf.mxu0
        %v2757 = vadd.f32 %v2731, %v2756
        %2758 = vmatmul.f32.gmra.mxu0 %v1146
        %v2759 = vpop.f32.mrf.mxu0
        %v2760 = vadd.f32 %v2732, %v2759
        %2761 = vdwg.mxu0
        %v2762 = vxor.u32 %v2751, 2147483648
        %v2763 = vxor.u32 %v2754, 2147483648
        %v2764 = vxor.u32 %v2757, 2147483648
        %v2765 = vxor.u32 %v2760, 2147483648
        %v2766 = vmul.f32 %v2762, 1.442695
        %v2767 = vpow.pop %v2766
        %v2768 = vmul.f32 %v2763, 1.442695
        %v2769 = vpow.pop %v2768
        %v2770 = vmul.f32 %v2764, 1.442695
        %v2771 = vpow.pop %v2770
        %v2772 = vmul.f32 %v2765, 1.442695
        %v2773 = vpow.pop %v2772
        %v2774 = vadd.f32 %v2767, 1.0
        %v2775 = vadd.f32 %v2769, 1.0
        %v2776 = vadd.f32 %v2771, 1.0
        %v2777 = vadd.f32 %v2773, 1.0
        %v2778 = vrcp.pop %v2774
        %v2779 = vmul.f32 %v2774, %v2778
        %v2780 = vsub.f32 1.0, %v2779
        %v2781 = vmul.f32 %v2778, %v2780
        %v2782 = vadd.f32 %v2778, %v2781
        %vm2783 = vweird.f32 %v2774
        %vm2784 = vweird.f32 %v2778
        %vm2785 = vmor %vm2783, %vm2784
        %v2786 = vsel %vm2785, %v2778, %v2782
        %v2787 = vand.u32 2147483647, %v2774
        %vm2788 = vcmp.eq.f32.partialorder %v2787, 8.507059e+37
        %v2789 = vand.u32 %v2774, 2147483648
        %v2790 = vor.u32 1.1754944e-38, %v2789
        %v2791 = vsel %vm2788, %v2790, %v2786
        %v2792 = vmul.f32 1.0, %v2791
        %v2793 = vrcp.pop %v2775
        %v2794 = vmul.f32 %v2775, %v2793
        %v2795 = vsub.f32 1.0, %v2794
        %v2796 = vmul.f32 %v2793, %v2795
        %v2797 = vadd.f32 %v2793, %v2796
        %vm2798 = vweird.f32 %v2775
        %vm2799 = vweird.f32 %v2793
        %vm2800 = vmor %vm2798, %vm2799
        %v2801 = vsel %vm2800, %v2793, %v2797
        %v2802 = vand.u32 2147483647, %v2775
        %vm2803 = vcmp.eq.f32.partialorder %v2802, 8.507059e+37
        %v2804 = vand.u32 %v2775, 2147483648
        %v2805 = vor.u32 1.1754944e-38, %v2804
        %v2806 = vsel %vm2803, %v2805, %v2801
        %v2807 = vmul.f32 1.0, %v2806
        %v2808 = vrcp.pop %v2776
        %v2809 = vmul.f32 %v2776, %v2808
        %v2810 = vsub.f32 1.0, %v2809
        %v2811 = vmul.f32 %v2808, %v2810
        %v2812 = vadd.f32 %v2808, %v2811
        %vm2813 = vweird.f32 %v2776
        %vm2814 = vweird.f32 %v2808
        %vm2815 = vmor %vm2813, %vm2814
        %v2816 = vsel %vm2815, %v2808, %v2812
        %v2817 = vand.u32 2147483647, %v2776
        %vm2818 = vcmp.eq.f32.partialorder %v2817, 8.507059e+37
        %v2819 = vand.u32 %v2776, 2147483648
        %v2820 = vor.u32 1.1754944e-38, %v2819
        %v2821 = vsel %vm2818, %v2820, %v2816
        %v2822 = vmul.f32 1.0, %v2821
        %v2823 = vrcp.pop %v2777
        %v2824 = vmul.f32 %v2777, %v2823
        %v2825 = vsub.f32 1.0, %v2824
        %v2826 = vmul.f32 %v2823, %v2825
        %v2827 = vadd.f32 %v2823, %v2826
        %vm2828 = vweird.f32 %v2777
        %vm2829 = vweird.f32 %v2823
        %vm2830 = vmor %vm2828, %vm2829
        %v2831 = vsel %vm2830, %v2823, %v2827
        %v2832 = vand.u32 2147483647, %v2777
        %vm2833 = vcmp.eq.f32.partialorder %v2832, 8.507059e+37
        %v2834 = vand.u32 %v2777, 2147483648
        %v2835 = vor.u32 1.1754944e-38, %v2834
        %v2836 = vsel %vm2833, %v2835, %v2831
        %v2837 = vmul.f32 1.0, %v2836
        %v2838 = vmul.f32 %v2822, %v2718
        %v2839 = vmul.f32 %v2792, %v2807
        %v2840 = vadd.f32 %v2838, %v2839
        %v2841 = vtanh.pop %v2840
        %v2842 = vmul.f32 %v2837, %v2841
        %s2843 = scalar_lea.vmem %s233, 104 [#allocation8]
        %2844 = vst [vmem:[%s2843] sm:$0xff] %v2842
        %2845 = vrot.lane.b32.xlu0 %v2842, 1
        %v2846 = vpop.permute.xlu0 %2845
        %v2847 = vsel %vm1121, 0.0, %v2846
        %2848 = vrot.lane.b32.xlu0 %v2842, 127
        %v2849 = vpop.permute.xlu0 %2848
        %v2850 = vsel %vm1122, 0.0, %v2849
        %v2851 = vld [vmem:[#allocation2 + $0x70] sm:$0xff]
        %v2852 = vld [vmem:[#allocation2 + $0xf0] sm:$0xff]
        %v2853 = vld [vmem:[#allocation2 + $0x170] sm:$0xff]
        %v2854 = vld [vmem:[#allocation2 + $0x1f0] sm:$0xff]
        %2855 = vmatpush.msra.mxu0 0.0
        %2856 = vmatpush.msra.mxu0 0.0
        %2857 = vmatpush.msra.mxu0 0.0
        %2858 = vmatpush.msra.mxu0 0.0
        %2859 = vmatpush.msra.mxu0 0.0
        %2860 = vmatpush.msra.mxu0 0.0
        %2861 = vmatpush.msra.mxu0 0.0
        %2862 = vmatpush.msra.mxu0 0.0
        %2863 = vmatpush.msra.mxu0 0.0
        %2864 = vmatpush.msra.mxu0 0.0
        %2865 = vmatpush.msra.mxu0 0.0
        %2866 = vmatpush.msra.mxu0 0.0
        %2867 = vmatpush.msra.mxu0 0.0
        %2868 = vmatpush.msra.mxu0 %v2850
        %2869 = vmatpush.msra.mxu0 %v2842
        %2870 = vmatpush.msra.mxu0 %v2847
        %2871 = vmatmul.f32.gmra.mxu0 %v1137
        %v2872 = vpop.f32.mrf.mxu0
        %v2873 = vadd.f32 %v2851, %v2872
        %2874 = vmatmul.f32.gmra.mxu0 %v1140
        %v2875 = vpop.f32.mrf.mxu0
        %v2876 = vadd.f32 %v2852, %v2875
        %2877 = vmatmul.f32.gmra.mxu0 %v1143
        %v2878 = vpop.f32.mrf.mxu0
        %v2879 = vadd.f32 %v2853, %v2878
        %2880 = vmatmul.f32.gmra.mxu0 %v1146
        %v2881 = vpop.f32.mrf.mxu0
        %v2882 = vadd.f32 %v2854, %v2881
        %2883 = vdwg.mxu0
        %v2884 = vxor.u32 %v2873, 2147483648
        %v2885 = vxor.u32 %v2876, 2147483648
        %v2886 = vxor.u32 %v2879, 2147483648
        %v2887 = vxor.u32 %v2882, 2147483648
        %v2888 = vmul.f32 %v2884, 1.442695
        %v2889 = vpow.pop %v2888
        %v2890 = vmul.f32 %v2885, 1.442695
        %v2891 = vpow.pop %v2890
        %v2892 = vmul.f32 %v2886, 1.442695
        %v2893 = vpow.pop %v2892
        %v2894 = vmul.f32 %v2887, 1.442695
        %v2895 = vpow.pop %v2894
        %v2896 = vadd.f32 %v2889, 1.0
        %v2897 = vadd.f32 %v2891, 1.0
        %v2898 = vadd.f32 %v2893, 1.0
        %v2899 = vadd.f32 %v2895, 1.0
        %v2900 = vrcp.pop %v2896
        %v2901 = vmul.f32 %v2896, %v2900
        %v2902 = vsub.f32 1.0, %v2901
        %v2903 = vmul.f32 %v2900, %v2902
        %v2904 = vadd.f32 %v2900, %v2903
        %vm2905 = vweird.f32 %v2896
        %vm2906 = vweird.f32 %v2900
        %vm2907 = vmor %vm2905, %vm2906
        %v2908 = vsel %vm2907, %v2900, %v2904
        %v2909 = vand.u32 2147483647, %v2896
        %vm2910 = vcmp.eq.f32.partialorder %v2909, 8.507059e+37
        %v2911 = vand.u32 %v2896, 2147483648
        %v2912 = vor.u32 1.1754944e-38, %v2911
        %v2913 = vsel %vm2910, %v2912, %v2908
        %v2914 = vmul.f32 1.0, %v2913
        %v2915 = vrcp.pop %v2897
        %v2916 = vmul.f32 %v2897, %v2915
        %v2917 = vsub.f32 1.0, %v2916
        %v2918 = vmul.f32 %v2915, %v2917
        %v2919 = vadd.f32 %v2915, %v2918
        %vm2920 = vweird.f32 %v2897
        %vm2921 = vweird.f32 %v2915
        %vm2922 = vmor %vm2920, %vm2921
        %v2923 = vsel %vm2922, %v2915, %v2919
        %v2924 = vand.u32 2147483647, %v2897
        %vm2925 = vcmp.eq.f32.partialorder %v2924, 8.507059e+37
        %v2926 = vand.u32 %v2897, 2147483648
        %v2927 = vor.u32 1.1754944e-38, %v2926
        %v2928 = vsel %vm2925, %v2927, %v2923
        %v2929 = vmul.f32 1.0, %v2928
        %v2930 = vrcp.pop %v2898
        %v2931 = vmul.f32 %v2898, %v2930
        %v2932 = vsub.f32 1.0, %v2931
        %v2933 = vmul.f32 %v2930, %v2932
        %v2934 = vadd.f32 %v2930, %v2933
        %vm2935 = vweird.f32 %v2898
        %vm2936 = vweird.f32 %v2930
        %vm2937 = vmor %vm2935, %vm2936
        %v2938 = vsel %vm2937, %v2930, %v2934
        %v2939 = vand.u32 2147483647, %v2898
        %vm2940 = vcmp.eq.f32.partialorder %v2939, 8.507059e+37
        %v2941 = vand.u32 %v2898, 2147483648
        %v2942 = vor.u32 1.1754944e-38, %v2941
        %v2943 = vsel %vm2940, %v2942, %v2938
        %v2944 = vmul.f32 1.0, %v2943
        %v2945 = vrcp.pop %v2899
        %v2946 = vmul.f32 %v2899, %v2945
        %v2947 = vsub.f32 1.0, %v2946
        %v2948 = vmul.f32 %v2945, %v2947
        %v2949 = vadd.f32 %v2945, %v2948
        %vm2950 = vweird.f32 %v2899
        %vm2951 = vweird.f32 %v2945
        %vm2952 = vmor %vm2950, %vm2951
        %v2953 = vsel %vm2952, %v2945, %v2949
        %v2954 = vand.u32 2147483647, %v2899
        %vm2955 = vcmp.eq.f32.partialorder %v2954, 8.507059e+37
        %v2956 = vand.u32 %v2899, 2147483648
        %v2957 = vor.u32 1.1754944e-38, %v2956
        %v2958 = vsel %vm2955, %v2957, %v2953
        %v2959 = vmul.f32 1.0, %v2958
        %v2960 = vmul.f32 %v2944, %v2840
        %v2961 = vmul.f32 %v2914, %v2929
        %v2962 = vadd.f32 %v2960, %v2961
        %v2963 = vtanh.pop %v2962
        %v2964 = vmul.f32 %v2959, %v2963
        %s2965 = scalar_lea.vmem %s233, 112 [#allocation8]
        %2966 = vst [vmem:[%s2965] sm:$0xff] %v2964
        %2967 = vrot.lane.b32.xlu0 %v2964, 1
        %v2968 = vpop.permute.xlu0 %2967
        %v2969 = vsel %vm1121, 0.0, %v2968
        %2970 = vrot.lane.b32.xlu0 %v2964, 127
        %v2971 = vpop.permute.xlu0 %2970
        %v2972 = vsel %vm1122, 0.0, %v2971
        %v2973 = vld [vmem:[#allocation2 + $0x78] sm:$0xff]
        %v2974 = vld [vmem:[#allocation2 + $0xf8] sm:$0xff]
        %v2975 = vld [vmem:[#allocation2 + $0x178] sm:$0xff]
        %v2976 = vld [vmem:[#allocation2 + $0x1f8] sm:$0xff]
        %2977 = vmatpush.msra.mxu0 0.0
        %2978 = vmatpush.msra.mxu0 0.0
        %2979 = vmatpush.msra.mxu0 0.0
        %2980 = vmatpush.msra.mxu0 0.0
        %2981 = vmatpush.msra.mxu0 0.0
        %2982 = vmatpush.msra.mxu0 0.0
        %2983 = vmatpush.msra.mxu0 0.0
        %2984 = vmatpush.msra.mxu0 0.0
        %2985 = vmatpush.msra.mxu0 0.0
        %2986 = vmatpush.msra.mxu0 0.0
        %2987 = vmatpush.msra.mxu0 0.0
        %2988 = vmatpush.msra.mxu0 0.0
        %2989 = vmatpush.msra.mxu0 0.0
        %2990 = vmatpush.msra.mxu0 %v2972
        %2991 = vmatpush.msra.mxu0 %v2964
        %2992 = vmatpush.msra.mxu0 %v2969
        %2993 = vmatmul.f32.gmra.mxu0 %v1137
        %v2994 = vpop.f32.mrf.mxu0
        %v2995 = vadd.f32 %v2973, %v2994
        %2996 = vmatmul.f32.gmra.mxu0 %v1140
        %v2997 = vpop.f32.mrf.mxu0
        %v2998 = vadd.f32 %v2974, %v2997
        %2999 = vmatmul.f32.gmra.mxu0 %v1143
        %v3000 = vpop.f32.mrf.mxu0
        %v3001 = vadd.f32 %v2975, %v3000
        %3002 = vmatmul.f32.gmra.mxu0 %v1146
        %v3003 = vpop.f32.mrf.mxu0
        %v3004 = vadd.f32 %v2976, %v3003
        %3005 = vdwg.mxu0
        %v3006 = vxor.u32 %v2995, 2147483648
        %v3007 = vxor.u32 %v2998, 2147483648
        %v3008 = vxor.u32 %v3001, 2147483648
        %v3009 = vxor.u32 %v3004, 2147483648
        %v3010 = vmul.f32 %v3006, 1.442695
        %v3011 = vpow.pop %v3010
        %v3012 = vmul.f32 %v3007, 1.442695
        %v3013 = vpow.pop %v3012
        %v3014 = vmul.f32 %v3008, 1.442695
        %v3015 = vpow.pop %v3014
        %v3016 = vmul.f32 %v3009, 1.442695
        %v3017 = vpow.pop %v3016
        %v3018 = vadd.f32 %v3011, 1.0
        %v3019 = vadd.f32 %v3013, 1.0
        %v3020 = vadd.f32 %v3015, 1.0
        %v3021 = vadd.f32 %v3017, 1.0
        %v3022 = vrcp.pop %v3018
        %v3023 = vmul.f32 %v3018, %v3022
        %v3024 = vsub.f32 1.0, %v3023
        %v3025 = vmul.f32 %v3022, %v3024
        %v3026 = vadd.f32 %v3022, %v3025
        %vm3027 = vweird.f32 %v3018
        %vm3028 = vweird.f32 %v3022
        %vm3029 = vmor %vm3027, %vm3028
        %v3030 = vsel %vm3029, %v3022, %v3026
        %v3031 = vand.u32 2147483647, %v3018
        %vm3032 = vcmp.eq.f32.partialorder %v3031, 8.507059e+37
        %v3033 = vand.u32 %v3018, 2147483648
        %v3034 = vor.u32 1.1754944e-38, %v3033
        %v3035 = vsel %vm3032, %v3034, %v3030
        %v3036 = vmul.f32 1.0, %v3035
        %v3037 = vrcp.pop %v3019
        %v3038 = vmul.f32 %v3019, %v3037
        %v3039 = vsub.f32 1.0, %v3038
        %v3040 = vmul.f32 %v3037, %v3039
        %v3041 = vadd.f32 %v3037, %v3040
        %vm3042 = vweird.f32 %v3019
        %vm3043 = vweird.f32 %v3037
        %vm3044 = vmor %vm3042, %vm3043
        %v3045 = vsel %vm3044, %v3037, %v3041
        %v3046 = vand.u32 2147483647, %v3019
        %vm3047 = vcmp.eq.f32.partialorder %v3046, 8.507059e+37
        %v3048 = vand.u32 %v3019, 2147483648
        %v3049 = vor.u32 1.1754944e-38, %v3048
        %v3050 = vsel %vm3047, %v3049, %v3045
        %v3051 = vmul.f32 1.0, %v3050
        %v3052 = vrcp.pop %v3020
        %v3053 = vmul.f32 %v3020, %v3052
        %v3054 = vsub.f32 1.0, %v3053
        %v3055 = vmul.f32 %v3052, %v3054
        %v3056 = vadd.f32 %v3052, %v3055
        %vm3057 = vweird.f32 %v3020
        %vm3058 = vweird.f32 %v3052
        %vm3059 = vmor %vm3057, %vm3058
        %v3060 = vsel %vm3059, %v3052, %v3056
        %v3061 = vand.u32 2147483647, %v3020
        %vm3062 = vcmp.eq.f32.partialorder %v3061, 8.507059e+37
        %v3063 = vand.u32 %v3020, 2147483648
        %v3064 = vor.u32 1.1754944e-38, %v3063
        %v3065 = vsel %vm3062, %v3064, %v3060
        %v3066 = vmul.f32 1.0, %v3065
        %v3067 = vrcp.pop %v3021
        %v3068 = vmul.f32 %v3021, %v3067
        %v3069 = vsub.f32 1.0, %v3068
        %v3070 = vmul.f32 %v3067, %v3069
        %v3071 = vadd.f32 %v3067, %v3070
        %vm3072 = vweird.f32 %v3021
        %vm3073 = vweird.f32 %v3067
        %vm3074 = vmor %vm3072, %vm3073
        %v3075 = vsel %vm3074, %v3067, %v3071
        %v3076 = vand.u32 2147483647, %v3021
        %vm3077 = vcmp.eq.f32.partialorder %v3076, 8.507059e+37
        %v3078 = vand.u32 %v3021, 2147483648
        %v3079 = vor.u32 1.1754944e-38, %v3078
        %v3080 = vsel %vm3077, %v3079, %v3075
        %v3081 = vmul.f32 1.0, %v3080
        %v3082 = vmul.f32 %v3066, %v2962
        %v3083 = vmul.f32 %v3036, %v3051
        %v3084 = vadd.f32 %v3082, %v3083
        %v3085 = vtanh.pop %v3084
        %v3086 = vmul.f32 %v3081, %v3085
        %s3087 = scalar_lea.vmem %s233, 120 [#allocation8]
        %3088 = vst [vmem:[%s3087] sm:$0xff] %v3086
        %3089 = vst [vmem:[#allocation3] sm:$0xff] %v3084
        %3090 = vst [vmem:[#allocation4] sm:$0xff] %v3086
        %s3091 = sand.u32 %s134, 1
        %s3092 = scalar_lea.sflag [#allocation7], %s3091
        %s3093 = sand.u32 %s134, 1
        %s3094 = smul.addr %s3093, 128
        %s3095 = scalar_lea.vmem [#allocation8], %s3094
        // Predicated region
        $region45: #{tpu_custom_call.1} parent=35 // pred_check
          %p3096 = pneg %p144
        $region46: #{tpu_custom_call.1} parent=35 // pred_check_branch
          %3098 = sbr.rel (%p3096) target = $region48
        $region47: #{tpu_custom_call.1} parent=35 // pred_region
          %s3099 = smul.u32 16, %s26
          %3101 = vsyncadd %s3092, 0
          %s3102 = smul.addr %s25, 16
          %s3103 = sadd.s32 %s3099, %s3102
          %s3104 = smul.addr %s3103, 8
          %s3105 = scalar_lea.hbm %s4, %s3104
          %s3106 = sshll.u32 %s3095, 4
          %s3107 = int_to_ptr.vmem [resolvable:$true] %s3106
          %s3108 = sshll.u32 %s3105, 4
          %s3109 = int_to_ptr.hbm [resolvable:$true] %s3108
          %3114 = dma.vmem_to_hbm [thread:$0]  %s3107, 2048, %s3109, %s3092, 128, 128, 8
        $region48: #{tpu_custom_call.1} parent=35 // pred_fallthru
          _
      $region36: #{tpu_custom_call.1} parent=5 // pred_fallthru
        _
      %p3115 = scmp.le.s32.totalorder 2, %s16
      // Predicated region
      $region49: #{tpu_custom_call.1} parent=5 // pred_check
        %p3116 = pneg %p3115
      $region50: #{tpu_custom_call.1} parent=5 // pred_check_branch
        %3118 = sbr.rel (%p3116) target = $region52
      $region51: #{tpu_custom_call.1} parent=5 // pred_region
        %s3119 = ssub.s32 %s16, 2
        // Predicated region
        $region53: #{tpu_custom_call.1} parent=51 // pred_check
          %p3120 = pneg %p150
        $region54: #{tpu_custom_call.1} parent=51 // pred_check_branch
          %3122 = sbr.rel (%p3120) target = $region56
        $region55: #{tpu_custom_call.1} parent=51 // pred_region
          %s3123 = sand.u32 %s135, 1
          %s3124 = scalar_lea.sflag [#allocation7], %s3123
          %s3125 = sand.u32 %s135, 1
          %s3126 = smul.addr %s3125, 128
          %s3127 = scalar_lea.vmem [#allocation8], %s3126
          %3129 = dma.done %s3124, 2048
        $region56: #{tpu_custom_call.1} parent=51 // pred_fallthru
          _
      $region52: #{tpu_custom_call.1} parent=5 // pred_fallthru
        _
    $region6: #{tpu_custom_call.1} parent=1 // loop_footer
      %s20 = sadd.s32 1, %s16
    $region7: #{tpu_custom_call.1} parent=1 // loop_footer_branch
      %15 = sbr.rel target = $region3
    $region8: #{tpu_custom_call.1} parent=1 // loop_exit
      _
    %3130 = vsyncpa [#allocation6], 1
    %s3131 = scalar_lea.sflag [#allocation6], 1
    %3132 = vsyncpa %s3131, 1
    %3133 = vsyncpa [#allocation7], 1
    %s3134 = scalar_lea.sflag [#allocation7], 1
    %3135 = vsyncpa %s3134, 1

</llo_original>
